<compile_context>
chip_gen: v7x
topology: tpu7x:2x2x1
jax: 0.10.0
libtpu: 0.0.40
codegen_flags: <defaults>
</compile_context>

<pallas_src>
import jax
import jax.numpy as jnp
from jax.experimental import pallas as pl
from jax.experimental.pallas import tpu as pltpu


# Static geometry implied by the torch module:
#   Conv2d(1,16,8,4) -> Conv2d(16,32,4,2) -> Linear(2592,256) -> Linear(256,out)
# fc input 2592 = 32*9*9 pins the input to 1x84x84 (standard Atari preprocessing).
H_IN = 84
K1, S1, C1 = 8, 4, 16          # conv1 kernel / stride / out channels
K2, S2, C2 = 4, 2, 32          # conv2 kernel / stride / out channels
OH1 = (H_IN - K1) // S1 + 1    # 20
OH2 = (OH1 - K2) // S2 + 1     # 9
P2 = OH2 * OH2                 # 81 conv2 output positions
PATCH1 = K1 * K1               # 64 (cin = 1)
TAPS2 = K2 * K2                # 16 conv2 taps
COLS1 = TAPS2 * PATCH1         # 1024 im2col columns fed to the conv stage
FC_IN = C2 * P2                # 2592
FC_OUT = 256

_VMEM_SPEC = pl.BlockSpec(memory_space=pltpu.MemorySpace.VMEM)


# ----------------------------------------------------------------------------
# Fused Pallas kernel: conv1 + conv2 + fc + head + softmax
# ----------------------------------------------------------------------------
def _dqn_fused_kernel(cols_ref, w1_ref, b1_ref, w2_ref, b2_ref,
                      wfc_ref, bfc_ref, wh_ref, bh_ref,
                      o_ref, a2_scr, flat_scr):
    """Whole DQNSoftmax forward in one kernel.

    cols_ref : (81*N, 1024) bf16  im2col of the input, rows ordered (pixel, image)
    w1_ref   : (1024, 256)  bf16  block-diagonal conv1 weight
    b1_ref   : (1, 256)     f32   conv1 bias tiled over the 16 conv2 taps
    w2_ref   : (256, 32)    bf16  conv2 weight, rows ordered (kh2, kw2, cin)
    b2_ref   : (1, 32)      f32
    wfc_ref  : (2592, 256)  bf16  fc weight, rows pre-permuted to NHWC flatten
    bfc_ref  : (1, 256)     f32
    wh_ref   : (256, 128)   bf16  head weight, zero-padded to 128 output lanes
    bh_ref   : (1, 128)     f32   head bias, padded lanes = -1e30
    o_ref    : (N, 128)     f32   softmax over the padded 128 lanes
    a2_scr   : (81*N, 32)   f32   scratch: conv2 activations
    flat_scr : (N, 2592)    f32   scratch: NHWC-flattened conv2 activations
    """
    n = o_ref.shape[0]

    # conv1 for all 16 taps of every conv2 pixel -> lane-dense (., 256) block.
    a1 = jnp.dot(cols_ref[...], w1_ref[...], preferred_element_type=jnp.float32)
    a1 = jnp.maximum(a1 + b1_ref[...], 0.0)                     # f32 ReLU
    # conv2: one (81N, 256) x (256, 32) matmul.
    a2 = jnp.dot(a1.astype(jnp.bfloat16), w2_ref[...],
                 preferred_element_type=jnp.float32)
    a2_scr[...] = jnp.maximum(a2 + b2_ref[...], 0.0)

    # rows -> lanes fold: a2 rows are (pixel p, image i); fc wants per image a
    # lane-dense 2592-wide row ordered (p, channel).  Done with 81 unrolled
    # static-slice copies through VMEM scratch (a value reshape with this
    # lane-width change is not a safe Mosaic shape_cast).
    for p in range(P2):
        flat_scr[:, p * C2:(p + 1) * C2] = a2_scr[p * n:(p + 1) * n, :]

    # fc + ReLU
    h = jnp.dot(flat_scr[...].astype(jnp.bfloat16), wfc_ref[...],
                preferred_element_type=jnp.float32)
    h = jnp.maximum(h + bfc_ref[...], 0.0)
    # head (padded to 128 lanes; padded bias -1e30 -> exp underflows to 0)
    logits = jnp.dot(h.astype(jnp.bfloat16), wh_ref[...],
                     preferred_element_type=jnp.float32) + bh_ref[...]
    # row-wise, max-stabilized softmax over the 128 padded lanes
    m = jnp.max(logits, axis=-1, keepdims=True)
    e = jnp.exp(logits - m)
    s = jnp.sum(e, axis=-1, keepdims=True)
    # EUP reciprocal (approx) -> free slot; ~1e-3 rel. error, far below bf16-MXU noise.
    o_ref[...] = (e * pl.reciprocal(s, approx=True)).astype(o_ref.dtype)


# ----------------------------------------------------------------------------
# Wrapper-side glue
# ----------------------------------------------------------------------------
def _extract_patches(x):
    """x: (N, 1, 84, 84) f32 -> (81*N, 1024) bf16 im2col grouped per conv2 pixel.

    Row order (oh2, ow2, n); column order (kh2, kw2, kh1, kw1).
    This is the one remaining XLA gather (pure layout plumbing).
    """
    # TODO(synk): could be moved in-kernel (DMA the raw 84x84 image into VMEM
    # and build the columns with strided slices) to cut the ~46x im2col HBM
    # inflation if batch ever grows large; at batch 2 it is noise.
    n = x.shape[0]
    img = x.reshape(n, H_IN, H_IN)
    o = jnp.arange(OH2)                    # conv2 output position
    t = jnp.arange(K2)                     # conv2 tap
    k = jnp.arange(K1)                     # conv1 tap
    # input coordinate = S1*(S2*o + t) + k = 8*o + 4*t + k
    idx = (S1 * S2) * o[:, None, None] + S1 * t[None, :, None] + k[None, None, :]
    r = idx[:, None, :, None, :, None]     # (9,1,4,1,8,1)
    c = idx[None, :, None, :, None, :]     # (1,9,1,4,1,8)
    patches = img[:, r, c]                 # (N, 9, 9, 4, 4, 8, 8)
    patches = jnp.transpose(patches, (1, 2, 0, 3, 4, 5, 6))   # rows (p, n)
    return patches.reshape(P2 * n, COLS1).astype(jnp.bfloat16)


def prepare_params(params, mxu_dtype=jnp.bfloat16):
    """One-time weight prep: transpose/permute/block-diag-expand/pad/cast."""
    # conv1 (16,1,8,8) -> (64,16) rows (kh1,kw1), then block-diagonal (1024,256)
    w1mat = params["conv1_w"].reshape(C1, PATCH1).T
    w1big = jnp.kron(jnp.eye(TAPS2, dtype=w1mat.dtype), w1mat)            # (1024,256)
    b1big = jnp.tile(params["conv1_b"], TAPS2).reshape(1, TAPS2 * C1)     # (1,256)
    # conv2 (32,16,4,4) -> (256,32), rows ordered (kh2, kw2, cin)
    w2p = jnp.transpose(params["conv2_w"], (2, 3, 1, 0)).reshape(TAPS2 * C1, C2)
    b2 = params["conv2_b"].reshape(1, C2)
    # fc (256, 2592): torch columns are (c2, oh2, ow2); permute rows to the NHWC
    # flatten (oh2, ow2, c2) produced in-kernel and pre-transpose to (K, N).
    wfc = jnp.transpose(params["fc_w"].reshape(FC_OUT, C2, P2), (2, 1, 0))
    wfc = wfc.reshape(FC_IN, FC_OUT)
    bfc = params["fc_b"].reshape(1, FC_OUT)
    # head: pad output lanes to a multiple of 128 (zero weights, -1e30 bias) so
    # logits / softmax / stores are lane-dense; padded lanes softmax to 0.
    out_size = params["head_w"].shape[0]
    out_pad = ((out_size + 127) // 128) * 128
    wh = jnp.zeros((FC_OUT, out_pad), params["head_w"].dtype)
    wh = wh.at[:, :out_size].set(params["head_w"].T)
    bh = jnp.full((1, out_pad), -1e30, jnp.float32)
    bh = bh.at[0, :out_size].set(params["head_b"])
    return {
        "w1big": w1big.astype(mxu_dtype), "b1big": b1big.astype(jnp.float32),
        "w2p": w2p.astype(mxu_dtype), "b2": b2.astype(jnp.float32),
        "wfc": wfc.astype(mxu_dtype), "bfc": bfc.astype(jnp.float32),
        "wh": wh.astype(mxu_dtype), "bh": bh.astype(jnp.float32),
    }


def dqn_softmax_forward(w, x, output_size):
    """x: (N, 1, 84, 84) f32 -> softmax probabilities (N, output_size) f32."""
    n = x.shape[0]
    out_pad = w["wh"].shape[1]
    cols = _extract_patches(x)                                   # (81*N, 1024) bf16
    probs = pl.pallas_call(
        _dqn_fused_kernel,
        out_shape=jax.ShapeDtypeStruct((n, out_pad), jnp.float32),
        in_specs=[_VMEM_SPEC] * 9,
        out_specs=_VMEM_SPEC,
        scratch_shapes=[pltpu.VMEM((P2 * n, C2), jnp.float32),
                        pltpu.VMEM((n, FC_IN), jnp.float32)],
    )(cols, w["w1big"], w["b1big"], w["w2p"], w["b2"],
      w["wfc"], w["bfc"], w["wh"], w["bh"])
    return probs[:, :output_size]


# ----------------------------------------------------------------------------
# Reference (plain JAX, torch-layout params) and parameter init
# ----------------------------------------------------------------------------
def _reference_forward(params, x):
    def conv(x, w, b, stride):
        y = jax.lax.conv_general_dilated(
            x, w, (stride, stride), "VALID",
            dimension_numbers=("NCHW", "OIHW", "NCHW"))
        return jax.nn.relu(y + b[None, :, None, None])

    out = conv(x, params["conv1_w"], params["conv1_b"], S1)
    out = conv(out, params["conv2_w"], params["conv2_b"], S2)
    flat = out.reshape(out.shape[0], -1)                         # torch .view order
    h = jax.nn.relu(flat @ params["fc_w"].T + params["fc_b"])
    logits = h @ params["head_w"].T + params["head_b"]
    return jax.nn.softmax(logits, axis=-1)


def init_params(key, output_size):
    ks = jax.random.split(key, 8)
    s = 0.05
    return {
        "conv1_w": jax.random.normal(ks[0], (C1, 1, K1, K1), jnp.float32) * s,
        "conv1_b": jax.random.normal(ks[1], (C1,), jnp.float32) * s,
        "conv2_w": jax.random.normal(ks[2], (C2, C1, K2, K2), jnp.float32) * s,
        "conv2_b": jax.random.normal(ks[3], (C2,), jnp.float32) * s,
        "fc_w": jax.random.normal(ks[4], (FC_OUT, FC_IN), jnp.float32) * s,   # torch (out, in)
        "fc_b": jax.random.normal(ks[5], (FC_OUT,), jnp.float32) * s,
        "head_w": jax.random.normal(ks[6], (output_size, FC_OUT), jnp.float32) * s,
        "head_b": jax.random.normal(ks[7], (output_size,), jnp.float32) * s,
    }


if __name__ == "__main__":
    output_size = 6
    key = jax.random.PRNGKey(0)
    pkey, xkey = jax.random.split(key)
    params = init_params(pkey, output_size)
    # fc expects 2592 = 32*9*9 features, pinning the input to 1x84x84; batch = 2.
    x = jax.random.normal(xkey, (2, 1, H_IN, H_IN), jnp.float32)

    prepped = prepare_params(params)                 # one-time weight prep
    fwd = jax.jit(lambda w, xx: dqn_softmax_forward(w, xx, output_size))
    out = jax.block_until_ready(fwd(prepped, x))

    assert out.shape == (2, output_size)
    # softmax rows sum to ~1 (approx EUP reciprocal -> ~1e-3 relative error)
    assert jnp.allclose(jnp.sum(out, axis=-1), 1.0, atol=5e-3)
    # match the plain-JAX / torch-semantics reference (bf16 MXU -> loose atol)
    ref = _reference_forward(params, x)
    assert jnp.allclose(out, ref, atol=2e-2), float(jnp.max(jnp.abs(out - ref)))
    print("KERNEL_OK")
</pallas_src>

<mosaic_0001>
module attributes {stable_mosaic.version = 11 : i64} {
  func.func @_dqn_fused_kernel(%arg0: memref<162x1024xbf16, #tpu.memory_space<vmem>>, %arg1: memref<1024x256xbf16, #tpu.memory_space<vmem>>, %arg2: memref<1x256xf32, #tpu.memory_space<vmem>>, %arg3: memref<256x32xbf16, #tpu.memory_space<vmem>>, %arg4: memref<1x32xf32, #tpu.memory_space<vmem>>, %arg5: memref<2592x256xbf16, #tpu.memory_space<vmem>>, %arg6: memref<1x256xf32, #tpu.memory_space<vmem>>, %arg7: memref<256x128xbf16, #tpu.memory_space<vmem>>, %arg8: memref<1x128xf32, #tpu.memory_space<vmem>>, %arg9: memref<2x128xf32, #tpu.memory_space<vmem>>, %arg10: memref<162x32xf32, #tpu.memory_space<vmem>>, %arg11: memref<2x2592xf32, #tpu.memory_space<vmem>>) attributes {dimension_semantics = [], scalar_prefetch = 0 : i64, scratch_operands = 2 : i64, tpu.core_type = #tpu.core_type<tc>} {
    %c0 = arith.constant 0 : index
    %c0_0 = arith.constant 0 : index
    %0 = vector.load %arg0[%c0, %c0_0] : memref<162x1024xbf16, #tpu.memory_space<vmem>>, vector<162x1024xbf16>
    %c0_1 = arith.constant 0 : index
    %c0_2 = arith.constant 0 : index
    %1 = vector.load %arg1[%c0_1, %c0_2] : memref<1024x256xbf16, #tpu.memory_space<vmem>>, vector<1024x256xbf16>
    %cst = arith.constant dense<0.000000e+00> : vector<162x256xf32>
    %2 = tpu.matmul %0, %1, %cst {dimension_numbers = #tpu.dot_dimension_numbers<[1], [0], [0], [1], [0, 0, 1, 1], [], []>} : vector<162x1024xbf16>, vector<1024x256xbf16>, vector<162x256xf32> -> vector<162x256xf32>
    %c0_3 = arith.constant 0 : index
    %c0_4 = arith.constant 0 : index
    %3 = vector.load %arg2[%c0_3, %c0_4] : memref<1x256xf32, #tpu.memory_space<vmem>>, vector<1x256xf32>
    %4 = vector.broadcast %3 : vector<1x256xf32> to vector<162x256xf32>
    %5 = arith.addf %2, %4 : vector<162x256xf32>
    %cst_5 = arith.constant 0.000000e+00 : f32
    %6 = vector.broadcast %cst_5 : f32 to vector<162x256xf32>
    %7 = arith.maximumf %5, %6 : vector<162x256xf32>
    %8 = arith.truncf %7 : vector<162x256xf32> to vector<162x256xbf16>
    %c0_6 = arith.constant 0 : index
    %c0_7 = arith.constant 0 : index
    %9 = vector.load %arg3[%c0_6, %c0_7] : memref<256x32xbf16, #tpu.memory_space<vmem>>, vector<256x32xbf16>
    %cst_8 = arith.constant dense<0.000000e+00> : vector<162x32xf32>
    %10 = tpu.matmul %8, %9, %cst_8 {dimension_numbers = #tpu.dot_dimension_numbers<[1], [0], [0], [1], [0, 0, 1, 1], [], []>} : vector<162x256xbf16>, vector<256x32xbf16>, vector<162x32xf32> -> vector<162x32xf32>
    %c0_9 = arith.constant 0 : index
    %c0_10 = arith.constant 0 : index
    %11 = vector.load %arg4[%c0_9, %c0_10] : memref<1x32xf32, #tpu.memory_space<vmem>>, vector<1x32xf32>
    %12 = vector.broadcast %11 : vector<1x32xf32> to vector<162x32xf32>
    %13 = arith.addf %10, %12 : vector<162x32xf32>
    %cst_11 = arith.constant 0.000000e+00 : f32
    %14 = vector.broadcast %cst_11 : f32 to vector<162x32xf32>
    %15 = arith.maximumf %13, %14 : vector<162x32xf32>
    %c0_12 = arith.constant 0 : index
    %c0_13 = arith.constant 0 : index
    %16 = vector.load %arg10[%c0_12, %c0_13] : memref<162x32xf32, #tpu.memory_space<vmem>>, vector<162x32xf32>
    tpu.vector_store %arg10[%c0_12, %c0_13], %15 {strides = array<i32>} : memref<162x32xf32, #tpu.memory_space<vmem>>, vector<162x32xf32>,
    %c0_14 = arith.constant 0 : index
    %c0_15 = arith.constant 0 : index
    %17 = vector.load %arg10[%c0_14, %c0_15] : memref<162x32xf32, #tpu.memory_space<vmem>>, vector<2x32xf32>
    %c0_16 = arith.constant 0 : index
    %c0_17 = arith.constant 0 : index
    %18 = vector.load %arg11[%c0_16, %c0_17] : memref<2x2592xf32, #tpu.memory_space<vmem>>, vector<2x32xf32>
    tpu.vector_store %arg11[%c0_16, %c0_17], %17 {strides = array<i32>} : memref<2x2592xf32, #tpu.memory_space<vmem>>, vector<2x32xf32>,
    %c2 = arith.constant 2 : index
    %c0_18 = arith.constant 0 : index
    %19 = vector.load %arg10[%c2, %c0_18] : memref<162x32xf32, #tpu.memory_space<vmem>>, vector<2x32xf32>
    %c0_19 = arith.constant 0 : index
    %c32 = arith.constant 32 : index
    %20 = vector.load %arg11[%c0_19, %c32] : memref<2x2592xf32, #tpu.memory_space<vmem>>, vector<2x32xf32>
    tpu.vector_store %arg11[%c0_19, %c32], %19 {strides = array<i32>} : memref<2x2592xf32, #tpu.memory_space<vmem>>, vector<2x32xf32>,
    %c4 = arith.constant 4 : index
    %c0_20 = arith.constant 0 : index
    %21 = vector.load %arg10[%c4, %c0_20] : memref<162x32xf32, #tpu.memory_space<vmem>>, vector<2x32xf32>
    %c0_21 = arith.constant 0 : index
    %c64 = arith.constant 64 : index
    %22 = vector.load %arg11[%c0_21, %c64] : memref<2x2592xf32, #tpu.memory_space<vmem>>, vector<2x32xf32>
    tpu.vector_store %arg11[%c0_21, %c64], %21 {strides = array<i32>} : memref<2x2592xf32, #tpu.memory_space<vmem>>, vector<2x32xf32>,
    %c6 = arith.constant 6 : index
    %c0_22 = arith.constant 0 : index
    %23 = vector.load %arg10[%c6, %c0_22] : memref<162x32xf32, #tpu.memory_space<vmem>>, vector<2x32xf32>
    %c0_23 = arith.constant 0 : index
    %c96 = arith.constant 96 : index
    %24 = vector.load %arg11[%c0_23, %c96] : memref<2x2592xf32, #tpu.memory_space<vmem>>, vector<2x32xf32>
    tpu.vector_store %arg11[%c0_23, %c96], %23 {strides = array<i32>} : memref<2x2592xf32, #tpu.memory_space<vmem>>, vector<2x32xf32>,
    %c8 = arith.constant 8 : index
    %c0_24 = arith.constant 0 : index
    %25 = vector.load %arg10[%c8, %c0_24] : memref<162x32xf32, #tpu.memory_space<vmem>>, vector<2x32xf32>
    %c0_25 = arith.constant 0 : index
    %c128 = arith.constant 128 : index
    %26 = vector.load %arg11[%c0_25, %c128] : memref<2x2592xf32, #tpu.memory_space<vmem>>, vector<2x32xf32>
    tpu.vector_store %arg11[%c0_25, %c128], %25 {strides = array<i32>} : memref<2x2592xf32, #tpu.memory_space<vmem>>, vector<2x32xf32>,
    %c10 = arith.constant 10 : index
    %c0_26 = arith.constant 0 : index
    %27 = vector.load %arg10[%c10, %c0_26] : memref<162x32xf32, #tpu.memory_space<vmem>>, vector<2x32xf32>
    %c0_27 = arith.constant 0 : index
    %c160 = arith.constant 160 : index
    %28 = vector.load %arg11[%c0_27, %c160] : memref<2x2592xf32, #tpu.memory_space<vmem>>, vector<2x32xf32>
    tpu.vector_store %arg11[%c0_27, %c160], %27 {strides = array<i32>} : memref<2x2592xf32, #tpu.memory_space<vmem>>, vector<2x32xf32>,
    %c12 = arith.constant 12 : index
    %c0_28 = arith.constant 0 : index
    %29 = vector.load %arg10[%c12, %c0_28] : memref<162x32xf32, #tpu.memory_space<vmem>>, vector<2x32xf32>
    %c0_29 = arith.constant 0 : index
    %c192 = arith.constant 192 : index
    %30 = vector.load %arg11[%c0_29, %c192] : memref<2x2592xf32, #tpu.memory_space<vmem>>, vector<2x32xf32>
    tpu.vector_store %arg11[%c0_29, %c192], %29 {strides = array<i32>} : memref<2x2592xf32, #tpu.memory_space<vmem>>, vector<2x32xf32>,
    %c14 = arith.constant 14 : index
    %c0_30 = arith.constant 0 : index
    %31 = vector.load %arg10[%c14, %c0_30] : memref<162x32xf32, #tpu.memory_space<vmem>>, vector<2x32xf32>
    %c0_31 = arith.constant 0 : index
    %c224 = arith.constant 224 : index
    %32 = vector.load %arg11[%c0_31, %c224] : memref<2x2592xf32, #tpu.memory_space<vmem>>, vector<2x32xf32>
    tpu.vector_store %arg11[%c0_31, %c224], %31 {strides = array<i32>} : memref<2x2592xf32, #tpu.memory_space<vmem>>, vector<2x32xf32>,
    %c16 = arith.constant 16 : index
    %c0_32 = arith.constant 0 : index
    %33 = vector.load %arg10[%c16, %c0_32] : memref<162x32xf32, #tpu.memory_space<vmem>>, vector<2x32xf32>
    %c0_33 = arith.constant 0 : index
    %c256 = arith.constant 256 : index
    %34 = vector.load %arg11[%c0_33, %c256] : memref<2x2592xf32, #tpu.memory_space<vmem>>, vector<2x32xf32>
    tpu.vector_store %arg11[%c0_33, %c256], %33 {strides = array<i32>} : memref<2x2592xf32, #tpu.memory_space<vmem>>, vector<2x32xf32>,
    %c18 = arith.constant 18 : index
    %c0_34 = arith.constant 0 : index
    %35 = vector.load %arg10[%c18, %c0_34] : memref<162x32xf32, #tpu.memory_space<vmem>>, vector<2x32xf32>
    %c0_35 = arith.constant 0 : index
    %c288 = arith.constant 288 : index
    %36 = vector.load %arg11[%c0_35, %c288] : memref<2x2592xf32, #tpu.memory_space<vmem>>, vector<2x32xf32>
    tpu.vector_store %arg11[%c0_35, %c288], %35 {strides = array<i32>} : memref<2x2592xf32, #tpu.memory_space<vmem>>, vector<2x32xf32>,
    %c20 = arith.constant 20 : index
    %c0_36 = arith.constant 0 : index
    %37 = vector.load %arg10[%c20, %c0_36] : memref<162x32xf32, #tpu.memory_space<vmem>>, vector<2x32xf32>
    %c0_37 = arith.constant 0 : index
    %c320 = arith.constant 320 : index
    %38 = vector.load %arg11[%c0_37, %c320] : memref<2x2592xf32, #tpu.memory_space<vmem>>, vector<2x32xf32>
    tpu.vector_store %arg11[%c0_37, %c320], %37 {strides = array<i32>} : memref<2x2592xf32, #tpu.memory_space<vmem>>, vector<2x32xf32>,
    %c22 = arith.constant 22 : index
    %c0_38 = arith.constant 0 : index
    %39 = vector.load %arg10[%c22, %c0_38] : memref<162x32xf32, #tpu.memory_space<vmem>>, vector<2x32xf32>
    %c0_39 = arith.constant 0 : index
    %c352 = arith.constant 352 : index
    %40 = vector.load %arg11[%c0_39, %c352] : memref<2x2592xf32, #tpu.memory_space<vmem>>, vector<2x32xf32>
    tpu.vector_store %arg11[%c0_39, %c352], %39 {strides = array<i32>} : memref<2x2592xf32, #tpu.memory_space<vmem>>, vector<2x32xf32>,
    %c24 = arith.constant 24 : index
    %c0_40 = arith.constant 0 : index
    %41 = vector.load %arg10[%c24, %c0_40] : memref<162x32xf32, #tpu.memory_space<vmem>>, vector<2x32xf32>
    %c0_41 = arith.constant 0 : index
    %c384 = arith.constant 384 : index
    %42 = vector.load %arg11[%c0_41, %c384] : memref<2x2592xf32, #tpu.memory_space<vmem>>, vector<2x32xf32>
    tpu.vector_store %arg11[%c0_41, %c384], %41 {strides = array<i32>} : memref<2x2592xf32, #tpu.memory_space<vmem>>, vector<2x32xf32>,
    %c26 = arith.constant 26 : index
    %c0_42 = arith.constant 0 : index
    %43 = vector.load %arg10[%c26, %c0_42] : memref<162x32xf32, #tpu.memory_space<vmem>>, vector<2x32xf32>
    %c0_43 = arith.constant 0 : index
    %c416 = arith.constant 416 : index
    %44 = vector.load %arg11[%c0_43, %c416] : memref<2x2592xf32, #tpu.memory_space<vmem>>, vector<2x32xf32>
    tpu.vector_store %arg11[%c0_43, %c416], %43 {strides = array<i32>} : memref<2x2592xf32, #tpu.memory_space<vmem>>, vector<2x32xf32>,
    %c28 = arith.constant 28 : index
    %c0_44 = arith.constant 0 : index
    %45 = vector.load %arg10[%c28, %c0_44] : memref<162x32xf32, #tpu.memory_space<vmem>>, vector<2x32xf32>
    %c0_45 = arith.constant 0 : index
    %c448 = arith.constant 448 : index
    %46 = vector.load %arg11[%c0_45, %c448] : memref<2x2592xf32, #tpu.memory_space<vmem>>, vector<2x32xf32>
    tpu.vector_store %arg11[%c0_45, %c448], %45 {strides = array<i32>} : memref<2x2592xf32, #tpu.memory_space<vmem>>, vector<2x32xf32>,
    %c30 = arith.constant 30 : index
    %c0_46 = arith.constant 0 : index
    %47 = vector.load %arg10[%c30, %c0_46] : memref<162x32xf32, #tpu.memory_space<vmem>>, vector<2x32xf32>
    %c0_47 = arith.constant 0 : index
    %c480 = arith.constant 480 : index
    %48 = vector.load %arg11[%c0_47, %c480] : memref<2x2592xf32, #tpu.memory_space<vmem>>, vector<2x32xf32>
    tpu.vector_store %arg11[%c0_47, %c480], %47 {strides = array<i32>} : memref<2x2592xf32, #tpu.memory_space<vmem>>, vector<2x32xf32>,
    %c32_48 = arith.constant 32 : index
    %c0_49 = arith.constant 0 : index
    %49 = vector.load %arg10[%c32_48, %c0_49] : memref<162x32xf32, #tpu.memory_space<vmem>>, vector<2x32xf32>
    %c0_50 = arith.constant 0 : index
    %c512 = arith.constant 512 : index
    %50 = vector.load %arg11[%c0_50, %c512] : memref<2x2592xf32, #tpu.memory_space<vmem>>, vector<2x32xf32>
    tpu.vector_store %arg11[%c0_50, %c512], %49 {strides = array<i32>} : memref<2x2592xf32, #tpu.memory_space<vmem>>, vector<2x32xf32>,
    %c34 = arith.constant 34 : index
    %c0_51 = arith.constant 0 : index
    %51 = vector.load %arg10[%c34, %c0_51] : memref<162x32xf32, #tpu.memory_space<vmem>>, vector<2x32xf32>
    %c0_52 = arith.constant 0 : index
    %c544 = arith.constant 544 : index
    %52 = vector.load %arg11[%c0_52, %c544] : memref<2x2592xf32, #tpu.memory_space<vmem>>, vector<2x32xf32>
    tpu.vector_store %arg11[%c0_52, %c544], %51 {strides = array<i32>} : memref<2x2592xf32, #tpu.memory_space<vmem>>, vector<2x32xf32>,
    %c36 = arith.constant 36 : index
    %c0_53 = arith.constant 0 : index
    %53 = vector.load %arg10[%c36, %c0_53] : memref<162x32xf32, #tpu.memory_space<vmem>>, vector<2x32xf32>
    %c0_54 = arith.constant 0 : index
    %c576 = arith.constant 576 : index
    %54 = vector.load %arg11[%c0_54, %c576] : memref<2x2592xf32, #tpu.memory_space<vmem>>, vector<2x32xf32>
    tpu.vector_store %arg11[%c0_54, %c576], %53 {strides = array<i32>} : memref<2x2592xf32, #tpu.memory_space<vmem>>, vector<2x32xf32>,
    %c38 = arith.constant 38 : index
    %c0_55 = arith.constant 0 : index
    %55 = vector.load %arg10[%c38, %c0_55] : memref<162x32xf32, #tpu.memory_space<vmem>>, vector<2x32xf32>
    %c0_56 = arith.constant 0 : index
    %c608 = arith.constant 608 : index
    %56 = vector.load %arg11[%c0_56, %c608] : memref<2x2592xf32, #tpu.memory_space<vmem>>, vector<2x32xf32>
    tpu.vector_store %arg11[%c0_56, %c608], %55 {strides = array<i32>} : memref<2x2592xf32, #tpu.memory_space<vmem>>, vector<2x32xf32>,
    %c40 = arith.constant 40 : index
    %c0_57 = arith.constant 0 : index
    %57 = vector.load %arg10[%c40, %c0_57] : memref<162x32xf32, #tpu.memory_space<vmem>>, vector<2x32xf32>
    %c0_58 = arith.constant 0 : index
    %c640 = arith.constant 640 : index
    %58 = vector.load %arg11[%c0_58, %c640] : memref<2x2592xf32, #tpu.memory_space<vmem>>, vector<2x32xf32>
    tpu.vector_store %arg11[%c0_58, %c640], %57 {strides = array<i32>} : memref<2x2592xf32, #tpu.memory_space<vmem>>, vector<2x32xf32>,
    %c42 = arith.constant 42 : index
    %c0_59 = arith.constant 0 : index
    %59 = vector.load %arg10[%c42, %c0_59] : memref<162x32xf32, #tpu.memory_space<vmem>>, vector<2x32xf32>
    %c0_60 = arith.constant 0 : index
    %c672 = arith.constant 672 : index
    %60 = vector.load %arg11[%c0_60, %c672] : memref<2x2592xf32, #tpu.memory_space<vmem>>, vector<2x32xf32>
    tpu.vector_store %arg11[%c0_60, %c672], %59 {strides = array<i32>} : memref<2x2592xf32, #tpu.memory_space<vmem>>, vector<2x32xf32>,
    %c44 = arith.constant 44 : index
    %c0_61 = arith.constant 0 : index
    %61 = vector.load %arg10[%c44, %c0_61] : memref<162x32xf32, #tpu.memory_space<vmem>>, vector<2x32xf32>
    %c0_62 = arith.constant 0 : index
    %c704 = arith.constant 704 : index
    %62 = vector.load %arg11[%c0_62, %c704] : memref<2x2592xf32, #tpu.memory_space<vmem>>, vector<2x32xf32>
    tpu.vector_store %arg11[%c0_62, %c704], %61 {strides = array<i32>} : memref<2x2592xf32, #tpu.memory_space<vmem>>, vector<2x32xf32>,
    %c46 = arith.constant 46 : index
    %c0_63 = arith.constant 0 : index
    %63 = vector.load %arg10[%c46, %c0_63] : memref<162x32xf32, #tpu.memory_space<vmem>>, vector<2x32xf32>
    %c0_64 = arith.constant 0 : index
    %c736 = arith.constant 736 : index
    %64 = vector.load %arg11[%c0_64, %c736] : memref<2x2592xf32, #tpu.memory_space<vmem>>, vector<2x32xf32>
    tpu.vector_store %arg11[%c0_64, %c736], %63 {strides = array<i32>} : memref<2x2592xf32, #tpu.memory_space<vmem>>, vector<2x32xf32>,
    %c48 = arith.constant 48 : index
    %c0_65 = arith.constant 0 : index
    %65 = vector.load %arg10[%c48, %c0_65] : memref<162x32xf32, #tpu.memory_space<vmem>>, vector<2x32xf32>
    %c0_66 = arith.constant 0 : index
    %c768 = arith.constant 768 : index
    %66 = vector.load %arg11[%c0_66, %c768] : memref<2x2592xf32, #tpu.memory_space<vmem>>, vector<2x32xf32>
    tpu.vector_store %arg11[%c0_66, %c768], %65 {strides = array<i32>} : memref<2x2592xf32, #tpu.memory_space<vmem>>, vector<2x32xf32>,
    %c50 = arith.constant 50 : index
    %c0_67 = arith.constant 0 : index
    %67 = vector.load %arg10[%c50, %c0_67] : memref<162x32xf32, #tpu.memory_space<vmem>>, vector<2x32xf32>
    %c0_68 = arith.constant 0 : index
    %c800 = arith.constant 800 : index
    %68 = vector.load %arg11[%c0_68, %c800] : memref<2x2592xf32, #tpu.memory_space<vmem>>, vector<2x32xf32>
    tpu.vector_store %arg11[%c0_68, %c800], %67 {strides = array<i32>} : memref<2x2592xf32, #tpu.memory_space<vmem>>, vector<2x32xf32>,
    %c52 = arith.constant 52 : index
    %c0_69 = arith.constant 0 : index
    %69 = vector.load %arg10[%c52, %c0_69] : memref<162x32xf32, #tpu.memory_space<vmem>>, vector<2x32xf32>
    %c0_70 = arith.constant 0 : index
    %c832 = arith.constant 832 : index
    %70 = vector.load %arg11[%c0_70, %c832] : memref<2x2592xf32, #tpu.memory_space<vmem>>, vector<2x32xf32>
    tpu.vector_store %arg11[%c0_70, %c832], %69 {strides = array<i32>} : memref<2x2592xf32, #tpu.memory_space<vmem>>, vector<2x32xf32>,
    %c54 = arith.constant 54 : index
    %c0_71 = arith.constant 0 : index
    %71 = vector.load %arg10[%c54, %c0_71] : memref<162x32xf32, #tpu.memory_space<vmem>>, vector<2x32xf32>
    %c0_72 = arith.constant 0 : index
    %c864 = arith.constant 864 : index
    %72 = vector.load %arg11[%c0_72, %c864] : memref<2x2592xf32, #tpu.memory_space<vmem>>, vector<2x32xf32>
    tpu.vector_store %arg11[%c0_72, %c864], %71 {strides = array<i32>} : memref<2x2592xf32, #tpu.memory_space<vmem>>, vector<2x32xf32>,
    %c56 = arith.constant 56 : index
    %c0_73 = arith.constant 0 : index
    %73 = vector.load %arg10[%c56, %c0_73] : memref<162x32xf32, #tpu.memory_space<vmem>>, vector<2x32xf32>
    %c0_74 = arith.constant 0 : index
    %c896 = arith.constant 896 : index
    %74 = vector.load %arg11[%c0_74, %c896] : memref<2x2592xf32, #tpu.memory_space<vmem>>, vector<2x32xf32>
    tpu.vector_store %arg11[%c0_74, %c896], %73 {strides = array<i32>} : memref<2x2592xf32, #tpu.memory_space<vmem>>, vector<2x32xf32>,
    %c58 = arith.constant 58 : index
    %c0_75 = arith.constant 0 : index
    %75 = vector.load %arg10[%c58, %c0_75] : memref<162x32xf32, #tpu.memory_space<vmem>>, vector<2x32xf32>
    %c0_76 = arith.constant 0 : index
    %c928 = arith.constant 928 : index
    %76 = vector.load %arg11[%c0_76, %c928] : memref<2x2592xf32, #tpu.memory_space<vmem>>, vector<2x32xf32>
    tpu.vector_store %arg11[%c0_76, %c928], %75 {strides = array<i32>} : memref<2x2592xf32, #tpu.memory_space<vmem>>, vector<2x32xf32>,
    %c60 = arith.constant 60 : index
    %c0_77 = arith.constant 0 : index
    %77 = vector.load %arg10[%c60, %c0_77] : memref<162x32xf32, #tpu.memory_space<vmem>>, vector<2x32xf32>
    %c0_78 = arith.constant 0 : index
    %c960 = arith.constant 960 : index
    %78 = vector.load %arg11[%c0_78, %c960] : memref<2x2592xf32, #tpu.memory_space<vmem>>, vector<2x32xf32>
    tpu.vector_store %arg11[%c0_78, %c960], %77 {strides = array<i32>} : memref<2x2592xf32, #tpu.memory_space<vmem>>, vector<2x32xf32>,
    %c62 = arith.constant 62 : index
    %c0_79 = arith.constant 0 : index
    %79 = vector.load %arg10[%c62, %c0_79] : memref<162x32xf32, #tpu.memory_space<vmem>>, vector<2x32xf32>
    %c0_80 = arith.constant 0 : index
    %c992 = arith.constant 992 : index
    %80 = vector.load %arg11[%c0_80, %c992] : memref<2x2592xf32, #tpu.memory_space<vmem>>, vector<2x32xf32>
    tpu.vector_store %arg11[%c0_80, %c992], %79 {strides = array<i32>} : memref<2x2592xf32, #tpu.memory_space<vmem>>, vector<2x32xf32>,
    %c64_81 = arith.constant 64 : index
    %c0_82 = arith.constant 0 : index
    %81 = vector.load %arg10[%c64_81, %c0_82] : memref<162x32xf32, #tpu.memory_space<vmem>>, vector<2x32xf32>
    %c0_83 = arith.constant 0 : index
    %c1024 = arith.constant 1024 : index
    %82 = vector.load %arg11[%c0_83, %c1024] : memref<2x2592xf32, #tpu.memory_space<vmem>>, vector<2x32xf32>
    tpu.vector_store %arg11[%c0_83, %c1024], %81 {strides = array<i32>} : memref<2x2592xf32, #tpu.memory_space<vmem>>, vector<2x32xf32>,
    %c66 = arith.constant 66 : index
    %c0_84 = arith.constant 0 : index
    %83 = vector.load %arg10[%c66, %c0_84] : memref<162x32xf32, #tpu.memory_space<vmem>>, vector<2x32xf32>
    %c0_85 = arith.constant 0 : index
    %c1056 = arith.constant 1056 : index
    %84 = vector.load %arg11[%c0_85, %c1056] : memref<2x2592xf32, #tpu.memory_space<vmem>>, vector<2x32xf32>
    tpu.vector_store %arg11[%c0_85, %c1056], %83 {strides = array<i32>} : memref<2x2592xf32, #tpu.memory_space<vmem>>, vector<2x32xf32>,
    %c68 = arith.constant 68 : index
    %c0_86 = arith.constant 0 : index
    %85 = vector.load %arg10[%c68, %c0_86] : memref<162x32xf32, #tpu.memory_space<vmem>>, vector<2x32xf32>
    %c0_87 = arith.constant 0 : index
    %c1088 = arith.constant 1088 : index
    %86 = vector.load %arg11[%c0_87, %c1088] : memref<2x2592xf32, #tpu.memory_space<vmem>>, vector<2x32xf32>
    tpu.vector_store %arg11[%c0_87, %c1088], %85 {strides = array<i32>} : memref<2x2592xf32, #tpu.memory_space<vmem>>, vector<2x32xf32>,
    %c70 = arith.constant 70 : index
    %c0_88 = arith.constant 0 : index
    %87 = vector.load %arg10[%c70, %c0_88] : memref<162x32xf32, #tpu.memory_space<vmem>>, vector<2x32xf32>
    %c0_89 = arith.constant 0 : index
    %c1120 = arith.constant 1120 : index
    %88 = vector.load %arg11[%c0_89, %c1120] : memref<2x2592xf32, #tpu.memory_space<vmem>>, vector<2x32xf32>
    tpu.vector_store %arg11[%c0_89, %c1120], %87 {strides = array<i32>} : memref<2x2592xf32, #tpu.memory_space<vmem>>, vector<2x32xf32>,
    %c72 = arith.constant 72 : index
    %c0_90 = arith.constant 0 : index
    %89 = vector.load %arg10[%c72, %c0_90] : memref<162x32xf32, #tpu.memory_space<vmem>>, vector<2x32xf32>
    %c0_91 = arith.constant 0 : index
    %c1152 = arith.constant 1152 : index
    %90 = vector.load %arg11[%c0_91, %c1152] : memref<2x2592xf32, #tpu.memory_space<vmem>>, vector<2x32xf32>
    tpu.vector_store %arg11[%c0_91, %c1152], %89 {strides = array<i32>} : memref<2x2592xf32, #tpu.memory_space<vmem>>, vector<2x32xf32>,
    %c74 = arith.constant 74 : index
    %c0_92 = arith.constant 0 : index
    %91 = vector.load %arg10[%c74, %c0_92] : memref<162x32xf32, #tpu.memory_space<vmem>>, vector<2x32xf32>
    %c0_93 = arith.constant 0 : index
    %c1184 = arith.constant 1184 : index
    %92 = vector.load %arg11[%c0_93, %c1184] : memref<2x2592xf32, #tpu.memory_space<vmem>>, vector<2x32xf32>
    tpu.vector_store %arg11[%c0_93, %c1184], %91 {strides = array<i32>} : memref<2x2592xf32, #tpu.memory_space<vmem>>, vector<2x32xf32>,
    %c76 = arith.constant 76 : index
    %c0_94 = arith.constant 0 : index
    %93 = vector.load %arg10[%c76, %c0_94] : memref<162x32xf32, #tpu.memory_space<vmem>>, vector<2x32xf32>
    %c0_95 = arith.constant 0 : index
    %c1216 = arith.constant 1216 : index
    %94 = vector.load %arg11[%c0_95, %c1216] : memref<2x2592xf32, #tpu.memory_space<vmem>>, vector<2x32xf32>
    tpu.vector_store %arg11[%c0_95, %c1216], %93 {strides = array<i32>} : memref<2x2592xf32, #tpu.memory_space<vmem>>, vector<2x32xf32>,
    %c78 = arith.constant 78 : index
    %c0_96 = arith.constant 0 : index
    %95 = vector.load %arg10[%c78, %c0_96] : memref<162x32xf32, #tpu.memory_space<vmem>>, vector<2x32xf32>
    %c0_97 = arith.constant 0 : index
    %c1248 = arith.constant 1248 : index
    %96 = vector.load %arg11[%c0_97, %c1248] : memref<2x2592xf32, #tpu.memory_space<vmem>>, vector<2x32xf32>
    tpu.vector_store %arg11[%c0_97, %c1248], %95 {strides = array<i32>} : memref<2x2592xf32, #tpu.memory_space<vmem>>, vector<2x32xf32>,
    %c80 = arith.constant 80 : index
    %c0_98 = arith.constant 0 : index
    %97 = vector.load %arg10[%c80, %c0_98] : memref<162x32xf32, #tpu.memory_space<vmem>>, vector<2x32xf32>
    %c0_99 = arith.constant 0 : index
    %c1280 = arith.constant 1280 : index
    %98 = vector.load %arg11[%c0_99, %c1280] : memref<2x2592xf32, #tpu.memory_space<vmem>>, vector<2x32xf32>
    tpu.vector_store %arg11[%c0_99, %c1280], %97 {strides = array<i32>} : memref<2x2592xf32, #tpu.memory_space<vmem>>, vector<2x32xf32>,
    %c82 = arith.constant 82 : index
    %c0_100 = arith.constant 0 : index
    %99 = vector.load %arg10[%c82, %c0_100] : memref<162x32xf32, #tpu.memory_space<vmem>>, vector<2x32xf32>
    %c0_101 = arith.constant 0 : index
    %c1312 = arith.constant 1312 : index
    %100 = vector.load %arg11[%c0_101, %c1312] : memref<2x2592xf32, #tpu.memory_space<vmem>>, vector<2x32xf32>
    tpu.vector_store %arg11[%c0_101, %c1312], %99 {strides = array<i32>} : memref<2x2592xf32, #tpu.memory_space<vmem>>, vector<2x32xf32>,
    %c84 = arith.constant 84 : index
    %c0_102 = arith.constant 0 : index
    %101 = vector.load %arg10[%c84, %c0_102] : memref<162x32xf32, #tpu.memory_space<vmem>>, vector<2x32xf32>
    %c0_103 = arith.constant 0 : index
    %c1344 = arith.constant 1344 : index
    %102 = vector.load %arg11[%c0_103, %c1344] : memref<2x2592xf32, #tpu.memory_space<vmem>>, vector<2x32xf32>
    tpu.vector_store %arg11[%c0_103, %c1344], %101 {strides = array<i32>} : memref<2x2592xf32, #tpu.memory_space<vmem>>, vector<2x32xf32>,
    %c86 = arith.constant 86 : index
    %c0_104 = arith.constant 0 : index
    %103 = vector.load %arg10[%c86, %c0_104] : memref<162x32xf32, #tpu.memory_space<vmem>>, vector<2x32xf32>
    %c0_105 = arith.constant 0 : index
    %c1376 = arith.constant 1376 : index
    %104 = vector.load %arg11[%c0_105, %c1376] : memref<2x2592xf32, #tpu.memory_space<vmem>>, vector<2x32xf32>
    tpu.vector_store %arg11[%c0_105, %c1376], %103 {strides = array<i32>} : memref<2x2592xf32, #tpu.memory_space<vmem>>, vector<2x32xf32>,
    %c88 = arith.constant 88 : index
    %c0_106 = arith.constant 0 : index
    %105 = vector.load %arg10[%c88, %c0_106] : memref<162x32xf32, #tpu.memory_space<vmem>>, vector<2x32xf32>
    %c0_107 = arith.constant 0 : index
    %c1408 = arith.constant 1408 : index
    %106 = vector.load %arg11[%c0_107, %c1408] : memref<2x2592xf32, #tpu.memory_space<vmem>>, vector<2x32xf32>
    tpu.vector_store %arg11[%c0_107, %c1408], %105 {strides = array<i32>} : memref<2x2592xf32, #tpu.memory_space<vmem>>, vector<2x32xf32>,
    %c90 = arith.constant 90 : index
    %c0_108 = arith.constant 0 : index
    %107 = vector.load %arg10[%c90, %c0_108] : memref<162x32xf32, #tpu.memory_space<vmem>>, vector<2x32xf32>
    %c0_109 = arith.constant 0 : index
    %c1440 = arith.constant 1440 : index
    %108 = vector.load %arg11[%c0_109, %c1440] : memref<2x2592xf32, #tpu.memory_space<vmem>>, vector<2x32xf32>
    tpu.vector_store %arg11[%c0_109, %c1440], %107 {strides = array<i32>} : memref<2x2592xf32, #tpu.memory_space<vmem>>, vector<2x32xf32>,
    %c92 = arith.constant 92 : index
    %c0_110 = arith.constant 0 : index
    %109 = vector.load %arg10[%c92, %c0_110] : memref<162x32xf32, #tpu.memory_space<vmem>>, vector<2x32xf32>
    %c0_111 = arith.constant 0 : index
    %c1472 = arith.constant 1472 : index
    %110 = vector.load %arg11[%c0_111, %c1472] : memref<2x2592xf32, #tpu.memory_space<vmem>>, vector<2x32xf32>
    tpu.vector_store %arg11[%c0_111, %c1472], %109 {strides = array<i32>} : memref<2x2592xf32, #tpu.memory_space<vmem>>, vector<2x32xf32>,
    %c94 = arith.constant 94 : index
    %c0_112 = arith.constant 0 : index
    %111 = vector.load %arg10[%c94, %c0_112] : memref<162x32xf32, #tpu.memory_space<vmem>>, vector<2x32xf32>
    %c0_113 = arith.constant 0 : index
    %c1504 = arith.constant 1504 : index
    %112 = vector.load %arg11[%c0_113, %c1504] : memref<2x2592xf32, #tpu.memory_space<vmem>>, vector<2x32xf32>
    tpu.vector_store %arg11[%c0_113, %c1504], %111 {strides = array<i32>} : memref<2x2592xf32, #tpu.memory_space<vmem>>, vector<2x32xf32>,
    %c96_114 = arith.constant 96 : index
    %c0_115 = arith.constant 0 : index
    %113 = vector.load %arg10[%c96_114, %c0_115] : memref<162x32xf32, #tpu.memory_space<vmem>>, vector<2x32xf32>
    %c0_116 = arith.constant 0 : index
    %c1536 = arith.constant 1536 : index
    %114 = vector.load %arg11[%c0_116, %c1536] : memref<2x2592xf32, #tpu.memory_space<vmem>>, vector<2x32xf32>
    tpu.vector_store %arg11[%c0_116, %c1536], %113 {strides = array<i32>} : memref<2x2592xf32, #tpu.memory_space<vmem>>, vector<2x32xf32>,
    %c98 = arith.constant 98 : index
    %c0_117 = arith.constant 0 : index
    %115 = vector.load %arg10[%c98, %c0_117] : memref<162x32xf32, #tpu.memory_space<vmem>>, vector<2x32xf32>
    %c0_118 = arith.constant 0 : index
    %c1568 = arith.constant 1568 : index
    %116 = vector.load %arg11[%c0_118, %c1568] : memref<2x2592xf32, #tpu.memory_space<vmem>>, vector<2x32xf32>
    tpu.vector_store %arg11[%c0_118, %c1568], %115 {strides = array<i32>} : memref<2x2592xf32, #tpu.memory_space<vmem>>, vector<2x32xf32>,
    %c100 = arith.constant 100 : index
    %c0_119 = arith.constant 0 : index
    %117 = vector.load %arg10[%c100, %c0_119] : memref<162x32xf32, #tpu.memory_space<vmem>>, vector<2x32xf32>
    %c0_120 = arith.constant 0 : index
    %c1600 = arith.constant 1600 : index
    %118 = vector.load %arg11[%c0_120, %c1600] : memref<2x2592xf32, #tpu.memory_space<vmem>>, vector<2x32xf32>
    tpu.vector_store %arg11[%c0_120, %c1600], %117 {strides = array<i32>} : memref<2x2592xf32, #tpu.memory_space<vmem>>, vector<2x32xf32>,
    %c102 = arith.constant 102 : index
    %c0_121 = arith.constant 0 : index
    %119 = vector.load %arg10[%c102, %c0_121] : memref<162x32xf32, #tpu.memory_space<vmem>>, vector<2x32xf32>
    %c0_122 = arith.constant 0 : index
    %c1632 = arith.constant 1632 : index
    %120 = vector.load %arg11[%c0_122, %c1632] : memref<2x2592xf32, #tpu.memory_space<vmem>>, vector<2x32xf32>
    tpu.vector_store %arg11[%c0_122, %c1632], %119 {strides = array<i32>} : memref<2x2592xf32, #tpu.memory_space<vmem>>, vector<2x32xf32>,
    %c104 = arith.constant 104 : index
    %c0_123 = arith.constant 0 : index
    %121 = vector.load %arg10[%c104, %c0_123] : memref<162x32xf32, #tpu.memory_space<vmem>>, vector<2x32xf32>
    %c0_124 = arith.constant 0 : index
    %c1664 = arith.constant 1664 : index
    %122 = vector.load %arg11[%c0_124, %c1664] : memref<2x2592xf32, #tpu.memory_space<vmem>>, vector<2x32xf32>
    tpu.vector_store %arg11[%c0_124, %c1664], %121 {strides = array<i32>} : memref<2x2592xf32, #tpu.memory_space<vmem>>, vector<2x32xf32>,
    %c106 = arith.constant 106 : index
    %c0_125 = arith.constant 0 : index
    %123 = vector.load %arg10[%c106, %c0_125] : memref<162x32xf32, #tpu.memory_space<vmem>>, vector<2x32xf32>
    %c0_126 = arith.constant 0 : index
    %c1696 = arith.constant 1696 : index
    %124 = vector.load %arg11[%c0_126, %c1696] : memref<2x2592xf32, #tpu.memory_space<vmem>>, vector<2x32xf32>
    tpu.vector_store %arg11[%c0_126, %c1696], %123 {strides = array<i32>} : memref<2x2592xf32, #tpu.memory_space<vmem>>, vector<2x32xf32>,
    %c108 = arith.constant 108 : index
    %c0_127 = arith.constant 0 : index
    %125 = vector.load %arg10[%c108, %c0_127] : memref<162x32xf32, #tpu.memory_space<vmem>>, vector<2x32xf32>
    %c0_128 = arith.constant 0 : index
    %c1728 = arith.constant 1728 : index
    %126 = vector.load %arg11[%c0_128, %c1728] : memref<2x2592xf32, #tpu.memory_space<vmem>>, vector<2x32xf32>
    tpu.vector_store %arg11[%c0_128, %c1728], %125 {strides = array<i32>} : memref<2x2592xf32, #tpu.memory_space<vmem>>, vector<2x32xf32>,
    %c110 = arith.constant 110 : index
    %c0_129 = arith.constant 0 : index
    %127 = vector.load %arg10[%c110, %c0_129] : memref<162x32xf32, #tpu.memory_space<vmem>>, vector<2x32xf32>
    %c0_130 = arith.constant 0 : index
    %c1760 = arith.constant 1760 : index
    %128 = vector.load %arg11[%c0_130, %c1760] : memref<2x2592xf32, #tpu.memory_space<vmem>>, vector<2x32xf32>
    tpu.vector_store %arg11[%c0_130, %c1760], %127 {strides = array<i32>} : memref<2x2592xf32, #tpu.memory_space<vmem>>, vector<2x32xf32>,
    %c112 = arith.constant 112 : index
    %c0_131 = arith.constant 0 : index
    %129 = vector.load %arg10[%c112, %c0_131] : memref<162x32xf32, #tpu.memory_space<vmem>>, vector<2x32xf32>
    %c0_132 = arith.constant 0 : index
    %c1792 = arith.constant 1792 : index
    %130 = vector.load %arg11[%c0_132, %c1792] : memref<2x2592xf32, #tpu.memory_space<vmem>>, vector<2x32xf32>
    tpu.vector_store %arg11[%c0_132, %c1792], %129 {strides = array<i32>} : memref<2x2592xf32, #tpu.memory_space<vmem>>, vector<2x32xf32>,
    %c114 = arith.constant 114 : index
    %c0_133 = arith.constant 0 : index
    %131 = vector.load %arg10[%c114, %c0_133] : memref<162x32xf32, #tpu.memory_space<vmem>>, vector<2x32xf32>
    %c0_134 = arith.constant 0 : index
    %c1824 = arith.constant 1824 : index
    %132 = vector.load %arg11[%c0_134, %c1824] : memref<2x2592xf32, #tpu.memory_space<vmem>>, vector<2x32xf32>
    tpu.vector_store %arg11[%c0_134, %c1824], %131 {strides = array<i32>} : memref<2x2592xf32, #tpu.memory_space<vmem>>, vector<2x32xf32>,
    %c116 = arith.constant 116 : index
    %c0_135 = arith.constant 0 : index
    %133 = vector.load %arg10[%c116, %c0_135] : memref<162x32xf32, #tpu.memory_space<vmem>>, vector<2x32xf32>
    %c0_136 = arith.constant 0 : index
    %c1856 = arith.constant 1856 : index
    %134 = vector.load %arg11[%c0_136, %c1856] : memref<2x2592xf32, #tpu.memory_space<vmem>>, vector<2x32xf32>
    tpu.vector_store %arg11[%c0_136, %c1856], %133 {strides = array<i32>} : memref<2x2592xf32, #tpu.memory_space<vmem>>, vector<2x32xf32>,
    %c118 = arith.constant 118 : index
    %c0_137 = arith.constant 0 : index
    %135 = vector.load %arg10[%c118, %c0_137] : memref<162x32xf32, #tpu.memory_space<vmem>>, vector<2x32xf32>
    %c0_138 = arith.constant 0 : index
    %c1888 = arith.constant 1888 : index
    %136 = vector.load %arg11[%c0_138, %c1888] : memref<2x2592xf32, #tpu.memory_space<vmem>>, vector<2x32xf32>
    tpu.vector_store %arg11[%c0_138, %c1888], %135 {strides = array<i32>} : memref<2x2592xf32, #tpu.memory_space<vmem>>, vector<2x32xf32>,
    %c120 = arith.constant 120 : index
    %c0_139 = arith.constant 0 : index
    %137 = vector.load %arg10[%c120, %c0_139] : memref<162x32xf32, #tpu.memory_space<vmem>>, vector<2x32xf32>
    %c0_140 = arith.constant 0 : index
    %c1920 = arith.constant 1920 : index
    %138 = vector.load %arg11[%c0_140, %c1920] : memref<2x2592xf32, #tpu.memory_space<vmem>>, vector<2x32xf32>
    tpu.vector_store %arg11[%c0_140, %c1920], %137 {strides = array<i32>} : memref<2x2592xf32, #tpu.memory_space<vmem>>, vector<2x32xf32>,
    %c122 = arith.constant 122 : index
    %c0_141 = arith.constant 0 : index
    %139 = vector.load %arg10[%c122, %c0_141] : memref<162x32xf32, #tpu.memory_space<vmem>>, vector<2x32xf32>
    %c0_142 = arith.constant 0 : index
    %c1952 = arith.constant 1952 : index
    %140 = vector.load %arg11[%c0_142, %c1952] : memref<2x2592xf32, #tpu.memory_space<vmem>>, vector<2x32xf32>
    tpu.vector_store %arg11[%c0_142, %c1952], %139 {strides = array<i32>} : memref<2x2592xf32, #tpu.memory_space<vmem>>, vector<2x32xf32>,
    %c124 = arith.constant 124 : index
    %c0_143 = arith.constant 0 : index
    %141 = vector.load %arg10[%c124, %c0_143] : memref<162x32xf32, #tpu.memory_space<vmem>>, vector<2x32xf32>
    %c0_144 = arith.constant 0 : index
    %c1984 = arith.constant 1984 : index
    %142 = vector.load %arg11[%c0_144, %c1984] : memref<2x2592xf32, #tpu.memory_space<vmem>>, vector<2x32xf32>
    tpu.vector_store %arg11[%c0_144, %c1984], %141 {strides = array<i32>} : memref<2x2592xf32, #tpu.memory_space<vmem>>, vector<2x32xf32>,
    %c126 = arith.constant 126 : index
    %c0_145 = arith.constant 0 : index
    %143 = vector.load %arg10[%c126, %c0_145] : memref<162x32xf32, #tpu.memory_space<vmem>>, vector<2x32xf32>
    %c0_146 = arith.constant 0 : index
    %c2016 = arith.constant 2016 : index
    %144 = vector.load %arg11[%c0_146, %c2016] : memref<2x2592xf32, #tpu.memory_space<vmem>>, vector<2x32xf32>
    tpu.vector_store %arg11[%c0_146, %c2016], %143 {strides = array<i32>} : memref<2x2592xf32, #tpu.memory_space<vmem>>, vector<2x32xf32>,
    %c128_147 = arith.constant 128 : index
    %c0_148 = arith.constant 0 : index
    %145 = vector.load %arg10[%c128_147, %c0_148] : memref<162x32xf32, #tpu.memory_space<vmem>>, vector<2x32xf32>
    %c0_149 = arith.constant 0 : index
    %c2048 = arith.constant 2048 : index
    %146 = vector.load %arg11[%c0_149, %c2048] : memref<2x2592xf32, #tpu.memory_space<vmem>>, vector<2x32xf32>
    tpu.vector_store %arg11[%c0_149, %c2048], %145 {strides = array<i32>} : memref<2x2592xf32, #tpu.memory_space<vmem>>, vector<2x32xf32>,
    %c130 = arith.constant 130 : index
    %c0_150 = arith.constant 0 : index
    %147 = vector.load %arg10[%c130, %c0_150] : memref<162x32xf32, #tpu.memory_space<vmem>>, vector<2x32xf32>
    %c0_151 = arith.constant 0 : index
    %c2080 = arith.constant 2080 : index
    %148 = vector.load %arg11[%c0_151, %c2080] : memref<2x2592xf32, #tpu.memory_space<vmem>>, vector<2x32xf32>
    tpu.vector_store %arg11[%c0_151, %c2080], %147 {strides = array<i32>} : memref<2x2592xf32, #tpu.memory_space<vmem>>, vector<2x32xf32>,
    %c132 = arith.constant 132 : index
    %c0_152 = arith.constant 0 : index
    %149 = vector.load %arg10[%c132, %c0_152] : memref<162x32xf32, #tpu.memory_space<vmem>>, vector<2x32xf32>
    %c0_153 = arith.constant 0 : index
    %c2112 = arith.constant 2112 : index
    %150 = vector.load %arg11[%c0_153, %c2112] : memref<2x2592xf32, #tpu.memory_space<vmem>>, vector<2x32xf32>
    tpu.vector_store %arg11[%c0_153, %c2112], %149 {strides = array<i32>} : memref<2x2592xf32, #tpu.memory_space<vmem>>, vector<2x32xf32>,
    %c134 = arith.constant 134 : index
    %c0_154 = arith.constant 0 : index
    %151 = vector.load %arg10[%c134, %c0_154] : memref<162x32xf32, #tpu.memory_space<vmem>>, vector<2x32xf32>
    %c0_155 = arith.constant 0 : index
    %c2144 = arith.constant 2144 : index
    %152 = vector.load %arg11[%c0_155, %c2144] : memref<2x2592xf32, #tpu.memory_space<vmem>>, vector<2x32xf32>
    tpu.vector_store %arg11[%c0_155, %c2144], %151 {strides = array<i32>} : memref<2x2592xf32, #tpu.memory_space<vmem>>, vector<2x32xf32>,
    %c136 = arith.constant 136 : index
    %c0_156 = arith.constant 0 : index
    %153 = vector.load %arg10[%c136, %c0_156] : memref<162x32xf32, #tpu.memory_space<vmem>>, vector<2x32xf32>
    %c0_157 = arith.constant 0 : index
    %c2176 = arith.constant 2176 : index
    %154 = vector.load %arg11[%c0_157, %c2176] : memref<2x2592xf32, #tpu.memory_space<vmem>>, vector<2x32xf32>
    tpu.vector_store %arg11[%c0_157, %c2176], %153 {strides = array<i32>} : memref<2x2592xf32, #tpu.memory_space<vmem>>, vector<2x32xf32>,
    %c138 = arith.constant 138 : index
    %c0_158 = arith.constant 0 : index
    %155 = vector.load %arg10[%c138, %c0_158] : memref<162x32xf32, #tpu.memory_space<vmem>>, vector<2x32xf32>
    %c0_159 = arith.constant 0 : index
    %c2208 = arith.constant 2208 : index
    %156 = vector.load %arg11[%c0_159, %c2208] : memref<2x2592xf32, #tpu.memory_space<vmem>>, vector<2x32xf32>
    tpu.vector_store %arg11[%c0_159, %c2208], %155 {strides = array<i32>} : memref<2x2592xf32, #tpu.memory_space<vmem>>, vector<2x32xf32>,
    %c140 = arith.constant 140 : index
    %c0_160 = arith.constant 0 : index
    %157 = vector.load %arg10[%c140, %c0_160] : memref<162x32xf32, #tpu.memory_space<vmem>>, vector<2x32xf32>
    %c0_161 = arith.constant 0 : index
    %c2240 = arith.constant 2240 : index
    %158 = vector.load %arg11[%c0_161, %c2240] : memref<2x2592xf32, #tpu.memory_space<vmem>>, vector<2x32xf32>
    tpu.vector_store %arg11[%c0_161, %c2240], %157 {strides = array<i32>} : memref<2x2592xf32, #tpu.memory_space<vmem>>, vector<2x32xf32>,
    %c142 = arith.constant 142 : index
    %c0_162 = arith.constant 0 : index
    %159 = vector.load %arg10[%c142, %c0_162] : memref<162x32xf32, #tpu.memory_space<vmem>>, vector<2x32xf32>
    %c0_163 = arith.constant 0 : index
    %c2272 = arith.constant 2272 : index
    %160 = vector.load %arg11[%c0_163, %c2272] : memref<2x2592xf32, #tpu.memory_space<vmem>>, vector<2x32xf32>
    tpu.vector_store %arg11[%c0_163, %c2272], %159 {strides = array<i32>} : memref<2x2592xf32, #tpu.memory_space<vmem>>, vector<2x32xf32>,
    %c144 = arith.constant 144 : index
    %c0_164 = arith.constant 0 : index
    %161 = vector.load %arg10[%c144, %c0_164] : memref<162x32xf32, #tpu.memory_space<vmem>>, vector<2x32xf32>
    %c0_165 = arith.constant 0 : index
    %c2304 = arith.constant 2304 : index
    %162 = vector.load %arg11[%c0_165, %c2304] : memref<2x2592xf32, #tpu.memory_space<vmem>>, vector<2x32xf32>
    tpu.vector_store %arg11[%c0_165, %c2304], %161 {strides = array<i32>} : memref<2x2592xf32, #tpu.memory_space<vmem>>, vector<2x32xf32>,
    %c146 = arith.constant 146 : index
    %c0_166 = arith.constant 0 : index
    %163 = vector.load %arg10[%c146, %c0_166] : memref<162x32xf32, #tpu.memory_space<vmem>>, vector<2x32xf32>
    %c0_167 = arith.constant 0 : index
    %c2336 = arith.constant 2336 : index
    %164 = vector.load %arg11[%c0_167, %c2336] : memref<2x2592xf32, #tpu.memory_space<vmem>>, vector<2x32xf32>
    tpu.vector_store %arg11[%c0_167, %c2336], %163 {strides = array<i32>} : memref<2x2592xf32, #tpu.memory_space<vmem>>, vector<2x32xf32>,
    %c148 = arith.constant 148 : index
    %c0_168 = arith.constant 0 : index
    %165 = vector.load %arg10[%c148, %c0_168] : memref<162x32xf32, #tpu.memory_space<vmem>>, vector<2x32xf32>
    %c0_169 = arith.constant 0 : index
    %c2368 = arith.constant 2368 : index
    %166 = vector.load %arg11[%c0_169, %c2368] : memref<2x2592xf32, #tpu.memory_space<vmem>>, vector<2x32xf32>
    tpu.vector_store %arg11[%c0_169, %c2368], %165 {strides = array<i32>} : memref<2x2592xf32, #tpu.memory_space<vmem>>, vector<2x32xf32>,
    %c150 = arith.constant 150 : index
    %c0_170 = arith.constant 0 : index
    %167 = vector.load %arg10[%c150, %c0_170] : memref<162x32xf32, #tpu.memory_space<vmem>>, vector<2x32xf32>
    %c0_171 = arith.constant 0 : index
    %c2400 = arith.constant 2400 : index
    %168 = vector.load %arg11[%c0_171, %c2400] : memref<2x2592xf32, #tpu.memory_space<vmem>>, vector<2x32xf32>
    tpu.vector_store %arg11[%c0_171, %c2400], %167 {strides = array<i32>} : memref<2x2592xf32, #tpu.memory_space<vmem>>, vector<2x32xf32>,
    %c152 = arith.constant 152 : index
    %c0_172 = arith.constant 0 : index
    %169 = vector.load %arg10[%c152, %c0_172] : memref<162x32xf32, #tpu.memory_space<vmem>>, vector<2x32xf32>
    %c0_173 = arith.constant 0 : index
    %c2432 = arith.constant 2432 : index
    %170 = vector.load %arg11[%c0_173, %c2432] : memref<2x2592xf32, #tpu.memory_space<vmem>>, vector<2x32xf32>
    tpu.vector_store %arg11[%c0_173, %c2432], %169 {strides = array<i32>} : memref<2x2592xf32, #tpu.memory_space<vmem>>, vector<2x32xf32>,
    %c154 = arith.constant 154 : index
    %c0_174 = arith.constant 0 : index
    %171 = vector.load %arg10[%c154, %c0_174] : memref<162x32xf32, #tpu.memory_space<vmem>>, vector<2x32xf32>
    %c0_175 = arith.constant 0 : index
    %c2464 = arith.constant 2464 : index
    %172 = vector.load %arg11[%c0_175, %c2464] : memref<2x2592xf32, #tpu.memory_space<vmem>>, vector<2x32xf32>
    tpu.vector_store %arg11[%c0_175, %c2464], %171 {strides = array<i32>} : memref<2x2592xf32, #tpu.memory_space<vmem>>, vector<2x32xf32>,
    %c156 = arith.constant 156 : index
    %c0_176 = arith.constant 0 : index
    %173 = vector.load %arg10[%c156, %c0_176] : memref<162x32xf32, #tpu.memory_space<vmem>>, vector<2x32xf32>
    %c0_177 = arith.constant 0 : index
    %c2496 = arith.constant 2496 : index
    %174 = vector.load %arg11[%c0_177, %c2496] : memref<2x2592xf32, #tpu.memory_space<vmem>>, vector<2x32xf32>
    tpu.vector_store %arg11[%c0_177, %c2496], %173 {strides = array<i32>} : memref<2x2592xf32, #tpu.memory_space<vmem>>, vector<2x32xf32>,
    %c158 = arith.constant 158 : index
    %c0_178 = arith.constant 0 : index
    %175 = vector.load %arg10[%c158, %c0_178] : memref<162x32xf32, #tpu.memory_space<vmem>>, vector<2x32xf32>
    %c0_179 = arith.constant 0 : index
    %c2528 = arith.constant 2528 : index
    %176 = vector.load %arg11[%c0_179, %c2528] : memref<2x2592xf32, #tpu.memory_space<vmem>>, vector<2x32xf32>
    tpu.vector_store %arg11[%c0_179, %c2528], %175 {strides = array<i32>} : memref<2x2592xf32, #tpu.memory_space<vmem>>, vector<2x32xf32>,
    %c160_180 = arith.constant 160 : index
    %c0_181 = arith.constant 0 : index
    %177 = vector.load %arg10[%c160_180, %c0_181] : memref<162x32xf32, #tpu.memory_space<vmem>>, vector<2x32xf32>
    %c0_182 = arith.constant 0 : index
    %c2560 = arith.constant 2560 : index
    %178 = vector.load %arg11[%c0_182, %c2560] : memref<2x2592xf32, #tpu.memory_space<vmem>>, vector<2x32xf32>
    tpu.vector_store %arg11[%c0_182, %c2560], %177 {strides = array<i32>} : memref<2x2592xf32, #tpu.memory_space<vmem>>, vector<2x32xf32>,
    %c0_183 = arith.constant 0 : index
    %c0_184 = arith.constant 0 : index
    %179 = vector.load %arg11[%c0_183, %c0_184] : memref<2x2592xf32, #tpu.memory_space<vmem>>, vector<2x2592xf32>
    %180 = arith.truncf %179 : vector<2x2592xf32> to vector<2x2592xbf16>
    %c0_185 = arith.constant 0 : index
    %c0_186 = arith.constant 0 : index
    %181 = vector.load %arg5[%c0_185, %c0_186] : memref<2592x256xbf16, #tpu.memory_space<vmem>>, vector<2592x256xbf16>
    %cst_187 = arith.constant dense<0.000000e+00> : vector<2x256xf32>
    %182 = tpu.matmul %180, %181, %cst_187 {dimension_numbers = #tpu.dot_dimension_numbers<[1], [0], [0], [1], [0, 0, 1, 1], [], []>} : vector<2x2592xbf16>, vector<2592x256xbf16>, vector<2x256xf32> -> vector<2x256xf32>
    %c0_188 = arith.constant 0 : index
    %c0_189 = arith.constant 0 : index
    %183 = vector.load %arg6[%c0_188, %c0_189] : memref<1x256xf32, #tpu.memory_space<vmem>>, vector<1x256xf32>
    %184 = vector.broadcast %183 : vector<1x256xf32> to vector<2x256xf32>
    %185 = arith.addf %182, %184 : vector<2x256xf32>
    %cst_190 = arith.constant 0.000000e+00 : f32
    %186 = vector.broadcast %cst_190 : f32 to vector<2x256xf32>
    %187 = arith.maximumf %185, %186 : vector<2x256xf32>
    %188 = arith.truncf %187 : vector<2x256xf32> to vector<2x256xbf16>
    %c0_191 = arith.constant 0 : index
    %c0_192 = arith.constant 0 : index
    %189 = vector.load %arg7[%c0_191, %c0_192] : memref<256x128xbf16, #tpu.memory_space<vmem>>, vector<256x128xbf16>
    %cst_193 = arith.constant dense<0.000000e+00> : vector<2x128xf32>
    %190 = tpu.matmul %188, %189, %cst_193 {dimension_numbers = #tpu.dot_dimension_numbers<[1], [0], [0], [1], [0, 0, 1, 1], [], []>} : vector<2x256xbf16>, vector<256x128xbf16>, vector<2x128xf32> -> vector<2x128xf32>
    %c0_194 = arith.constant 0 : index
    %c0_195 = arith.constant 0 : index
    %191 = vector.load %arg8[%c0_194, %c0_195] : memref<1x128xf32, #tpu.memory_space<vmem>>, vector<1x128xf32>
    %192 = vector.broadcast %191 : vector<1x128xf32> to vector<2x128xf32>
    %193 = arith.addf %190, %192 : vector<2x128xf32>
    %cst_196 = arith.constant dense<0xFF800000> : vector<2xf32>
    %194 = vector.multi_reduction <maximumf>, %193, %cst_196 [1] : vector<2x128xf32> to vector<2xf32>
    %195 = vector.shape_cast %194 : vector<2xf32> to vector<2x1xf32>
    %196 = vector.broadcast %195 : vector<2x1xf32> to vector<2x128xf32>
    %197 = arith.subf %193, %196 : vector<2x128xf32>
    %198 = math.exp %197 : vector<2x128xf32>
    %cst_197 = arith.constant dense<0.000000e+00> : vector<2xf32>
    %199 = vector.multi_reduction <add>, %198, %cst_197 [1] : vector<2x128xf32> to vector<2xf32>
    %200 = vector.shape_cast %199 : vector<2xf32> to vector<2x1xf32>
    %201 = tpu.reciprocal %200 {approx = true} : vector<2x1xf32> -> vector<2x1xf32>
    %202 = vector.broadcast %201 : vector<2x1xf32> to vector<2x128xf32>
    %203 = arith.mulf %198, %202 : vector<2x128xf32>
    %c0_198 = arith.constant 0 : index
    %c0_199 = arith.constant 0 : index
    %204 = vector.load %arg9[%c0_198, %c0_199] : memref<2x128xf32, #tpu.memory_space<vmem>>, vector<2x128xf32>
    tpu.vector_store %arg9[%c0_198, %c0_199], %203 {strides = array<i32>} : memref<2x128xf32, #tpu.memory_space<vmem>>, vector<2x128xf32>,
    return
  }
}

</mosaic_0001>

<llo_original>
// kernel: _lambda_.1
$region0: #{_lambda_.1}
  #allocation0 [shape = 'u32[]', space=smem, size = 0x4, offset = 0x4, fixed_abs, tag = 'smem constant byte address 0x4 - core index']
  #allocation1 [shape = 'u32[144,128]{1,0:T(1,128)}', space=vmem, size = 0x12000, scoped, tag = 'internal scratch']
  #allocation2 [shape = 'f32[162,32]{1,0:T(8,128)}', space=vmem, size = 0x15000, scoped, tag = 'scratch operand']
  #allocation3 [shape = 'f32[2,2592]{1,0:T(2,128)}', space=vmem, size = 0x5400, scoped, tag = 'scratch operand']
  %s0 = inlined_call_operand.vmem [shape: bf16[162,1024], index: 0, kind: input, shape index: {}]
  %s1 = inlined_call_operand.vmem [shape: bf16[1024,256], index: 1, kind: input, shape index: {}]
  %s2 = inlined_call_operand.vmem [shape: f32[1,256], index: 2, kind: input, shape index: {}]
  %s3 = inlined_call_operand.vmem [shape: bf16[256,32], index: 3, kind: input, shape index: {}]
  %s4 = inlined_call_operand.vmem [shape: f32[1,32], index: 4, kind: input, shape index: {}]
  %s5 = inlined_call_operand.vmem [shape: bf16[2592,256], index: 5, kind: input, shape index: {}]
  %s6 = inlined_call_operand.vmem [shape: f32[1,256], index: 6, kind: input, shape index: {}]
  %s7 = inlined_call_operand.vmem [shape: bf16[256,128], index: 7, kind: input, shape index: {}]
  %s8 = inlined_call_operand.vmem [shape: f32[1,128], index: 8, kind: input, shape index: {}]
  %s9 = inlined_call_operand.hbm [shape: f32[2,128], index: 9, kind: output, shape index: {}]
  %s10 = sld [smem:[#allocation0]]
  $region46: #{_lambda_.1} parent=0
    _
  %s12 = ssub.s32 1, %s10
  %s13 = scalar_select 0, %s12, %s10
  $region1: #{_lambda_.1} parent=0
    #allocation4 [shape = 'u8[1024]{0}', space=vmem, size = 0x400, scoped, tag = 'output window, operand 0, single buffered']
    #allocation5 [shape = 's32[1]{0}', space=sflag, size = 0x4, scoped, tag = 'scoped memory for _lambda_.1']
    %14 = vsyncpa [#allocation5], 0
    // Predicated region
    $region2: #{_lambda_.1} parent=1 // pred_check
      _
    $region3: #{_lambda_.1} parent=1 // pred_check_branch
      %16 = sbr.rel (0) target = $region5
    $region4: #{_lambda_.1} parent=1 // pred_region
      _
    $region5: #{_lambda_.1} parent=1 // pred_fallthru
      _
    // Predicated region
    $region6: #{_lambda_.1} parent=1 // pred_check
      _
    $region7: #{_lambda_.1} parent=1 // pred_check_branch
      %18 = sbr.rel (0) target = $region9
    $region8: #{_lambda_.1} parent=1 // pred_region
      _
    $region9: #{_lambda_.1} parent=1 // pred_fallthru
      _
    // Predicated region
    $region10: #{_lambda_.1} parent=1 // pred_check
      _
    $region11: #{_lambda_.1} parent=1 // pred_check_branch
      %20 = sbr.rel (0) target = $region13
    $region12: #{_lambda_.1} parent=1 // pred_region
      _
    $region13: #{_lambda_.1} parent=1 // pred_fallthru
      _
    // Predicated region
    $region14: #{_lambda_.1} parent=1 // pred_check
      _
    $region15: #{_lambda_.1} parent=1 // pred_check_branch
      %22 = sbr.rel (0) target = $region17
    $region16: #{_lambda_.1} parent=1 // pred_region
      _
    $region17: #{_lambda_.1} parent=1 // pred_fallthru
      _
    // Predicated region
    $region18: #{_lambda_.1} parent=1 // pred_check
      _
    $region19: #{_lambda_.1} parent=1 // pred_check_branch
      %24 = sbr.rel (0) target = $region21
    $region20: #{_lambda_.1} parent=1 // pred_region
      _
    $region21: #{_lambda_.1} parent=1 // pred_fallthru
      _
    // Predicated region
    $region22: #{_lambda_.1} parent=1 // pred_check
      _
    $region23: #{_lambda_.1} parent=1 // pred_check_branch
      %26 = sbr.rel (0) target = $region25
    $region24: #{_lambda_.1} parent=1 // pred_region
      _
    $region25: #{_lambda_.1} parent=1 // pred_fallthru
      _
    // Predicated region
    $region26: #{_lambda_.1} parent=1 // pred_check
      _
    $region27: #{_lambda_.1} parent=1 // pred_check_branch
      %28 = sbr.rel (0) target = $region29
    $region28: #{_lambda_.1} parent=1 // pred_region
      _
    $region29: #{_lambda_.1} parent=1 // pred_fallthru
      _
    // Predicated region
    $region30: #{_lambda_.1} parent=1 // pred_check
      _
    $region31: #{_lambda_.1} parent=1 // pred_check_branch
      %30 = sbr.rel (0) target = $region33
    $region32: #{_lambda_.1} parent=1 // pred_region
      _
    $region33: #{_lambda_.1} parent=1 // pred_fallthru
      _
    // Predicated region
    $region34: #{_lambda_.1} parent=1 // pred_check
      _
    $region35: #{_lambda_.1} parent=1 // pred_check_branch
      %32 = sbr.rel (0) target = $region37
    $region36: #{_lambda_.1} parent=1 // pred_region
      _
    $region37: #{_lambda_.1} parent=1 // pred_fallthru
      _
    %v34 = vld [vmem:[%s0] sm:$0xff]
    %v35 = vld [vmem:[%s0 + $0x8] sm:$0xff]
    %v36 = vld [vmem:[%s0 + $0x10] sm:$0xff]
    %v37 = vld [vmem:[%s0 + $0x18] sm:$0xff]
    %v38 = vld [vmem:[%s0 + $0x20] sm:$0xff]
    %v39 = vld [vmem:[%s0 + $0x28] sm:$0xff]
    %v40 = vld [vmem:[%s0 + $0x30] sm:$0xff]
    %v41 = vld [vmem:[%s0 + $0x38] sm:$0xff]
    %v42 = vld [vmem:[%s0 + $0x40] sm:$0xff]
    %v43 = vld [vmem:[%s0 + $0x48] sm:$0xff]
    %v44 = vld [vmem:[%s0 + $0x50] sm:$0xff]
    %v45 = vld [vmem:[%s0 + $0x58] sm:$0xff]
    %v46 = vld [vmem:[%s0 + $0x60] sm:$0xff]
    %v47 = vld [vmem:[%s0 + $0x68] sm:$0xff]
    %v48 = vld [vmem:[%s0 + $0x70] sm:$0xff]
    %v49 = vld [vmem:[%s0 + $0x78] sm:$0xff]
    %v50 = vld [vmem:[%s0 + $0x80] sm:$0xff]
    %v51 = vld [vmem:[%s0 + $0x88] sm:$0xff]
    %v52 = vld [vmem:[%s0 + $0x90] sm:$0xff]
    %v53 = vld [vmem:[%s0 + $0x98] sm:$0xff]
    %v54 = vld [vmem:[%s0 + $0xa0] sm:$0xff]
    %v55 = vld [vmem:[%s0 + $0xa8] sm:$0xff]
    %v56 = vld [vmem:[%s0 + $0xb0] sm:$0xff]
    %v57 = vld [vmem:[%s0 + $0xb8] sm:$0xff]
    %v58 = vld [vmem:[%s0 + $0xc0] sm:$0xff]
    %v59 = vld [vmem:[%s0 + $0xc8] sm:$0xff]
    %v60 = vld [vmem:[%s0 + $0xd0] sm:$0xff]
    %v61 = vld [vmem:[%s0 + $0xd8] sm:$0xff]
    %v62 = vld [vmem:[%s0 + $0xe0] sm:$0xff]
    %v63 = vld [vmem:[%s0 + $0xe8] sm:$0xff]
    %v64 = vld [vmem:[%s0 + $0xf0] sm:$0xff]
    %v65 = vld [vmem:[%s0 + $0xf8] sm:$0xff]
    %v66 = vld [vmem:[%s0 + $0x100] sm:$0xff]
    %v67 = vld [vmem:[%s0 + $0x108] sm:$0xff]
    %v68 = vld [vmem:[%s0 + $0x110] sm:$0xff]
    %v69 = vld [vmem:[%s0 + $0x118] sm:$0xff]
    %v70 = vld [vmem:[%s0 + $0x120] sm:$0xff]
    %v71 = vld [vmem:[%s0 + $0x128] sm:$0xff]
    %v72 = vld [vmem:[%s0 + $0x130] sm:$0xff]
    %v73 = vld [vmem:[%s0 + $0x138] sm:$0xff]
    %v74 = vld [vmem:[%s0 + $0x140] sm:$0xff]
    %v75 = vld [vmem:[%s0 + $0x148] sm:$0xff]
    %v76 = vld [vmem:[%s0 + $0x150] sm:$0xff]
    %v77 = vld [vmem:[%s0 + $0x158] sm:$0xff]
    %v78 = vld [vmem:[%s0 + $0x160] sm:$0xff]
    %v79 = vld [vmem:[%s0 + $0x168] sm:$0xff]
    %v80 = vld [vmem:[%s0 + $0x170] sm:$0xff]
    %v81 = vld [vmem:[%s0 + $0x178] sm:$0xff]
    %v82 = vld [vmem:[%s0 + $0x180] sm:$0xff]
    %v83 = vld [vmem:[%s0 + $0x188] sm:$0xff]
    %v84 = vld [vmem:[%s0 + $0x190] sm:$0xff]
    %v85 = vld [vmem:[%s0 + $0x198] sm:$0xff]
    %v86 = vld [vmem:[%s0 + $0x1a0] sm:$0xff]
    %v87 = vld [vmem:[%s0 + $0x1a8] sm:$0xff]
    %v88 = vld [vmem:[%s0 + $0x1b0] sm:$0xff]
    %v89 = vld [vmem:[%s0 + $0x1b8] sm:$0xff]
    %v90 = vld [vmem:[%s0 + $0x1c0] sm:$0xff]
    %v91 = vld [vmem:[%s0 + $0x1c8] sm:$0xff]
    %v92 = vld [vmem:[%s0 + $0x1d0] sm:$0xff]
    %v93 = vld [vmem:[%s0 + $0x1d8] sm:$0xff]
    %v94 = vld [vmem:[%s0 + $0x1e0] sm:$0xff]
    %v95 = vld [vmem:[%s0 + $0x1e8] sm:$0xff]
    %v96 = vld [vmem:[%s0 + $0x1f0] sm:$0xff]
    %v97 = vld [vmem:[%s0 + $0x1f8] sm:$0xff]
    %v98 = vld [vmem:[%s0 + $0x200] sm:$0xff]
    %v99 = vld [vmem:[%s0 + $0x208] sm:$0xff]
    %v100 = vld [vmem:[%s0 + $0x210] sm:$0xff]
    %v101 = vld [vmem:[%s0 + $0x218] sm:$0xff]
    %v102 = vld [vmem:[%s0 + $0x220] sm:$0xff]
    %v103 = vld [vmem:[%s0 + $0x228] sm:$0xff]
    %v104 = vld [vmem:[%s0 + $0x230] sm:$0xff]
    %v105 = vld [vmem:[%s0 + $0x238] sm:$0xff]
    %v106 = vld [vmem:[%s0 + $0x240] sm:$0xff]
    %v107 = vld [vmem:[%s0 + $0x248] sm:$0xff]
    %v108 = vld [vmem:[%s0 + $0x250] sm:$0xff]
    %v109 = vld [vmem:[%s0 + $0x258] sm:$0xff]
    %v110 = vld [vmem:[%s0 + $0x260] sm:$0xff]
    %v111 = vld [vmem:[%s0 + $0x268] sm:$0xff]
    %v112 = vld [vmem:[%s0 + $0x270] sm:$0xff]
    %v113 = vld [vmem:[%s0 + $0x278] sm:$0xff]
    %v114 = vld [vmem:[%s0 + $0x280] sm:$0x11]
    %v115 = vld [vmem:[%s0 + $0x288] sm:$0x11]
    %v116 = vld [vmem:[%s0 + $0x290] sm:$0x11]
    %v117 = vld [vmem:[%s0 + $0x298] sm:$0x11]
    %v118 = vld [vmem:[%s1] sm:$0xff]
    %v119 = vld [vmem:[%s1 + $0x8] sm:$0xff]
    %v120 = vld [vmem:[%s1 + $0x10] sm:$0xff]
    %v121 = vld [vmem:[%s1 + $0x18] sm:$0xff]
    %v122 = vld [vmem:[%s1 + $0x20] sm:$0xff]
    %v123 = vld [vmem:[%s1 + $0x28] sm:$0xff]
    %v124 = vld [vmem:[%s1 + $0x30] sm:$0xff]
    %v125 = vld [vmem:[%s1 + $0x38] sm:$0xff]
    %v126 = vld [vmem:[%s1 + $0x40] sm:$0xff]
    %v127 = vld [vmem:[%s1 + $0x48] sm:$0xff]
    %v128 = vld [vmem:[%s1 + $0x50] sm:$0xff]
    %v129 = vld [vmem:[%s1 + $0x58] sm:$0xff]
    %v130 = vld [vmem:[%s1 + $0x60] sm:$0xff]
    %v131 = vld [vmem:[%s1 + $0x68] sm:$0xff]
    %v132 = vld [vmem:[%s1 + $0x70] sm:$0xff]
    %v133 = vld [vmem:[%s1 + $0x78] sm:$0xff]
    %v134 = vld [vmem:[%s1 + $0x80] sm:$0xff]
    %v135 = vld [vmem:[%s1 + $0x88] sm:$0xff]
    %v136 = vld [vmem:[%s1 + $0x90] sm:$0xff]
    %v137 = vld [vmem:[%s1 + $0x98] sm:$0xff]
    %v138 = vld [vmem:[%s1 + $0xa0] sm:$0xff]
    %v139 = vld [vmem:[%s1 + $0xa8] sm:$0xff]
    %v140 = vld [vmem:[%s1 + $0xb0] sm:$0xff]
    %v141 = vld [vmem:[%s1 + $0xb8] sm:$0xff]
    %v142 = vld [vmem:[%s1 + $0xc0] sm:$0xff]
    %v143 = vld [vmem:[%s1 + $0xc8] sm:$0xff]
    %v144 = vld [vmem:[%s1 + $0xd0] sm:$0xff]
    %v145 = vld [vmem:[%s1 + $0xd8] sm:$0xff]
    %v146 = vld [vmem:[%s1 + $0xe0] sm:$0xff]
    %v147 = vld [vmem:[%s1 + $0xe8] sm:$0xff]
    %v148 = vld [vmem:[%s1 + $0xf0] sm:$0xff]
    %v149 = vld [vmem:[%s1 + $0xf8] sm:$0xff]
    %v150 = vld [vmem:[%s1 + $0x100] sm:$0xff]
    %v151 = vld [vmem:[%s1 + $0x108] sm:$0xff]
    %v152 = vld [vmem:[%s1 + $0x110] sm:$0xff]
    %v153 = vld [vmem:[%s1 + $0x118] sm:$0xff]
    %v154 = vld [vmem:[%s1 + $0x120] sm:$0xff]
    %v155 = vld [vmem:[%s1 + $0x128] sm:$0xff]
    %v156 = vld [vmem:[%s1 + $0x130] sm:$0xff]
    %v157 = vld [vmem:[%s1 + $0x138] sm:$0xff]
    %v158 = vld [vmem:[%s1 + $0x140] sm:$0xff]
    %v159 = vld [vmem:[%s1 + $0x148] sm:$0xff]
    %v160 = vld [vmem:[%s1 + $0x150] sm:$0xff]
    %v161 = vld [vmem:[%s1 + $0x158] sm:$0xff]
    %v162 = vld [vmem:[%s1 + $0x160] sm:$0xff]
    %v163 = vld [vmem:[%s1 + $0x168] sm:$0xff]
    %v164 = vld [vmem:[%s1 + $0x170] sm:$0xff]
    %v165 = vld [vmem:[%s1 + $0x178] sm:$0xff]
    %v166 = vld [vmem:[%s1 + $0x180] sm:$0xff]
    %v167 = vld [vmem:[%s1 + $0x188] sm:$0xff]
    %v168 = vld [vmem:[%s1 + $0x190] sm:$0xff]
    %v169 = vld [vmem:[%s1 + $0x198] sm:$0xff]
    %v170 = vld [vmem:[%s1 + $0x1a0] sm:$0xff]
    %v171 = vld [vmem:[%s1 + $0x1a8] sm:$0xff]
    %v172 = vld [vmem:[%s1 + $0x1b0] sm:$0xff]
    %v173 = vld [vmem:[%s1 + $0x1b8] sm:$0xff]
    %v174 = vld [vmem:[%s1 + $0x1c0] sm:$0xff]
    %v175 = vld [vmem:[%s1 + $0x1c8] sm:$0xff]
    %v176 = vld [vmem:[%s1 + $0x1d0] sm:$0xff]
    %v177 = vld [vmem:[%s1 + $0x1d8] sm:$0xff]
    %v178 = vld [vmem:[%s1 + $0x1e0] sm:$0xff]
    %v179 = vld [vmem:[%s1 + $0x1e8] sm:$0xff]
    %v180 = vld [vmem:[%s1 + $0x1f0] sm:$0xff]
    %v181 = vld [vmem:[%s1 + $0x1f8] sm:$0xff]
    %v182 = vld [vmem:[%s1 + $0x200] sm:$0xff]
    %v183 = vld [vmem:[%s1 + $0x208] sm:$0xff]
    %v184 = vld [vmem:[%s1 + $0x210] sm:$0xff]
    %v185 = vld [vmem:[%s1 + $0x218] sm:$0xff]
    %v186 = vld [vmem:[%s1 + $0x220] sm:$0xff]
    %v187 = vld [vmem:[%s1 + $0x228] sm:$0xff]
    %v188 = vld [vmem:[%s1 + $0x230] sm:$0xff]
    %v189 = vld [vmem:[%s1 + $0x238] sm:$0xff]
    %v190 = vld [vmem:[%s1 + $0x240] sm:$0xff]
    %v191 = vld [vmem:[%s1 + $0x248] sm:$0xff]
    %v192 = vld [vmem:[%s1 + $0x250] sm:$0xff]
    %v193 = vld [vmem:[%s1 + $0x258] sm:$0xff]
    %v194 = vld [vmem:[%s1 + $0x260] sm:$0xff]
    %v195 = vld [vmem:[%s1 + $0x268] sm:$0xff]
    %v196 = vld [vmem:[%s1 + $0x270] sm:$0xff]
    %v197 = vld [vmem:[%s1 + $0x278] sm:$0xff]
    %v198 = vld [vmem:[%s1 + $0x280] sm:$0xff]
    %v199 = vld [vmem:[%s1 + $0x288] sm:$0xff]
    %v200 = vld [vmem:[%s1 + $0x290] sm:$0xff]
    %v201 = vld [vmem:[%s1 + $0x298] sm:$0xff]
    %v202 = vld [vmem:[%s1 + $0x2a0] sm:$0xff]
    %v203 = vld [vmem:[%s1 + $0x2a8] sm:$0xff]
    %v204 = vld [vmem:[%s1 + $0x2b0] sm:$0xff]
    %v205 = vld [vmem:[%s1 + $0x2b8] sm:$0xff]
    %v206 = vld [vmem:[%s1 + $0x2c0] sm:$0xff]
    %v207 = vld [vmem:[%s1 + $0x2c8] sm:$0xff]
    %v208 = vld [vmem:[%s1 + $0x2d0] sm:$0xff]
    %v209 = vld [vmem:[%s1 + $0x2d8] sm:$0xff]
    %v210 = vld [vmem:[%s1 + $0x2e0] sm:$0xff]
    %v211 = vld [vmem:[%s1 + $0x2e8] sm:$0xff]
    %v212 = vld [vmem:[%s1 + $0x2f0] sm:$0xff]
    %v213 = vld [vmem:[%s1 + $0x2f8] sm:$0xff]
    %v214 = vld [vmem:[%s1 + $0x300] sm:$0xff]
    %v215 = vld [vmem:[%s1 + $0x308] sm:$0xff]
    %v216 = vld [vmem:[%s1 + $0x310] sm:$0xff]
    %v217 = vld [vmem:[%s1 + $0x318] sm:$0xff]
    %v218 = vld [vmem:[%s1 + $0x320] sm:$0xff]
    %v219 = vld [vmem:[%s1 + $0x328] sm:$0xff]
    %v220 = vld [vmem:[%s1 + $0x330] sm:$0xff]
    %v221 = vld [vmem:[%s1 + $0x338] sm:$0xff]
    %v222 = vld [vmem:[%s1 + $0x340] sm:$0xff]
    %v223 = vld [vmem:[%s1 + $0x348] sm:$0xff]
    %v224 = vld [vmem:[%s1 + $0x350] sm:$0xff]
    %v225 = vld [vmem:[%s1 + $0x358] sm:$0xff]
    %v226 = vld [vmem:[%s1 + $0x360] sm:$0xff]
    %v227 = vld [vmem:[%s1 + $0x368] sm:$0xff]
    %v228 = vld [vmem:[%s1 + $0x370] sm:$0xff]
    %v229 = vld [vmem:[%s1 + $0x378] sm:$0xff]
    %v230 = vld [vmem:[%s1 + $0x380] sm:$0xff]
    %v231 = vld [vmem:[%s1 + $0x388] sm:$0xff]
    %v232 = vld [vmem:[%s1 + $0x390] sm:$0xff]
    %v233 = vld [vmem:[%s1 + $0x398] sm:$0xff]
    %v234 = vld [vmem:[%s1 + $0x3a0] sm:$0xff]
    %v235 = vld [vmem:[%s1 + $0x3a8] sm:$0xff]
    %v236 = vld [vmem:[%s1 + $0x3b0] sm:$0xff]
    %v237 = vld [vmem:[%s1 + $0x3b8] sm:$0xff]
    %v238 = vld [vmem:[%s1 + $0x3c0] sm:$0xff]
    %v239 = vld [vmem:[%s1 + $0x3c8] sm:$0xff]
    %v240 = vld [vmem:[%s1 + $0x3d0] sm:$0xff]
    %v241 = vld [vmem:[%s1 + $0x3d8] sm:$0xff]
    %v242 = vld [vmem:[%s1 + $0x3e0] sm:$0xff]
    %v243 = vld [vmem:[%s1 + $0x3e8] sm:$0xff]
    %v244 = vld [vmem:[%s1 + $0x3f0] sm:$0xff]
    %v245 = vld [vmem:[%s1 + $0x3f8] sm:$0xff]
    %v246 = vld [vmem:[%s2] sm:$0x3]
    %v248 = vlaneseq
    %v249 = vshrl.u32 %v248, 7
    %v250 = vsub.s32 0, %v249
    %v251 = vrot.slane %v246, %v250
    %v252 = vlaneseq
    %v253 = vshrl.u32 %v252, 7
    %v254 = vsub.s32 1, %v253
    %v255 = vrot.slane %v246, %v254
    %v342 = vunpack.c.l.b16 %v34
    %v343 = vunpack.c.h.b16 %v34
    %v344 = vunpack.c.l.b16 %v35
    %v345 = vunpack.c.h.b16 %v35
    %v346 = vunpack.c.l.b16 %v36
    %v347 = vunpack.c.h.b16 %v36
    %v348 = vunpack.c.l.b16 %v37
    %v349 = vunpack.c.h.b16 %v37
    %v350 = vunpack.c.l.b16 %v38
    %v351 = vunpack.c.h.b16 %v38
    %v352 = vunpack.c.l.b16 %v39
    %v353 = vunpack.c.h.b16 %v39
    %v354 = vunpack.c.l.b16 %v40
    %v355 = vunpack.c.h.b16 %v40
    %v356 = vunpack.c.l.b16 %v41
    %v357 = vunpack.c.h.b16 %v41
    %v358 = vunpack.c.l.b16 %v42
    %v359 = vunpack.c.h.b16 %v42
    %v360 = vunpack.c.l.b16 %v43
    %v361 = vunpack.c.h.b16 %v43
    %v362 = vunpack.c.l.b16 %v44
    %v363 = vunpack.c.h.b16 %v44
    %v364 = vunpack.c.l.b16 %v45
    %v365 = vunpack.c.h.b16 %v45
    %v366 = vunpack.c.l.b16 %v46
    %v367 = vunpack.c.h.b16 %v46
    %v368 = vunpack.c.l.b16 %v47
    %v369 = vunpack.c.h.b16 %v47
    %v370 = vunpack.c.l.b16 %v48
    %v371 = vunpack.c.h.b16 %v48
    %v372 = vunpack.c.l.b16 %v49
    %v373 = vunpack.c.h.b16 %v49
    %v374 = vunpack.c.l.b16 %v50
    %v375 = vunpack.c.h.b16 %v50
    %v376 = vunpack.c.l.b16 %v51
    %v377 = vunpack.c.h.b16 %v51
    %v378 = vunpack.c.l.b16 %v52
    %v379 = vunpack.c.h.b16 %v52
    %v380 = vunpack.c.l.b16 %v53
    %v381 = vunpack.c.h.b16 %v53
    %v382 = vunpack.c.l.b16 %v54
    %v383 = vunpack.c.h.b16 %v54
    %v384 = vunpack.c.l.b16 %v55
    %v385 = vunpack.c.h.b16 %v55
    %v386 = vunpack.c.l.b16 %v56
    %v387 = vunpack.c.h.b16 %v56
    %v388 = vunpack.c.l.b16 %v57
    %v389 = vunpack.c.h.b16 %v57
    %v390 = vunpack.c.l.b16 %v58
    %v391 = vunpack.c.h.b16 %v58
    %v392 = vunpack.c.l.b16 %v59
    %v393 = vunpack.c.h.b16 %v59
    %v394 = vunpack.c.l.b16 %v60
    %v395 = vunpack.c.h.b16 %v60
    %v396 = vunpack.c.l.b16 %v61
    %v397 = vunpack.c.h.b16 %v61
    %v398 = vunpack.c.l.b16 %v62
    %v399 = vunpack.c.h.b16 %v62
    %v400 = vunpack.c.l.b16 %v63
    %v401 = vunpack.c.h.b16 %v63
    %v402 = vunpack.c.l.b16 %v64
    %v403 = vunpack.c.h.b16 %v64
    %v404 = vunpack.c.l.b16 %v65
    %v405 = vunpack.c.h.b16 %v65
    %v406 = vunpack.c.l.b16 %v66
    %v407 = vunpack.c.h.b16 %v66
    %v408 = vunpack.c.l.b16 %v67
    %v409 = vunpack.c.h.b16 %v67
    %v410 = vunpack.c.l.b16 %v68
    %v411 = vunpack.c.h.b16 %v68
    %v412 = vunpack.c.l.b16 %v69
    %v413 = vunpack.c.h.b16 %v69
    %v414 = vunpack.c.l.b16 %v70
    %v415 = vunpack.c.h.b16 %v70
    %v416 = vunpack.c.l.b16 %v71
    %v417 = vunpack.c.h.b16 %v71
    %v418 = vunpack.c.l.b16 %v72
    %v419 = vunpack.c.h.b16 %v72
    %v420 = vunpack.c.l.b16 %v73
    %v421 = vunpack.c.h.b16 %v73
    %v422 = vunpack.c.l.b16 %v74
    %v423 = vunpack.c.h.b16 %v74
    %v424 = vunpack.c.l.b16 %v75
    %v425 = vunpack.c.h.b16 %v75
    %v426 = vunpack.c.l.b16 %v76
    %v427 = vunpack.c.h.b16 %v76
    %v428 = vunpack.c.l.b16 %v77
    %v429 = vunpack.c.h.b16 %v77
    %v430 = vunpack.c.l.b16 %v78
    %v431 = vunpack.c.h.b16 %v78
    %v432 = vunpack.c.l.b16 %v79
    %v433 = vunpack.c.h.b16 %v79
    %v434 = vunpack.c.l.b16 %v80
    %v435 = vunpack.c.h.b16 %v80
    %v436 = vunpack.c.l.b16 %v81
    %v437 = vunpack.c.h.b16 %v81
    %v438 = vunpack.c.l.b16 %v82
    %v439 = vunpack.c.h.b16 %v82
    %v440 = vunpack.c.l.b16 %v83
    %v441 = vunpack.c.h.b16 %v83
    %v442 = vunpack.c.l.b16 %v84
    %v443 = vunpack.c.h.b16 %v84
    %v444 = vunpack.c.l.b16 %v85
    %v445 = vunpack.c.h.b16 %v85
    %v446 = vunpack.c.l.b16 %v86
    %v447 = vunpack.c.h.b16 %v86
    %v448 = vunpack.c.l.b16 %v87
    %v449 = vunpack.c.h.b16 %v87
    %v450 = vunpack.c.l.b16 %v88
    %v451 = vunpack.c.h.b16 %v88
    %v452 = vunpack.c.l.b16 %v89
    %v453 = vunpack.c.h.b16 %v89
    %v454 = vunpack.c.l.b16 %v90
    %v455 = vunpack.c.h.b16 %v90
    %v456 = vunpack.c.l.b16 %v91
    %v457 = vunpack.c.h.b16 %v91
    %v458 = vunpack.c.l.b16 %v92
    %v459 = vunpack.c.h.b16 %v92
    %v460 = vunpack.c.l.b16 %v93
    %v461 = vunpack.c.h.b16 %v93
    %v462 = vunpack.c.l.b16 %v94
    %v463 = vunpack.c.h.b16 %v94
    %v464 = vunpack.c.l.b16 %v95
    %v465 = vunpack.c.h.b16 %v95
    %v466 = vunpack.c.l.b16 %v96
    %v467 = vunpack.c.h.b16 %v96
    %v468 = vunpack.c.l.b16 %v97
    %v469 = vunpack.c.h.b16 %v97
    %v470 = vunpack.c.l.b16 %v98
    %v471 = vunpack.c.h.b16 %v98
    %v472 = vunpack.c.l.b16 %v99
    %v473 = vunpack.c.h.b16 %v99
    %v474 = vunpack.c.l.b16 %v100
    %v475 = vunpack.c.h.b16 %v100
    %v476 = vunpack.c.l.b16 %v101
    %v477 = vunpack.c.h.b16 %v101
    %v478 = vunpack.c.l.b16 %v102
    %v479 = vunpack.c.h.b16 %v102
    %v480 = vunpack.c.l.b16 %v103
    %v481 = vunpack.c.h.b16 %v103
    %v482 = vunpack.c.l.b16 %v104
    %v483 = vunpack.c.h.b16 %v104
    %v484 = vunpack.c.l.b16 %v105
    %v485 = vunpack.c.h.b16 %v105
    %v486 = vunpack.c.l.b16 %v106
    %v487 = vunpack.c.h.b16 %v106
    %v488 = vunpack.c.l.b16 %v107
    %v489 = vunpack.c.h.b16 %v107
    %v490 = vunpack.c.l.b16 %v108
    %v491 = vunpack.c.h.b16 %v108
    %v492 = vunpack.c.l.b16 %v109
    %v493 = vunpack.c.h.b16 %v109
    %v494 = vunpack.c.l.b16 %v110
    %v495 = vunpack.c.h.b16 %v110
    %v496 = vunpack.c.l.b16 %v111
    %v497 = vunpack.c.h.b16 %v111
    %v498 = vunpack.c.l.b16 %v112
    %v499 = vunpack.c.h.b16 %v112
    %v500 = vunpack.c.l.b16 %v113
    %v501 = vunpack.c.h.b16 %v113
    %v502 = vunpack.c.l.b16 %v114
    %v503 = vunpack.c.h.b16 %v114
    %v504 = vunpack.c.l.b16 %v115
    %v505 = vunpack.c.h.b16 %v115
    %v506 = vunpack.c.l.b16 %v116
    %v507 = vunpack.c.h.b16 %v116
    %v508 = vunpack.c.l.b16 %v117
    %v509 = vunpack.c.h.b16 %v117
    %v510 = vpack.c.b16 %v350, %v342
    %v511 = vpack.c.b16 %v351, %v343
    %v512 = vpack.c.b16 %v352, %v344
    %v513 = vpack.c.b16 %v353, %v345
    %v514 = vpack.c.b16 %v354, %v346
    %v515 = vpack.c.b16 %v355, %v347
    %v516 = vpack.c.b16 %v356, %v348
    %v517 = vpack.c.b16 %v357, %v349
    %v518 = vpack.c.b16 %v366, %v358
    %v519 = vpack.c.b16 %v367, %v359
    %v520 = vpack.c.b16 %v368, %v360
    %v521 = vpack.c.b16 %v369, %v361
    %v522 = vpack.c.b16 %v370, %v362
    %v523 = vpack.c.b16 %v371, %v363
    %v524 = vpack.c.b16 %v372, %v364
    %v525 = vpack.c.b16 %v373, %v365
    %v526 = vpack.c.b16 %v382, %v374
    %v527 = vpack.c.b16 %v383, %v375
    %v528 = vpack.c.b16 %v384, %v376
    %v529 = vpack.c.b16 %v385, %v377
    %v530 = vpack.c.b16 %v386, %v378
    %v531 = vpack.c.b16 %v387, %v379
    %v532 = vpack.c.b16 %v388, %v380
    %v533 = vpack.c.b16 %v389, %v381
    %v534 = vpack.c.b16 %v398, %v390
    %v535 = vpack.c.b16 %v399, %v391
    %v536 = vpack.c.b16 %v400, %v392
    %v537 = vpack.c.b16 %v401, %v393
    %v538 = vpack.c.b16 %v402, %v394
    %v539 = vpack.c.b16 %v403, %v395
    %v540 = vpack.c.b16 %v404, %v396
    %v541 = vpack.c.b16 %v405, %v397
    %v542 = vpack.c.b16 %v414, %v406
    %v543 = vpack.c.b16 %v415, %v407
    %v544 = vpack.c.b16 %v416, %v408
    %v545 = vpack.c.b16 %v417, %v409
    %v546 = vpack.c.b16 %v418, %v410
    %v547 = vpack.c.b16 %v419, %v411
    %v548 = vpack.c.b16 %v420, %v412
    %v549 = vpack.c.b16 %v421, %v413
    %v550 = vpack.c.b16 %v430, %v422
    %v551 = vpack.c.b16 %v431, %v423
    %v552 = vpack.c.b16 %v432, %v424
    %v553 = vpack.c.b16 %v433, %v425
    %v554 = vpack.c.b16 %v434, %v426
    %v555 = vpack.c.b16 %v435, %v427
    %v556 = vpack.c.b16 %v436, %v428
    %v557 = vpack.c.b16 %v437, %v429
    %v558 = vpack.c.b16 %v446, %v438
    %v559 = vpack.c.b16 %v447, %v439
    %v560 = vpack.c.b16 %v448, %v440
    %v561 = vpack.c.b16 %v449, %v441
    %v562 = vpack.c.b16 %v450, %v442
    %v563 = vpack.c.b16 %v451, %v443
    %v564 = vpack.c.b16 %v452, %v444
    %v565 = vpack.c.b16 %v453, %v445
    %v566 = vpack.c.b16 %v462, %v454
    %v567 = vpack.c.b16 %v463, %v455
    %v568 = vpack.c.b16 %v464, %v456
    %v569 = vpack.c.b16 %v465, %v457
    %v570 = vpack.c.b16 %v466, %v458
    %v571 = vpack.c.b16 %v467, %v459
    %v572 = vpack.c.b16 %v468, %v460
    %v573 = vpack.c.b16 %v469, %v461
    %v574 = vpack.c.b16 %v478, %v470
    %v575 = vpack.c.b16 %v479, %v471
    %v576 = vpack.c.b16 %v480, %v472
    %v577 = vpack.c.b16 %v481, %v473
    %v578 = vpack.c.b16 %v482, %v474
    %v579 = vpack.c.b16 %v483, %v475
    %v580 = vpack.c.b16 %v484, %v476
    %v581 = vpack.c.b16 %v485, %v477
    %v582 = vpack.c.b16 %v494, %v486
    %v583 = vpack.c.b16 %v495, %v487
    %v584 = vpack.c.b16 %v496, %v488
    %v585 = vpack.c.b16 %v497, %v489
    %v586 = vpack.c.b16 %v498, %v490
    %v587 = vpack.c.b16 %v499, %v491
    %v588 = vpack.c.b16 %v500, %v492
    %v589 = vpack.c.b16 %v501, %v493
    %v590 = vpack.c.b16 %v502, %v502
    %v591 = vpack.c.b16 %v503, %v503
    %v592 = vpack.c.b16 %v504, %v504
    %v593 = vpack.c.b16 %v505, %v505
    %v594 = vpack.c.b16 %v506, %v506
    %v595 = vpack.c.b16 %v507, %v507
    %v596 = vpack.c.b16 %v508, %v508
    %v597 = vpack.c.b16 %v509, %v509
    %v814 = vunpack.c.l.b16 %v118
    %v815 = vunpack.c.h.b16 %v118
    %v816 = vunpack.c.l.b16 %v119
    %v817 = vunpack.c.h.b16 %v119
    %v818 = vunpack.c.l.b16 %v120
    %v819 = vunpack.c.h.b16 %v120
    %v820 = vunpack.c.l.b16 %v121
    %v821 = vunpack.c.h.b16 %v121
    %v822 = vunpack.c.l.b16 %v122
    %v823 = vunpack.c.h.b16 %v122
    %v824 = vunpack.c.l.b16 %v123
    %v825 = vunpack.c.h.b16 %v123
    %v826 = vunpack.c.l.b16 %v124
    %v827 = vunpack.c.h.b16 %v124
    %v828 = vunpack.c.l.b16 %v125
    %v829 = vunpack.c.h.b16 %v125
    %v830 = vunpack.c.l.b16 %v126
    %v831 = vunpack.c.h.b16 %v126
    %v832 = vunpack.c.l.b16 %v127
    %v833 = vunpack.c.h.b16 %v127
    %v834 = vunpack.c.l.b16 %v128
    %v835 = vunpack.c.h.b16 %v128
    %v836 = vunpack.c.l.b16 %v129
    %v837 = vunpack.c.h.b16 %v129
    %v838 = vunpack.c.l.b16 %v130
    %v839 = vunpack.c.h.b16 %v130
    %v840 = vunpack.c.l.b16 %v131
    %v841 = vunpack.c.h.b16 %v131
    %v842 = vunpack.c.l.b16 %v132
    %v843 = vunpack.c.h.b16 %v132
    %v844 = vunpack.c.l.b16 %v133
    %v845 = vunpack.c.h.b16 %v133
    %v846 = vunpack.c.l.b16 %v134
    %v847 = vunpack.c.h.b16 %v134
    %v848 = vunpack.c.l.b16 %v135
    %v849 = vunpack.c.h.b16 %v135
    %v850 = vunpack.c.l.b16 %v136
    %v851 = vunpack.c.h.b16 %v136
    %v852 = vunpack.c.l.b16 %v137
    %v853 = vunpack.c.h.b16 %v137
    %v854 = vunpack.c.l.b16 %v138
    %v855 = vunpack.c.h.b16 %v138
    %v856 = vunpack.c.l.b16 %v139
    %v857 = vunpack.c.h.b16 %v139
    %v858 = vunpack.c.l.b16 %v140
    %v859 = vunpack.c.h.b16 %v140
    %v860 = vunpack.c.l.b16 %v141
    %v861 = vunpack.c.h.b16 %v141
    %v862 = vunpack.c.l.b16 %v142
    %v863 = vunpack.c.h.b16 %v142
    %v864 = vunpack.c.l.b16 %v143
    %v865 = vunpack.c.h.b16 %v143
    %v866 = vunpack.c.l.b16 %v144
    %v867 = vunpack.c.h.b16 %v144
    %v868 = vunpack.c.l.b16 %v145
    %v869 = vunpack.c.h.b16 %v145
    %v870 = vunpack.c.l.b16 %v146
    %v871 = vunpack.c.h.b16 %v146
    %v872 = vunpack.c.l.b16 %v147
    %v873 = vunpack.c.h.b16 %v147
    %v874 = vunpack.c.l.b16 %v148
    %v875 = vunpack.c.h.b16 %v148
    %v876 = vunpack.c.l.b16 %v149
    %v877 = vunpack.c.h.b16 %v149
    %v878 = vunpack.c.l.b16 %v150
    %v879 = vunpack.c.h.b16 %v150
    %v880 = vunpack.c.l.b16 %v151
    %v881 = vunpack.c.h.b16 %v151
    %v882 = vunpack.c.l.b16 %v152
    %v883 = vunpack.c.h.b16 %v152
    %v884 = vunpack.c.l.b16 %v153
    %v885 = vunpack.c.h.b16 %v153
    %v886 = vunpack.c.l.b16 %v154
    %v887 = vunpack.c.h.b16 %v154
    %v888 = vunpack.c.l.b16 %v155
    %v889 = vunpack.c.h.b16 %v155
    %v890 = vunpack.c.l.b16 %v156
    %v891 = vunpack.c.h.b16 %v156
    %v892 = vunpack.c.l.b16 %v157
    %v893 = vunpack.c.h.b16 %v157
    %v894 = vunpack.c.l.b16 %v158
    %v895 = vunpack.c.h.b16 %v158
    %v896 = vunpack.c.l.b16 %v159
    %v897 = vunpack.c.h.b16 %v159
    %v898 = vunpack.c.l.b16 %v160
    %v899 = vunpack.c.h.b16 %v160
    %v900 = vunpack.c.l.b16 %v161
    %v901 = vunpack.c.h.b16 %v161
    %v902 = vunpack.c.l.b16 %v162
    %v903 = vunpack.c.h.b16 %v162
    %v904 = vunpack.c.l.b16 %v163
    %v905 = vunpack.c.h.b16 %v163
    %v906 = vunpack.c.l.b16 %v164
    %v907 = vunpack.c.h.b16 %v164
    %v908 = vunpack.c.l.b16 %v165
    %v909 = vunpack.c.h.b16 %v165
    %v910 = vunpack.c.l.b16 %v166
    %v911 = vunpack.c.h.b16 %v166
    %v912 = vunpack.c.l.b16 %v167
    %v913 = vunpack.c.h.b16 %v167
    %v914 = vunpack.c.l.b16 %v168
    %v915 = vunpack.c.h.b16 %v168
    %v916 = vunpack.c.l.b16 %v169
    %v917 = vunpack.c.h.b16 %v169
    %v918 = vunpack.c.l.b16 %v170
    %v919 = vunpack.c.h.b16 %v170
    %v920 = vunpack.c.l.b16 %v171
    %v921 = vunpack.c.h.b16 %v171
    %v922 = vunpack.c.l.b16 %v172
    %v923 = vunpack.c.h.b16 %v172
    %v924 = vunpack.c.l.b16 %v173
    %v925 = vunpack.c.h.b16 %v173
    %v926 = vunpack.c.l.b16 %v174
    %v927 = vunpack.c.h.b16 %v174
    %v928 = vunpack.c.l.b16 %v175
    %v929 = vunpack.c.h.b16 %v175
    %v930 = vunpack.c.l.b16 %v176
    %v931 = vunpack.c.h.b16 %v176
    %v932 = vunpack.c.l.b16 %v177
    %v933 = vunpack.c.h.b16 %v177
    %v934 = vunpack.c.l.b16 %v178
    %v935 = vunpack.c.h.b16 %v178
    %v936 = vunpack.c.l.b16 %v179
    %v937 = vunpack.c.h.b16 %v179
    %v938 = vunpack.c.l.b16 %v180
    %v939 = vunpack.c.h.b16 %v180
    %v940 = vunpack.c.l.b16 %v181
    %v941 = vunpack.c.h.b16 %v181
    %v942 = vunpack.c.l.b16 %v182
    %v943 = vunpack.c.h.b16 %v182
    %v944 = vunpack.c.l.b16 %v183
    %v945 = vunpack.c.h.b16 %v183
    %v946 = vunpack.c.l.b16 %v184
    %v947 = vunpack.c.h.b16 %v184
    %v948 = vunpack.c.l.b16 %v185
    %v949 = vunpack.c.h.b16 %v185
    %v950 = vunpack.c.l.b16 %v186
    %v951 = vunpack.c.h.b16 %v186
    %v952 = vunpack.c.l.b16 %v187
    %v953 = vunpack.c.h.b16 %v187
    %v954 = vunpack.c.l.b16 %v188
    %v955 = vunpack.c.h.b16 %v188
    %v956 = vunpack.c.l.b16 %v189
    %v957 = vunpack.c.h.b16 %v189
    %v958 = vunpack.c.l.b16 %v190
    %v959 = vunpack.c.h.b16 %v190
    %v960 = vunpack.c.l.b16 %v191
    %v961 = vunpack.c.h.b16 %v191
    %v962 = vunpack.c.l.b16 %v192
    %v963 = vunpack.c.h.b16 %v192
    %v964 = vunpack.c.l.b16 %v193
    %v965 = vunpack.c.h.b16 %v193
    %v966 = vunpack.c.l.b16 %v194
    %v967 = vunpack.c.h.b16 %v194
    %v968 = vunpack.c.l.b16 %v195
    %v969 = vunpack.c.h.b16 %v195
    %v970 = vunpack.c.l.b16 %v196
    %v971 = vunpack.c.h.b16 %v196
    %v972 = vunpack.c.l.b16 %v197
    %v973 = vunpack.c.h.b16 %v197
    %v974 = vunpack.c.l.b16 %v198
    %v975 = vunpack.c.h.b16 %v198
    %v976 = vunpack.c.l.b16 %v199
    %v977 = vunpack.c.h.b16 %v199
    %v978 = vunpack.c.l.b16 %v200
    %v979 = vunpack.c.h.b16 %v200
    %v980 = vunpack.c.l.b16 %v201
    %v981 = vunpack.c.h.b16 %v201
    %v982 = vunpack.c.l.b16 %v202
    %v983 = vunpack.c.h.b16 %v202
    %v984 = vunpack.c.l.b16 %v203
    %v985 = vunpack.c.h.b16 %v203
    %v986 = vunpack.c.l.b16 %v204
    %v987 = vunpack.c.h.b16 %v204
    %v988 = vunpack.c.l.b16 %v205
    %v989 = vunpack.c.h.b16 %v205
    %v990 = vunpack.c.l.b16 %v206
    %v991 = vunpack.c.h.b16 %v206
    %v992 = vunpack.c.l.b16 %v207
    %v993 = vunpack.c.h.b16 %v207
    %v994 = vunpack.c.l.b16 %v208
    %v995 = vunpack.c.h.b16 %v208
    %v996 = vunpack.c.l.b16 %v209
    %v997 = vunpack.c.h.b16 %v209
    %v998 = vunpack.c.l.b16 %v210
    %v999 = vunpack.c.h.b16 %v210
    %v1000 = vunpack.c.l.b16 %v211
    %v1001 = vunpack.c.h.b16 %v211
    %v1002 = vunpack.c.l.b16 %v212
    %v1003 = vunpack.c.h.b16 %v212
    %v1004 = vunpack.c.l.b16 %v213
    %v1005 = vunpack.c.h.b16 %v213
    %v1006 = vunpack.c.l.b16 %v214
    %v1007 = vunpack.c.h.b16 %v214
    %v1008 = vunpack.c.l.b16 %v215
    %v1009 = vunpack.c.h.b16 %v215
    %v1010 = vunpack.c.l.b16 %v216
    %v1011 = vunpack.c.h.b16 %v216
    %v1012 = vunpack.c.l.b16 %v217
    %v1013 = vunpack.c.h.b16 %v217
    %v1014 = vunpack.c.l.b16 %v218
    %v1015 = vunpack.c.h.b16 %v218
    %v1016 = vunpack.c.l.b16 %v219
    %v1017 = vunpack.c.h.b16 %v219
    %v1018 = vunpack.c.l.b16 %v220
    %v1019 = vunpack.c.h.b16 %v220
    %v1020 = vunpack.c.l.b16 %v221
    %v1021 = vunpack.c.h.b16 %v221
    %v1022 = vunpack.c.l.b16 %v222
    %v1023 = vunpack.c.h.b16 %v222
    %v1024 = vunpack.c.l.b16 %v223
    %v1025 = vunpack.c.h.b16 %v223
    %v1026 = vunpack.c.l.b16 %v224
    %v1027 = vunpack.c.h.b16 %v224
    %v1028 = vunpack.c.l.b16 %v225
    %v1029 = vunpack.c.h.b16 %v225
    %v1030 = vunpack.c.l.b16 %v226
    %v1031 = vunpack.c.h.b16 %v226
    %v1032 = vunpack.c.l.b16 %v227
    %v1033 = vunpack.c.h.b16 %v227
    %v1034 = vunpack.c.l.b16 %v228
    %v1035 = vunpack.c.h.b16 %v228
    %v1036 = vunpack.c.l.b16 %v229
    %v1037 = vunpack.c.h.b16 %v229
    %v1038 = vunpack.c.l.b16 %v230
    %v1039 = vunpack.c.h.b16 %v230
    %v1040 = vunpack.c.l.b16 %v231
    %v1041 = vunpack.c.h.b16 %v231
    %v1042 = vunpack.c.l.b16 %v232
    %v1043 = vunpack.c.h.b16 %v232
    %v1044 = vunpack.c.l.b16 %v233
    %v1045 = vunpack.c.h.b16 %v233
    %v1046 = vunpack.c.l.b16 %v234
    %v1047 = vunpack.c.h.b16 %v234
    %v1048 = vunpack.c.l.b16 %v235
    %v1049 = vunpack.c.h.b16 %v235
    %v1050 = vunpack.c.l.b16 %v236
    %v1051 = vunpack.c.h.b16 %v236
    %v1052 = vunpack.c.l.b16 %v237
    %v1053 = vunpack.c.h.b16 %v237
    %v1054 = vunpack.c.l.b16 %v238
    %v1055 = vunpack.c.h.b16 %v238
    %v1056 = vunpack.c.l.b16 %v239
    %v1057 = vunpack.c.h.b16 %v239
    %v1058 = vunpack.c.l.b16 %v240
    %v1059 = vunpack.c.h.b16 %v240
    %v1060 = vunpack.c.l.b16 %v241
    %v1061 = vunpack.c.h.b16 %v241
    %v1062 = vunpack.c.l.b16 %v242
    %v1063 = vunpack.c.h.b16 %v242
    %v1064 = vunpack.c.l.b16 %v243
    %v1065 = vunpack.c.h.b16 %v243
    %v1066 = vunpack.c.l.b16 %v244
    %v1067 = vunpack.c.h.b16 %v244
    %v1068 = vunpack.c.l.b16 %v245
    %v1069 = vunpack.c.h.b16 %v245
    %v1070 = vpack.c.b16 %v816, %v814
    %v1071 = vpack.c.b16 %v817, %v815
    %v1072 = vpack.c.b16 %v820, %v818
    %v1073 = vpack.c.b16 %v821, %v819
    %v1074 = vpack.c.b16 %v824, %v822
    %v1075 = vpack.c.b16 %v825, %v823
    %v1076 = vpack.c.b16 %v828, %v826
    %v1077 = vpack.c.b16 %v829, %v827
    %v1078 = vpack.c.b16 %v832, %v830
    %v1079 = vpack.c.b16 %v833, %v831
    %v1080 = vpack.c.b16 %v836, %v834
    %v1081 = vpack.c.b16 %v837, %v835
    %v1082 = vpack.c.b16 %v840, %v838
    %v1083 = vpack.c.b16 %v841, %v839
    %v1084 = vpack.c.b16 %v844, %v842
    %v1085 = vpack.c.b16 %v845, %v843
    %v1086 = vpack.c.b16 %v848, %v846
    %v1087 = vpack.c.b16 %v849, %v847
    %v1088 = vpack.c.b16 %v852, %v850
    %v1089 = vpack.c.b16 %v853, %v851
    %v1090 = vpack.c.b16 %v856, %v854
    %v1091 = vpack.c.b16 %v857, %v855
    %v1092 = vpack.c.b16 %v860, %v858
    %v1093 = vpack.c.b16 %v861, %v859
    %v1094 = vpack.c.b16 %v864, %v862
    %v1095 = vpack.c.b16 %v865, %v863
    %v1096 = vpack.c.b16 %v868, %v866
    %v1097 = vpack.c.b16 %v869, %v867
    %v1098 = vpack.c.b16 %v872, %v870
    %v1099 = vpack.c.b16 %v873, %v871
    %v1100 = vpack.c.b16 %v876, %v874
    %v1101 = vpack.c.b16 %v877, %v875
    %v1102 = vpack.c.b16 %v880, %v878
    %v1103 = vpack.c.b16 %v881, %v879
    %v1104 = vpack.c.b16 %v884, %v882
    %v1105 = vpack.c.b16 %v885, %v883
    %v1106 = vpack.c.b16 %v888, %v886
    %v1107 = vpack.c.b16 %v889, %v887
    %v1108 = vpack.c.b16 %v892, %v890
    %v1109 = vpack.c.b16 %v893, %v891
    %v1110 = vpack.c.b16 %v896, %v894
    %v1111 = vpack.c.b16 %v897, %v895
    %v1112 = vpack.c.b16 %v900, %v898
    %v1113 = vpack.c.b16 %v901, %v899
    %v1114 = vpack.c.b16 %v904, %v902
    %v1115 = vpack.c.b16 %v905, %v903
    %v1116 = vpack.c.b16 %v908, %v906
    %v1117 = vpack.c.b16 %v909, %v907
    %v1118 = vpack.c.b16 %v912, %v910
    %v1119 = vpack.c.b16 %v913, %v911
    %v1120 = vpack.c.b16 %v916, %v914
    %v1121 = vpack.c.b16 %v917, %v915
    %v1122 = vpack.c.b16 %v920, %v918
    %v1123 = vpack.c.b16 %v921, %v919
    %v1124 = vpack.c.b16 %v924, %v922
    %v1125 = vpack.c.b16 %v925, %v923
    %v1126 = vpack.c.b16 %v928, %v926
    %v1127 = vpack.c.b16 %v929, %v927
    %v1128 = vpack.c.b16 %v932, %v930
    %v1129 = vpack.c.b16 %v933, %v931
    %v1130 = vpack.c.b16 %v936, %v934
    %v1131 = vpack.c.b16 %v937, %v935
    %v1132 = vpack.c.b16 %v940, %v938
    %v1133 = vpack.c.b16 %v941, %v939
    %v1134 = vpack.c.b16 %v944, %v942
    %v1135 = vpack.c.b16 %v945, %v943
    %v1136 = vpack.c.b16 %v948, %v946
    %v1137 = vpack.c.b16 %v949, %v947
    %v1138 = vpack.c.b16 %v952, %v950
    %v1139 = vpack.c.b16 %v953, %v951
    %v1140 = vpack.c.b16 %v956, %v954
    %v1141 = vpack.c.b16 %v957, %v955
    %v1142 = vpack.c.b16 %v960, %v958
    %v1143 = vpack.c.b16 %v961, %v959
    %v1144 = vpack.c.b16 %v964, %v962
    %v1145 = vpack.c.b16 %v965, %v963
    %v1146 = vpack.c.b16 %v968, %v966
    %v1147 = vpack.c.b16 %v969, %v967
    %v1148 = vpack.c.b16 %v972, %v970
    %v1149 = vpack.c.b16 %v973, %v971
    %v1150 = vpack.c.b16 %v976, %v974
    %v1151 = vpack.c.b16 %v977, %v975
    %v1152 = vpack.c.b16 %v980, %v978
    %v1153 = vpack.c.b16 %v981, %v979
    %v1154 = vpack.c.b16 %v984, %v982
    %v1155 = vpack.c.b16 %v985, %v983
    %v1156 = vpack.c.b16 %v988, %v986
    %v1157 = vpack.c.b16 %v989, %v987
    %v1158 = vpack.c.b16 %v992, %v990
    %v1159 = vpack.c.b16 %v993, %v991
    %v1160 = vpack.c.b16 %v996, %v994
    %v1161 = vpack.c.b16 %v997, %v995
    %v1162 = vpack.c.b16 %v1000, %v998
    %v1163 = vpack.c.b16 %v1001, %v999
    %v1164 = vpack.c.b16 %v1004, %v1002
    %v1165 = vpack.c.b16 %v1005, %v1003
    %v1166 = vpack.c.b16 %v1008, %v1006
    %v1167 = vpack.c.b16 %v1009, %v1007
    %v1168 = vpack.c.b16 %v1012, %v1010
    %v1169 = vpack.c.b16 %v1013, %v1011
    %v1170 = vpack.c.b16 %v1016, %v1014
    %v1171 = vpack.c.b16 %v1017, %v1015
    %v1172 = vpack.c.b16 %v1020, %v1018
    %v1173 = vpack.c.b16 %v1021, %v1019
    %v1174 = vpack.c.b16 %v1024, %v1022
    %v1175 = vpack.c.b16 %v1025, %v1023
    %v1176 = vpack.c.b16 %v1028, %v1026
    %v1177 = vpack.c.b16 %v1029, %v1027
    %v1178 = vpack.c.b16 %v1032, %v1030
    %v1179 = vpack.c.b16 %v1033, %v1031
    %v1180 = vpack.c.b16 %v1036, %v1034
    %v1181 = vpack.c.b16 %v1037, %v1035
    %v1182 = vpack.c.b16 %v1040, %v1038
    %v1183 = vpack.c.b16 %v1041, %v1039
    %v1184 = vpack.c.b16 %v1044, %v1042
    %v1185 = vpack.c.b16 %v1045, %v1043
    %v1186 = vpack.c.b16 %v1048, %v1046
    %v1187 = vpack.c.b16 %v1049, %v1047
    %v1188 = vpack.c.b16 %v1052, %v1050
    %v1189 = vpack.c.b16 %v1053, %v1051
    %v1190 = vpack.c.b16 %v1056, %v1054
    %v1191 = vpack.c.b16 %v1057, %v1055
    %v1192 = vpack.c.b16 %v1060, %v1058
    %v1193 = vpack.c.b16 %v1061, %v1059
    %v1194 = vpack.c.b16 %v1064, %v1062
    %v1195 = vpack.c.b16 %v1065, %v1063
    %v1196 = vpack.c.b16 %v1068, %v1066
    %v1197 = vpack.c.b16 %v1069, %v1067
    %1326 = vmatprep.subr.bf16.mxu0 %v1071
    %1327 = vmatpush1.bf16.msra.mxu0 %v1070
    %1328 = vmatprep.subr.bf16.mxu0 %v1073
    %1329 = vmatpush1.bf16.msra.mxu0 %v1072
    %1330 = vmatprep.subr.bf16.mxu0 %v1075
    %1331 = vmatpush1.bf16.msra.mxu0 %v1074
    %1332 = vmatprep.subr.bf16.mxu0 %v1077
    %1333 = vmatpush1.bf16.msra.mxu0 %v1076
    %1334 = vmatprep.subr.bf16.mxu0 %v1079
    %1335 = vmatpush1.bf16.msra.mxu0 %v1078
    %1336 = vmatprep.subr.bf16.mxu0 %v1081
    %1337 = vmatpush1.bf16.msra.mxu0 %v1080
    %1338 = vmatprep.subr.bf16.mxu0 %v1083
    %1339 = vmatpush1.bf16.msra.mxu0 %v1082
    %1340 = vmatprep.subr.bf16.mxu0 %v1085
    %1341 = vmatpush1.bf16.msra.mxu0 %v1084
    %1342 = vmatprep.subr.bf16.mxu0 %v1087
    %1343 = vmatpush1.bf16.msra.mxu0 %v1086
    %1344 = vmatprep.subr.bf16.mxu0 %v1089
    %1345 = vmatpush1.bf16.msra.mxu0 %v1088
    %1346 = vmatprep.subr.bf16.mxu0 %v1091
    %1347 = vmatpush1.bf16.msra.mxu0 %v1090
    %1348 = vmatprep.subr.bf16.mxu0 %v1093
    %1349 = vmatpush1.bf16.msra.mxu0 %v1092
    %1350 = vmatprep.subr.bf16.mxu0 %v1095
    %1351 = vmatpush1.bf16.msra.mxu0 %v1094
    %1352 = vmatprep.subr.bf16.mxu0 %v1097
    %1353 = vmatpush1.bf16.msra.mxu0 %v1096
    %1354 = vmatprep.subr.bf16.mxu0 %v1099
    %1355 = vmatpush1.bf16.msra.mxu0 %v1098
    %1356 = vmatprep.subr.bf16.mxu0 %v1101
    %1357 = vmatpush1.bf16.msra.mxu0 %v1100
    %1358 = vmatprep.mubr.bf16.mxu0 %v511
    %1359 = vmatmul.mubr.bf16.gmra.mrb[0].mxu0 %v510
    %v1360 = vpop.f32.mrb[0].mxu0
    %v1361 = vadd.f32 %v251, %v1360
    %v1362 = vpop.f32.mrb[0].mxu0
    %v1363 = vadd.f32 %v255, %v1362
    %v1364 = vpop.f32.mrb[0].mxu0
    %v1365 = vadd.f32 %v251, %v1364
    %v1366 = vpop.f32.mrb[0].mxu0
    %v1367 = vadd.f32 %v255, %v1366
    %1368 = vmatprep.mubr.bf16.mxu0 %v519
    %1369 = vmatmul.mubr.bf16.gmra.mrb[0].mxu0 %v518
    %v1370 = vpop.f32.mrb[0].mxu0
    %v1371 = vadd.f32 %v251, %v1370
    %v1372 = vpop.f32.mrb[0].mxu0
    %v1373 = vadd.f32 %v255, %v1372
    %v1374 = vpop.f32.mrb[0].mxu0
    %v1375 = vadd.f32 %v251, %v1374
    %v1376 = vpop.f32.mrb[0].mxu0
    %v1377 = vadd.f32 %v255, %v1376
    %1378 = vmatprep.mubr.bf16.mxu0 %v527
    %1379 = vmatmul.mubr.bf16.gmra.mrb[0].mxu0 %v526
    %v1380 = vpop.f32.mrb[0].mxu0
    %v1381 = vadd.f32 %v251, %v1380
    %v1382 = vpop.f32.mrb[0].mxu0
    %v1383 = vadd.f32 %v255, %v1382
    %v1384 = vpop.f32.mrb[0].mxu0
    %v1385 = vadd.f32 %v251, %v1384
    %v1386 = vpop.f32.mrb[0].mxu0
    %v1387 = vadd.f32 %v255, %v1386
    %1388 = vmatprep.mubr.bf16.mxu0 %v535
    %1389 = vmatmul.mubr.bf16.gmra.mrb[0].mxu0 %v534
    %v1390 = vpop.f32.mrb[0].mxu0
    %v1391 = vadd.f32 %v251, %v1390
    %v1392 = vpop.f32.mrb[0].mxu0
    %v1393 = vadd.f32 %v255, %v1392
    %v1394 = vpop.f32.mrb[0].mxu0
    %v1395 = vadd.f32 %v251, %v1394
    %v1396 = vpop.f32.mrb[0].mxu0
    %v1397 = vadd.f32 %v255, %v1396
    %1398 = vmatprep.mubr.bf16.mxu0 %v543
    %1399 = vmatmul.mubr.bf16.gmra.mrb[0].mxu0 %v542
    %v1400 = vpop.f32.mrb[0].mxu0
    %v1401 = vadd.f32 %v251, %v1400
    %v1402 = vpop.f32.mrb[0].mxu0
    %v1403 = vadd.f32 %v255, %v1402
    %v1404 = vpop.f32.mrb[0].mxu0
    %v1405 = vadd.f32 %v251, %v1404
    %v1406 = vpop.f32.mrb[0].mxu0
    %v1407 = vadd.f32 %v255, %v1406
    %1408 = vmatprep.mubr.bf16.mxu0 %v551
    %1409 = vmatmul.mubr.bf16.gmra.mrb[0].mxu0 %v550
    %v1410 = vpop.f32.mrb[0].mxu0
    %v1411 = vadd.f32 %v251, %v1410
    %v1412 = vpop.f32.mrb[0].mxu0
    %v1413 = vadd.f32 %v255, %v1412
    %v1414 = vpop.f32.mrb[0].mxu0
    %v1415 = vadd.f32 %v251, %v1414
    %v1416 = vpop.f32.mrb[0].mxu0
    %v1417 = vadd.f32 %v255, %v1416
    %1418 = vmatprep.mubr.bf16.mxu0 %v559
    %1419 = vmatmul.mubr.bf16.gmra.mrb[0].mxu0 %v558
    %v1420 = vpop.f32.mrb[0].mxu0
    %v1421 = vadd.f32 %v251, %v1420
    %v1422 = vpop.f32.mrb[0].mxu0
    %v1423 = vadd.f32 %v255, %v1422
    %v1424 = vpop.f32.mrb[0].mxu0
    %v1425 = vadd.f32 %v251, %v1424
    %v1426 = vpop.f32.mrb[0].mxu0
    %v1427 = vadd.f32 %v255, %v1426
    %1428 = vmatprep.mubr.bf16.mxu0 %v567
    %1429 = vmatmul.mubr.bf16.gmra.mrb[0].mxu0 %v566
    %v1430 = vpop.f32.mrb[0].mxu0
    %v1431 = vadd.f32 %v251, %v1430
    %v1432 = vpop.f32.mrb[0].mxu0
    %v1433 = vadd.f32 %v255, %v1432
    %v1434 = vpop.f32.mrb[0].mxu0
    %v1435 = vadd.f32 %v251, %v1434
    %v1436 = vpop.f32.mrb[0].mxu0
    %v1437 = vadd.f32 %v255, %v1436
    %1438 = vmatprep.mubr.bf16.mxu0 %v575
    %1439 = vmatmul.mubr.bf16.gmra.mrb[0].mxu0 %v574
    %v1440 = vpop.f32.mrb[0].mxu0
    %v1441 = vadd.f32 %v251, %v1440
    %v1442 = vpop.f32.mrb[0].mxu0
    %v1443 = vadd.f32 %v255, %v1442
    %v1444 = vpop.f32.mrb[0].mxu0
    %v1445 = vadd.f32 %v251, %v1444
    %v1446 = vpop.f32.mrb[0].mxu0
    %v1447 = vadd.f32 %v255, %v1446
    %1448 = vmatprep.mubr.bf16.mxu0 %v583
    %1449 = vmatmul.mubr.bf16.gmra.mrb[0].mxu0 %v582
    %v1450 = vpop.f32.mrb[0].mxu0
    %v1451 = vadd.f32 %v251, %v1450
    %v1452 = vpop.f32.mrb[0].mxu0
    %v1453 = vadd.f32 %v255, %v1452
    %v1454 = vpop.f32.mrb[0].mxu0
    %v1455 = vadd.f32 %v251, %v1454
    %v1456 = vpop.f32.mrb[0].mxu0
    %v1457 = vadd.f32 %v255, %v1456
    %1458 = vmatprep.mubr.bf16.mxu0 %v591
    %1459 = vmatmul.mubr.bf16.gmra.mrb[0].mxu0 %v590
    %v1460 = vpop.f32.mrb[0].mxu0
    %v1461 = vadd.f32 %v251, %v1460
    %v1462 = vpop.f32.mrb[0].mxu0
    %v1463 = vadd.f32 %v255, %v1462
    %v1464 = vpop.f32.mrb[0].mxu0
    %v1465 = vpop.f32.mrb[0].mxu0
    %1466 = vdwg.mxu0
    %1467 = vmatprep.subr.bf16.mxu0 %v1103
    %1468 = vmatpush1.bf16.msra.mxu0 %v1102
    %1469 = vmatprep.subr.bf16.mxu0 %v1105
    %1470 = vmatpush1.bf16.msra.mxu0 %v1104
    %1471 = vmatprep.subr.bf16.mxu0 %v1107
    %1472 = vmatpush1.bf16.msra.mxu0 %v1106
    %1473 = vmatprep.subr.bf16.mxu0 %v1109
    %1474 = vmatpush1.bf16.msra.mxu0 %v1108
    %1475 = vmatprep.subr.bf16.mxu0 %v1111
    %1476 = vmatpush1.bf16.msra.mxu0 %v1110
    %1477 = vmatprep.subr.bf16.mxu0 %v1113
    %1478 = vmatpush1.bf16.msra.mxu0 %v1112
    %1479 = vmatprep.subr.bf16.mxu0 %v1115
    %1480 = vmatpush1.bf16.msra.mxu0 %v1114
    %1481 = vmatprep.subr.bf16.mxu0 %v1117
    %1482 = vmatpush1.bf16.msra.mxu0 %v1116
    %1483 = vmatprep.subr.bf16.mxu0 %v1119
    %1484 = vmatpush1.bf16.msra.mxu0 %v1118
    %1485 = vmatprep.subr.bf16.mxu0 %v1121
    %1486 = vmatpush1.bf16.msra.mxu0 %v1120
    %1487 = vmatprep.subr.bf16.mxu0 %v1123
    %1488 = vmatpush1.bf16.msra.mxu0 %v1122
    %1489 = vmatprep.subr.bf16.mxu0 %v1125
    %1490 = vmatpush1.bf16.msra.mxu0 %v1124
    %1491 = vmatprep.subr.bf16.mxu0 %v1127
    %1492 = vmatpush1.bf16.msra.mxu0 %v1126
    %1493 = vmatprep.subr.bf16.mxu0 %v1129
    %1494 = vmatpush1.bf16.msra.mxu0 %v1128
    %1495 = vmatprep.subr.bf16.mxu0 %v1131
    %1496 = vmatpush1.bf16.msra.mxu0 %v1130
    %1497 = vmatprep.subr.bf16.mxu0 %v1133
    %1498 = vmatpush1.bf16.msra.mxu0 %v1132
    %1499 = vmatprep.mubr.bf16.mxu0 %v513
    %1500 = vmatmul.mubr.bf16.gmra.mrb[0].mxu0 %v512
    %v1501 = vpop.f32.mrb[0].mxu0
    %v1502 = vadd.f32 %v1361, %v1501
    %v1503 = vpop.f32.mrb[0].mxu0
    %v1504 = vadd.f32 %v1363, %v1503
    %v1505 = vpop.f32.mrb[0].mxu0
    %v1506 = vadd.f32 %v1365, %v1505
    %v1507 = vpop.f32.mrb[0].mxu0
    %v1508 = vadd.f32 %v1367, %v1507
    %1509 = vmatprep.mubr.bf16.mxu0 %v521
    %1510 = vmatmul.mubr.bf16.gmra.mrb[0].mxu0 %v520
    %v1511 = vpop.f32.mrb[0].mxu0
    %v1512 = vadd.f32 %v1371, %v1511
    %v1513 = vpop.f32.mrb[0].mxu0
    %v1514 = vadd.f32 %v1373, %v1513
    %v1515 = vpop.f32.mrb[0].mxu0
    %v1516 = vadd.f32 %v1375, %v1515
    %v1517 = vpop.f32.mrb[0].mxu0
    %v1518 = vadd.f32 %v1377, %v1517
    %1519 = vmatprep.mubr.bf16.mxu0 %v529
    %1520 = vmatmul.mubr.bf16.gmra.mrb[0].mxu0 %v528
    %v1521 = vpop.f32.mrb[0].mxu0
    %v1522 = vadd.f32 %v1381, %v1521
    %v1523 = vpop.f32.mrb[0].mxu0
    %v1524 = vadd.f32 %v1383, %v1523
    %v1525 = vpop.f32.mrb[0].mxu0
    %v1526 = vadd.f32 %v1385, %v1525
    %v1527 = vpop.f32.mrb[0].mxu0
    %v1528 = vadd.f32 %v1387, %v1527
    %1529 = vmatprep.mubr.bf16.mxu0 %v537
    %1530 = vmatmul.mubr.bf16.gmra.mrb[0].mxu0 %v536
    %v1531 = vpop.f32.mrb[0].mxu0
    %v1532 = vadd.f32 %v1391, %v1531
    %v1533 = vpop.f32.mrb[0].mxu0
    %v1534 = vadd.f32 %v1393, %v1533
    %v1535 = vpop.f32.mrb[0].mxu0
    %v1536 = vadd.f32 %v1395, %v1535
    %v1537 = vpop.f32.mrb[0].mxu0
    %v1538 = vadd.f32 %v1397, %v1537
    %1539 = vmatprep.mubr.bf16.mxu0 %v545
    %1540 = vmatmul.mubr.bf16.gmra.mrb[0].mxu0 %v544
    %v1541 = vpop.f32.mrb[0].mxu0
    %v1542 = vadd.f32 %v1401, %v1541
    %v1543 = vpop.f32.mrb[0].mxu0
    %v1544 = vadd.f32 %v1403, %v1543
    %v1545 = vpop.f32.mrb[0].mxu0
    %v1546 = vadd.f32 %v1405, %v1545
    %v1547 = vpop.f32.mrb[0].mxu0
    %v1548 = vadd.f32 %v1407, %v1547
    %1549 = vmatprep.mubr.bf16.mxu0 %v553
    %1550 = vmatmul.mubr.bf16.gmra.mrb[0].mxu0 %v552
    %v1551 = vpop.f32.mrb[0].mxu0
    %v1552 = vadd.f32 %v1411, %v1551
    %v1553 = vpop.f32.mrb[0].mxu0
    %v1554 = vadd.f32 %v1413, %v1553
    %v1555 = vpop.f32.mrb[0].mxu0
    %v1556 = vadd.f32 %v1415, %v1555
    %v1557 = vpop.f32.mrb[0].mxu0
    %v1558 = vadd.f32 %v1417, %v1557
    %1559 = vmatprep.mubr.bf16.mxu0 %v561
    %1560 = vmatmul.mubr.bf16.gmra.mrb[0].mxu0 %v560
    %v1561 = vpop.f32.mrb[0].mxu0
    %v1562 = vadd.f32 %v1421, %v1561
    %v1563 = vpop.f32.mrb[0].mxu0
    %v1564 = vadd.f32 %v1423, %v1563
    %v1565 = vpop.f32.mrb[0].mxu0
    %v1566 = vadd.f32 %v1425, %v1565
    %v1567 = vpop.f32.mrb[0].mxu0
    %v1568 = vadd.f32 %v1427, %v1567
    %1569 = vmatprep.mubr.bf16.mxu0 %v569
    %1570 = vmatmul.mubr.bf16.gmra.mrb[0].mxu0 %v568
    %v1571 = vpop.f32.mrb[0].mxu0
    %v1572 = vadd.f32 %v1431, %v1571
    %v1573 = vpop.f32.mrb[0].mxu0
    %v1574 = vadd.f32 %v1433, %v1573
    %v1575 = vpop.f32.mrb[0].mxu0
    %v1576 = vadd.f32 %v1435, %v1575
    %v1577 = vpop.f32.mrb[0].mxu0
    %v1578 = vadd.f32 %v1437, %v1577
    %1579 = vmatprep.mubr.bf16.mxu0 %v577
    %1580 = vmatmul.mubr.bf16.gmra.mrb[0].mxu0 %v576
    %v1581 = vpop.f32.mrb[0].mxu0
    %v1582 = vadd.f32 %v1441, %v1581
    %v1583 = vpop.f32.mrb[0].mxu0
    %v1584 = vadd.f32 %v1443, %v1583
    %v1585 = vpop.f32.mrb[0].mxu0
    %v1586 = vadd.f32 %v1445, %v1585
    %v1587 = vpop.f32.mrb[0].mxu0
    %v1588 = vadd.f32 %v1447, %v1587
    %1589 = vmatprep.mubr.bf16.mxu0 %v585
    %1590 = vmatmul.mubr.bf16.gmra.mrb[0].mxu0 %v584
    %v1591 = vpop.f32.mrb[0].mxu0
    %v1592 = vadd.f32 %v1451, %v1591
    %v1593 = vpop.f32.mrb[0].mxu0
    %v1594 = vadd.f32 %v1453, %v1593
    %v1595 = vpop.f32.mrb[0].mxu0
    %v1596 = vadd.f32 %v1455, %v1595
    %v1597 = vpop.f32.mrb[0].mxu0
    %v1598 = vadd.f32 %v1457, %v1597
    %1599 = vmatprep.mubr.bf16.mxu0 %v593
    %1600 = vmatmul.mubr.bf16.gmra.mrb[0].mxu0 %v592
    %v1601 = vpop.f32.mrb[0].mxu0
    %v1602 = vadd.f32 %v1461, %v1601
    %v1603 = vpop.f32.mrb[0].mxu0
    %v1604 = vadd.f32 %v1463, %v1603
    %v1605 = vpop.f32.mrb[0].mxu0
    %v1606 = vpop.f32.mrb[0].mxu0
    %1607 = vdwg.mxu0
    %1608 = vmatprep.subr.bf16.mxu0 %v1135
    %1609 = vmatpush1.bf16.msra.mxu0 %v1134
    %1610 = vmatprep.subr.bf16.mxu0 %v1137
    %1611 = vmatpush1.bf16.msra.mxu0 %v1136
    %1612 = vmatprep.subr.bf16.mxu0 %v1139
    %1613 = vmatpush1.bf16.msra.mxu0 %v1138
    %1614 = vmatprep.subr.bf16.mxu0 %v1141
    %1615 = vmatpush1.bf16.msra.mxu0 %v1140
    %1616 = vmatprep.subr.bf16.mxu0 %v1143
    %1617 = vmatpush1.bf16.msra.mxu0 %v1142
    %1618 = vmatprep.subr.bf16.mxu0 %v1145
    %1619 = vmatpush1.bf16.msra.mxu0 %v1144
    %1620 = vmatprep.subr.bf16.mxu0 %v1147
    %1621 = vmatpush1.bf16.msra.mxu0 %v1146
    %1622 = vmatprep.subr.bf16.mxu0 %v1149
    %1623 = vmatpush1.bf16.msra.mxu0 %v1148
    %1624 = vmatprep.subr.bf16.mxu0 %v1151
    %1625 = vmatpush1.bf16.msra.mxu0 %v1150
    %1626 = vmatprep.subr.bf16.mxu0 %v1153
    %1627 = vmatpush1.bf16.msra.mxu0 %v1152
    %1628 = vmatprep.subr.bf16.mxu0 %v1155
    %1629 = vmatpush1.bf16.msra.mxu0 %v1154
    %1630 = vmatprep.subr.bf16.mxu0 %v1157
    %1631 = vmatpush1.bf16.msra.mxu0 %v1156
    %1632 = vmatprep.subr.bf16.mxu0 %v1159
    %1633 = vmatpush1.bf16.msra.mxu0 %v1158
    %1634 = vmatprep.subr.bf16.mxu0 %v1161
    %1635 = vmatpush1.bf16.msra.mxu0 %v1160
    %1636 = vmatprep.subr.bf16.mxu0 %v1163
    %1637 = vmatpush1.bf16.msra.mxu0 %v1162
    %1638 = vmatprep.subr.bf16.mxu0 %v1165
    %1639 = vmatpush1.bf16.msra.mxu0 %v1164
    %1640 = vmatprep.mubr.bf16.mxu0 %v515
    %1641 = vmatmul.mubr.bf16.gmra.mrb[0].mxu0 %v514
    %v1642 = vpop.f32.mrb[0].mxu0
    %v1643 = vadd.f32 %v1502, %v1642
    %v1644 = vpop.f32.mrb[0].mxu0
    %v1645 = vadd.f32 %v1504, %v1644
    %v1646 = vpop.f32.mrb[0].mxu0
    %v1647 = vadd.f32 %v1506, %v1646
    %v1648 = vpop.f32.mrb[0].mxu0
    %v1649 = vadd.f32 %v1508, %v1648
    %1650 = vmatprep.mubr.bf16.mxu0 %v523
    %1651 = vmatmul.mubr.bf16.gmra.mrb[0].mxu0 %v522
    %v1652 = vpop.f32.mrb[0].mxu0
    %v1653 = vadd.f32 %v1512, %v1652
    %v1654 = vpop.f32.mrb[0].mxu0
    %v1655 = vadd.f32 %v1514, %v1654
    %v1656 = vpop.f32.mrb[0].mxu0
    %v1657 = vadd.f32 %v1516, %v1656
    %v1658 = vpop.f32.mrb[0].mxu0
    %v1659 = vadd.f32 %v1518, %v1658
    %1660 = vmatprep.mubr.bf16.mxu0 %v531
    %1661 = vmatmul.mubr.bf16.gmra.mrb[0].mxu0 %v530
    %v1662 = vpop.f32.mrb[0].mxu0
    %v1663 = vadd.f32 %v1522, %v1662
    %v1664 = vpop.f32.mrb[0].mxu0
    %v1665 = vadd.f32 %v1524, %v1664
    %v1666 = vpop.f32.mrb[0].mxu0
    %v1667 = vadd.f32 %v1526, %v1666
    %v1668 = vpop.f32.mrb[0].mxu0
    %v1669 = vadd.f32 %v1528, %v1668
    %1670 = vmatprep.mubr.bf16.mxu0 %v539
    %1671 = vmatmul.mubr.bf16.gmra.mrb[0].mxu0 %v538
    %v1672 = vpop.f32.mrb[0].mxu0
    %v1673 = vadd.f32 %v1532, %v1672
    %v1674 = vpop.f32.mrb[0].mxu0
    %v1675 = vadd.f32 %v1534, %v1674
    %v1676 = vpop.f32.mrb[0].mxu0
    %v1677 = vadd.f32 %v1536, %v1676
    %v1678 = vpop.f32.mrb[0].mxu0
    %v1679 = vadd.f32 %v1538, %v1678
    %1680 = vmatprep.mubr.bf16.mxu0 %v547
    %1681 = vmatmul.mubr.bf16.gmra.mrb[0].mxu0 %v546
    %v1682 = vpop.f32.mrb[0].mxu0
    %v1683 = vadd.f32 %v1542, %v1682
    %v1684 = vpop.f32.mrb[0].mxu0
    %v1685 = vadd.f32 %v1544, %v1684
    %v1686 = vpop.f32.mrb[0].mxu0
    %v1687 = vadd.f32 %v1546, %v1686
    %v1688 = vpop.f32.mrb[0].mxu0
    %v1689 = vadd.f32 %v1548, %v1688
    %1690 = vmatprep.mubr.bf16.mxu0 %v555
    %1691 = vmatmul.mubr.bf16.gmra.mrb[0].mxu0 %v554
    %v1692 = vpop.f32.mrb[0].mxu0
    %v1693 = vadd.f32 %v1552, %v1692
    %v1694 = vpop.f32.mrb[0].mxu0
    %v1695 = vadd.f32 %v1554, %v1694
    %v1696 = vpop.f32.mrb[0].mxu0
    %v1697 = vadd.f32 %v1556, %v1696
    %v1698 = vpop.f32.mrb[0].mxu0
    %v1699 = vadd.f32 %v1558, %v1698
    %1700 = vmatprep.mubr.bf16.mxu0 %v563
    %1701 = vmatmul.mubr.bf16.gmra.mrb[0].mxu0 %v562
    %v1702 = vpop.f32.mrb[0].mxu0
    %v1703 = vadd.f32 %v1562, %v1702
    %v1704 = vpop.f32.mrb[0].mxu0
    %v1705 = vadd.f32 %v1564, %v1704
    %v1706 = vpop.f32.mrb[0].mxu0
    %v1707 = vadd.f32 %v1566, %v1706
    %v1708 = vpop.f32.mrb[0].mxu0
    %v1709 = vadd.f32 %v1568, %v1708
    %1710 = vmatprep.mubr.bf16.mxu0 %v571
    %1711 = vmatmul.mubr.bf16.gmra.mrb[0].mxu0 %v570
    %v1712 = vpop.f32.mrb[0].mxu0
    %v1713 = vadd.f32 %v1572, %v1712
    %v1714 = vpop.f32.mrb[0].mxu0
    %v1715 = vadd.f32 %v1574, %v1714
    %v1716 = vpop.f32.mrb[0].mxu0
    %v1717 = vadd.f32 %v1576, %v1716
    %v1718 = vpop.f32.mrb[0].mxu0
    %v1719 = vadd.f32 %v1578, %v1718
    %1720 = vmatprep.mubr.bf16.mxu0 %v579
    %1721 = vmatmul.mubr.bf16.gmra.mrb[0].mxu0 %v578
    %v1722 = vpop.f32.mrb[0].mxu0
    %v1723 = vadd.f32 %v1582, %v1722
    %v1724 = vpop.f32.mrb[0].mxu0
    %v1725 = vadd.f32 %v1584, %v1724
    %v1726 = vpop.f32.mrb[0].mxu0
    %v1727 = vadd.f32 %v1586, %v1726
    %v1728 = vpop.f32.mrb[0].mxu0
    %v1729 = vadd.f32 %v1588, %v1728
    %1730 = vmatprep.mubr.bf16.mxu0 %v587
    %1731 = vmatmul.mubr.bf16.gmra.mrb[0].mxu0 %v586
    %v1732 = vpop.f32.mrb[0].mxu0
    %v1733 = vadd.f32 %v1592, %v1732
    %v1734 = vpop.f32.mrb[0].mxu0
    %v1735 = vadd.f32 %v1594, %v1734
    %v1736 = vpop.f32.mrb[0].mxu0
    %v1737 = vadd.f32 %v1596, %v1736
    %v1738 = vpop.f32.mrb[0].mxu0
    %v1739 = vadd.f32 %v1598, %v1738
    %1740 = vmatprep.mubr.bf16.mxu0 %v595
    %1741 = vmatmul.mubr.bf16.gmra.mrb[0].mxu0 %v594
    %v1742 = vpop.f32.mrb[0].mxu0
    %v1743 = vadd.f32 %v1602, %v1742
    %v1744 = vpop.f32.mrb[0].mxu0
    %v1745 = vadd.f32 %v1604, %v1744
    %v1746 = vpop.f32.mrb[0].mxu0
    %v1747 = vpop.f32.mrb[0].mxu0
    %1748 = vdwg.mxu0
    %1749 = vmatprep.subr.bf16.mxu0 %v1167
    %1750 = vmatpush1.bf16.msra.mxu0 %v1166
    %1751 = vmatprep.subr.bf16.mxu0 %v1169
    %1752 = vmatpush1.bf16.msra.mxu0 %v1168
    %1753 = vmatprep.subr.bf16.mxu0 %v1171
    %1754 = vmatpush1.bf16.msra.mxu0 %v1170
    %1755 = vmatprep.subr.bf16.mxu0 %v1173
    %1756 = vmatpush1.bf16.msra.mxu0 %v1172
    %1757 = vmatprep.subr.bf16.mxu0 %v1175
    %1758 = vmatpush1.bf16.msra.mxu0 %v1174
    %1759 = vmatprep.subr.bf16.mxu0 %v1177
    %1760 = vmatpush1.bf16.msra.mxu0 %v1176
    %1761 = vmatprep.subr.bf16.mxu0 %v1179
    %1762 = vmatpush1.bf16.msra.mxu0 %v1178
    %1763 = vmatprep.subr.bf16.mxu0 %v1181
    %1764 = vmatpush1.bf16.msra.mxu0 %v1180
    %1765 = vmatprep.subr.bf16.mxu0 %v1183
    %1766 = vmatpush1.bf16.msra.mxu0 %v1182
    %1767 = vmatprep.subr.bf16.mxu0 %v1185
    %1768 = vmatpush1.bf16.msra.mxu0 %v1184
    %1769 = vmatprep.subr.bf16.mxu0 %v1187
    %1770 = vmatpush1.bf16.msra.mxu0 %v1186
    %1771 = vmatprep.subr.bf16.mxu0 %v1189
    %1772 = vmatpush1.bf16.msra.mxu0 %v1188
    %1773 = vmatprep.subr.bf16.mxu0 %v1191
    %1774 = vmatpush1.bf16.msra.mxu0 %v1190
    %1775 = vmatprep.subr.bf16.mxu0 %v1193
    %1776 = vmatpush1.bf16.msra.mxu0 %v1192
    %1777 = vmatprep.subr.bf16.mxu0 %v1195
    %1778 = vmatpush1.bf16.msra.mxu0 %v1194
    %1779 = vmatprep.subr.bf16.mxu0 %v1197
    %1780 = vmatpush1.bf16.msra.mxu0 %v1196
    %1781 = vmatprep.mubr.bf16.mxu0 %v517
    %1782 = vmatmul.mubr.bf16.gmra.mrb[0].mxu0 %v516
    %v1783 = vpop.f32.mrb[0].mxu0
    %v1784 = vadd.f32 %v1643, %v1783
    %v1785 = vpop.f32.mrb[0].mxu0
    %v1786 = vadd.f32 %v1645, %v1785
    %v1787 = vpop.f32.mrb[0].mxu0
    %v1788 = vadd.f32 %v1647, %v1787
    %v1789 = vpop.f32.mrb[0].mxu0
    %v1790 = vadd.f32 %v1649, %v1789
    %1791 = vmatprep.mubr.bf16.mxu0 %v525
    %1792 = vmatmul.mubr.bf16.gmra.mrb[0].mxu0 %v524
    %v1793 = vpop.f32.mrb[0].mxu0
    %v1794 = vadd.f32 %v1653, %v1793
    %v1795 = vpop.f32.mrb[0].mxu0
    %v1796 = vadd.f32 %v1655, %v1795
    %v1797 = vpop.f32.mrb[0].mxu0
    %v1798 = vadd.f32 %v1657, %v1797
    %v1799 = vpop.f32.mrb[0].mxu0
    %v1800 = vadd.f32 %v1659, %v1799
    %1801 = vmatprep.mubr.bf16.mxu0 %v533
    %1802 = vmatmul.mubr.bf16.gmra.mrb[0].mxu0 %v532
    %v1803 = vpop.f32.mrb[0].mxu0
    %v1804 = vadd.f32 %v1663, %v1803
    %v1805 = vpop.f32.mrb[0].mxu0
    %v1806 = vadd.f32 %v1665, %v1805
    %v1807 = vpop.f32.mrb[0].mxu0
    %v1808 = vadd.f32 %v1667, %v1807
    %v1809 = vpop.f32.mrb[0].mxu0
    %v1810 = vadd.f32 %v1669, %v1809
    %1811 = vmatprep.mubr.bf16.mxu0 %v541
    %1812 = vmatmul.mubr.bf16.gmra.mrb[0].mxu0 %v540
    %v1813 = vpop.f32.mrb[0].mxu0
    %v1814 = vadd.f32 %v1673, %v1813
    %v1815 = vpop.f32.mrb[0].mxu0
    %v1816 = vadd.f32 %v1675, %v1815
    %v1817 = vpop.f32.mrb[0].mxu0
    %v1818 = vadd.f32 %v1677, %v1817
    %v1819 = vpop.f32.mrb[0].mxu0
    %v1820 = vadd.f32 %v1679, %v1819
    %1821 = vmatprep.mubr.bf16.mxu0 %v549
    %1822 = vmatmul.mubr.bf16.gmra.mrb[0].mxu0 %v548
    %v1823 = vpop.f32.mrb[0].mxu0
    %v1824 = vadd.f32 %v1683, %v1823
    %v1825 = vpop.f32.mrb[0].mxu0
    %v1826 = vadd.f32 %v1685, %v1825
    %v1827 = vpop.f32.mrb[0].mxu0
    %v1828 = vadd.f32 %v1687, %v1827
    %v1829 = vpop.f32.mrb[0].mxu0
    %v1830 = vadd.f32 %v1689, %v1829
    %1831 = vmatprep.mubr.bf16.mxu0 %v557
    %1832 = vmatmul.mubr.bf16.gmra.mrb[0].mxu0 %v556
    %v1833 = vpop.f32.mrb[0].mxu0
    %v1834 = vadd.f32 %v1693, %v1833
    %v1835 = vpop.f32.mrb[0].mxu0
    %v1836 = vadd.f32 %v1695, %v1835
    %v1837 = vpop.f32.mrb[0].mxu0
    %v1838 = vadd.f32 %v1697, %v1837
    %v1839 = vpop.f32.mrb[0].mxu0
    %v1840 = vadd.f32 %v1699, %v1839
    %1841 = vmatprep.mubr.bf16.mxu0 %v565
    %1842 = vmatmul.mubr.bf16.gmra.mrb[0].mxu0 %v564
    %v1843 = vpop.f32.mrb[0].mxu0
    %v1844 = vadd.f32 %v1703, %v1843
    %v1845 = vpop.f32.mrb[0].mxu0
    %v1846 = vadd.f32 %v1705, %v1845
    %v1847 = vpop.f32.mrb[0].mxu0
    %v1848 = vadd.f32 %v1707, %v1847
    %v1849 = vpop.f32.mrb[0].mxu0
    %v1850 = vadd.f32 %v1709, %v1849
    %1851 = vmatprep.mubr.bf16.mxu0 %v573
    %1852 = vmatmul.mubr.bf16.gmra.mrb[0].mxu0 %v572
    %v1853 = vpop.f32.mrb[0].mxu0
    %v1854 = vadd.f32 %v1713, %v1853
    %v1855 = vpop.f32.mrb[0].mxu0
    %v1856 = vadd.f32 %v1715, %v1855
    %v1857 = vpop.f32.mrb[0].mxu0
    %v1858 = vadd.f32 %v1717, %v1857
    %v1859 = vpop.f32.mrb[0].mxu0
    %v1860 = vadd.f32 %v1719, %v1859
    %1861 = vmatprep.mubr.bf16.mxu0 %v581
    %1862 = vmatmul.mubr.bf16.gmra.mrb[0].mxu0 %v580
    %v1863 = vpop.f32.mrb[0].mxu0
    %v1864 = vadd.f32 %v1723, %v1863
    %v1865 = vpop.f32.mrb[0].mxu0
    %v1866 = vadd.f32 %v1725, %v1865
    %v1867 = vpop.f32.mrb[0].mxu0
    %v1868 = vadd.f32 %v1727, %v1867
    %v1869 = vpop.f32.mrb[0].mxu0
    %v1870 = vadd.f32 %v1729, %v1869
    %1871 = vmatprep.mubr.bf16.mxu0 %v589
    %1872 = vmatmul.mubr.bf16.gmra.mrb[0].mxu0 %v588
    %v1873 = vpop.f32.mrb[0].mxu0
    %v1874 = vadd.f32 %v1733, %v1873
    %v1875 = vpop.f32.mrb[0].mxu0
    %v1876 = vadd.f32 %v1735, %v1875
    %v1877 = vpop.f32.mrb[0].mxu0
    %v1878 = vadd.f32 %v1737, %v1877
    %v1879 = vpop.f32.mrb[0].mxu0
    %v1880 = vadd.f32 %v1739, %v1879
    %1881 = vmatprep.mubr.bf16.mxu0 %v597
    %1882 = vmatmul.mubr.bf16.gmra.mrb[0].mxu0 %v596
    %v1883 = vpop.f32.mrb[0].mxu0
    %v1884 = vadd.f32 %v1743, %v1883
    %v1885 = vpop.f32.mrb[0].mxu0
    %v1886 = vadd.f32 %v1745, %v1885
    %v1887 = vpop.f32.mrb[0].mxu0
    %v1888 = vpop.f32.mrb[0].mxu0
    %1889 = vdwg.mxu0
    %v1890 = vmax.f32 %v1784, 0.0
    %v1891 = vmax.f32 %v1786, 0.0
    %v1892 = vmax.f32 %v1788, 0.0
    %v1893 = vmax.f32 %v1790, 0.0
    %v1894 = vmax.f32 %v1794, 0.0
    %v1895 = vmax.f32 %v1796, 0.0
    %v1896 = vmax.f32 %v1798, 0.0
    %v1897 = vmax.f32 %v1800, 0.0
    %v1898 = vmax.f32 %v1804, 0.0
    %v1899 = vmax.f32 %v1806, 0.0
    %v1900 = vmax.f32 %v1808, 0.0
    %v1901 = vmax.f32 %v1810, 0.0
    %v1902 = vmax.f32 %v1814, 0.0
    %v1903 = vmax.f32 %v1816, 0.0
    %v1904 = vmax.f32 %v1818, 0.0
    %v1905 = vmax.f32 %v1820, 0.0
    %v1906 = vmax.f32 %v1824, 0.0
    %v1907 = vmax.f32 %v1826, 0.0
    %v1908 = vmax.f32 %v1828, 0.0
    %v1909 = vmax.f32 %v1830, 0.0
    %v1910 = vmax.f32 %v1834, 0.0
    %v1911 = vmax.f32 %v1836, 0.0
    %v1912 = vmax.f32 %v1838, 0.0
    %v1913 = vmax.f32 %v1840, 0.0
    %v1914 = vmax.f32 %v1844, 0.0
    %v1915 = vmax.f32 %v1846, 0.0
    %v1916 = vmax.f32 %v1848, 0.0
    %v1917 = vmax.f32 %v1850, 0.0
    %v1918 = vmax.f32 %v1854, 0.0
    %v1919 = vmax.f32 %v1856, 0.0
    %v1920 = vmax.f32 %v1858, 0.0
    %v1921 = vmax.f32 %v1860, 0.0
    %v1922 = vmax.f32 %v1864, 0.0
    %v1923 = vmax.f32 %v1866, 0.0
    %v1924 = vmax.f32 %v1868, 0.0
    %v1925 = vmax.f32 %v1870, 0.0
    %v1926 = vmax.f32 %v1874, 0.0
    %v1927 = vmax.f32 %v1876, 0.0
    %v1928 = vmax.f32 %v1878, 0.0
    %v1929 = vmax.f32 %v1880, 0.0
    %v1930 = vmax.f32 %v1884, 0.0
    %v1931 = vmax.f32 %v1886, 0.0
    %v1932 = vpack.c.bf16 %v1892, %v1890
    %v1933 = vpack.c.bf16 %v1893, %v1891
    %v1934 = vpack.c.bf16 %v1896, %v1894
    %v1935 = vpack.c.bf16 %v1897, %v1895
    %v1936 = vpack.c.bf16 %v1900, %v1898
    %v1937 = vpack.c.bf16 %v1901, %v1899
    %v1938 = vpack.c.bf16 %v1904, %v1902
    %v1939 = vpack.c.bf16 %v1905, %v1903
    %v1940 = vpack.c.bf16 %v1908, %v1906
    %v1941 = vpack.c.bf16 %v1909, %v1907
    %v1942 = vpack.c.bf16 %v1912, %v1910
    %v1943 = vpack.c.bf16 %v1913, %v1911
    %v1944 = vpack.c.bf16 %v1916, %v1914
    %v1945 = vpack.c.bf16 %v1917, %v1915
    %v1946 = vpack.c.bf16 %v1920, %v1918
    %v1947 = vpack.c.bf16 %v1921, %v1919
    %v1948 = vpack.c.bf16 %v1924, %v1922
    %v1949 = vpack.c.bf16 %v1925, %v1923
    %v1950 = vpack.c.bf16 %v1928, %v1926
    %v1951 = vpack.c.bf16 %v1929, %v1927
    %v1952 = vpack.c.bf16 %v1930, %v1930
    %v1953 = vpack.c.bf16 %v1931, %v1931
    %v1954 = vld [vmem:[%s3] sm:$0xf]
    %v1955 = vld [vmem:[%s3 + $0x4] sm:$0xf]
    %v1956 = vld [vmem:[%s3 + $0x8] sm:$0xf]
    %v1957 = vld [vmem:[%s3 + $0xc] sm:$0xf]
    %v1958 = vld [vmem:[%s3 + $0x10] sm:$0xf]
    %v1959 = vld [vmem:[%s3 + $0x14] sm:$0xf]
    %v1960 = vld [vmem:[%s3 + $0x18] sm:$0xf]
    %v1961 = vld [vmem:[%s3 + $0x1c] sm:$0xf]
    %v1962 = vld [vmem:[%s3 + $0x20] sm:$0xf]
    %v1963 = vld [vmem:[%s3 + $0x24] sm:$0xf]
    %v1964 = vld [vmem:[%s3 + $0x28] sm:$0xf]
    %v1965 = vld [vmem:[%s3 + $0x2c] sm:$0xf]
    %v1966 = vld [vmem:[%s3 + $0x30] sm:$0xf]
    %v1967 = vld [vmem:[%s3 + $0x34] sm:$0xf]
    %v1968 = vld [vmem:[%s3 + $0x38] sm:$0xf]
    %v1969 = vld [vmem:[%s3 + $0x3c] sm:$0xf]
    %v1970 = vld [vmem:[%s3 + $0x40] sm:$0xf]
    %v1971 = vld [vmem:[%s3 + $0x44] sm:$0xf]
    %v1972 = vld [vmem:[%s3 + $0x48] sm:$0xf]
    %v1973 = vld [vmem:[%s3 + $0x4c] sm:$0xf]
    %v1974 = vld [vmem:[%s3 + $0x50] sm:$0xf]
    %v1975 = vld [vmem:[%s3 + $0x54] sm:$0xf]
    %v1976 = vld [vmem:[%s3 + $0x58] sm:$0xf]
    %v1977 = vld [vmem:[%s3 + $0x5c] sm:$0xf]
    %v1978 = vld [vmem:[%s3 + $0x60] sm:$0xf]
    %v1979 = vld [vmem:[%s3 + $0x64] sm:$0xf]
    %v1980 = vld [vmem:[%s3 + $0x68] sm:$0xf]
    %v1981 = vld [vmem:[%s3 + $0x6c] sm:$0xf]
    %v1982 = vld [vmem:[%s3 + $0x70] sm:$0xf]
    %v1983 = vld [vmem:[%s3 + $0x74] sm:$0xf]
    %v1984 = vld [vmem:[%s3 + $0x78] sm:$0xf]
    %v1985 = vld [vmem:[%s3 + $0x7c] sm:$0xf]
    %v1986 = vld [vmem:[%s4] sm:$0x1]
    %v1988 = vlaneseq
    %v1989 = vshrl.u32 %v1988, 7
    %v1990 = vsub.s32 0, %v1989
    %v1991 = vrot.slane %v1986, %v1990
    %v2025 = vunpack.c.l.b16 %v1954
    %v2026 = vunpack.c.l.b16 %v1955
    %v2027 = vunpack.c.l.b16 %v1956
    %v2028 = vunpack.c.l.b16 %v1957
    %v2029 = vunpack.c.l.b16 %v1958
    %v2030 = vunpack.c.l.b16 %v1959
    %v2031 = vunpack.c.l.b16 %v1960
    %v2032 = vunpack.c.l.b16 %v1961
    %v2033 = vunpack.c.l.b16 %v1962
    %v2034 = vunpack.c.l.b16 %v1963
    %v2035 = vunpack.c.l.b16 %v1964
    %v2036 = vunpack.c.l.b16 %v1965
    %v2037 = vunpack.c.l.b16 %v1966
    %v2038 = vunpack.c.l.b16 %v1967
    %v2039 = vunpack.c.l.b16 %v1968
    %v2040 = vunpack.c.l.b16 %v1969
    %v2041 = vunpack.c.l.b16 %v1970
    %v2042 = vunpack.c.l.b16 %v1971
    %v2043 = vunpack.c.l.b16 %v1972
    %v2044 = vunpack.c.l.b16 %v1973
    %v2045 = vunpack.c.l.b16 %v1974
    %v2046 = vunpack.c.l.b16 %v1975
    %v2047 = vunpack.c.l.b16 %v1976
    %v2048 = vunpack.c.l.b16 %v1977
    %v2049 = vunpack.c.l.b16 %v1978
    %v2050 = vunpack.c.l.b16 %v1979
    %v2051 = vunpack.c.l.b16 %v1980
    %v2052 = vunpack.c.l.b16 %v1981
    %v2053 = vunpack.c.l.b16 %v1982
    %v2054 = vunpack.c.l.b16 %v1983
    %v2055 = vunpack.c.l.b16 %v1984
    %v2056 = vunpack.c.l.b16 %v1985
    %v2057 = vpack.c.b16 %v2026, %v2025
    %v2058 = vpack.c.b16 %v2028, %v2027
    %v2059 = vpack.c.b16 %v2030, %v2029
    %v2060 = vpack.c.b16 %v2032, %v2031
    %v2061 = vpack.c.b16 %v2034, %v2033
    %v2062 = vpack.c.b16 %v2036, %v2035
    %v2063 = vpack.c.b16 %v2038, %v2037
    %v2064 = vpack.c.b16 %v2040, %v2039
    %v2065 = vpack.c.b16 %v2042, %v2041
    %v2066 = vpack.c.b16 %v2044, %v2043
    %v2067 = vpack.c.b16 %v2046, %v2045
    %v2068 = vpack.c.b16 %v2048, %v2047
    %v2069 = vpack.c.b16 %v2050, %v2049
    %v2070 = vpack.c.b16 %v2052, %v2051
    %v2071 = vpack.c.b16 %v2054, %v2053
    %v2072 = vpack.c.b16 %v2056, %v2055
    %2089 = vmatprep.subr.bf16.mxu0 0
    %2090 = vmatpush1.bf16.msra.mxu0 %v2057
    %2091 = vmatprep.subr.bf16.mxu0 0
    %2092 = vmatpush1.bf16.msra.mxu0 %v2058
    %2093 = vmatprep.subr.bf16.mxu0 0
    %2094 = vmatpush1.bf16.msra.mxu0 %v2059
    %2095 = vmatprep.subr.bf16.mxu0 0
    %2096 = vmatpush1.bf16.msra.mxu0 %v2060
    %2097 = vmatprep.subr.bf16.mxu0 0
    %2098 = vmatpush1.bf16.msra.mxu0 %v2061
    %2099 = vmatprep.subr.bf16.mxu0 0
    %2100 = vmatpush1.bf16.msra.mxu0 %v2062
    %2101 = vmatprep.subr.bf16.mxu0 0
    %2102 = vmatpush1.bf16.msra.mxu0 %v2063
    %2103 = vmatprep.subr.bf16.mxu0 0
    %2104 = vmatpush1.bf16.msra.mxu0 %v2064
    %2105 = vmatprep.subr.bf16.mxu0 0
    %2106 = vmatpush1.bf16.msra.mxu0 %v2065
    %2107 = vmatprep.subr.bf16.mxu0 0
    %2108 = vmatpush1.bf16.msra.mxu0 %v2066
    %2109 = vmatprep.subr.bf16.mxu0 0
    %2110 = vmatpush1.bf16.msra.mxu0 %v2067
    %2111 = vmatprep.subr.bf16.mxu0 0
    %2112 = vmatpush1.bf16.msra.mxu0 %v2068
    %2113 = vmatprep.subr.bf16.mxu0 0
    %2114 = vmatpush1.bf16.msra.mxu0 %v2069
    %2115 = vmatprep.subr.bf16.mxu0 0
    %2116 = vmatpush1.bf16.msra.mxu0 %v2070
    %2117 = vmatprep.subr.bf16.mxu0 0
    %2118 = vmatpush1.bf16.msra.mxu0 %v2071
    %2119 = vmatprep.subr.bf16.mxu0 0
    %2120 = vmatpush1.bf16.msra.mxu0 %v2072
    %2121 = vmatprep.mubr.bf16.mxu0 %v1933
    %2122 = vmatmul.mubr.bf16.gmra.mrb[0].mxu0 %v1932
    %v2123 = vpop.f32.mrb[0].mxu0
    %v2124 = vadd.f32 %v1991, %v2123
    %v2125 = vpop.f32.mrb[0].mxu0
    %v2126 = vpop.f32.mrb[0].mxu0
    %v2127 = vadd.f32 %v1991, %v2126
    %v2128 = vpop.f32.mrb[0].mxu0
    %2129 = vmatprep.mubr.bf16.mxu0 %v1935
    %2130 = vmatmul.mubr.bf16.gmra.mrb[0].mxu0 %v1934
    %v2131 = vpop.f32.mrb[0].mxu0
    %v2132 = vadd.f32 %v1991, %v2131
    %v2133 = vpop.f32.mrb[0].mxu0
    %v2134 = vpop.f32.mrb[0].mxu0
    %v2135 = vadd.f32 %v1991, %v2134
    %v2136 = vpop.f32.mrb[0].mxu0
    %2137 = vmatprep.mubr.bf16.mxu0 %v1937
    %2138 = vmatmul.mubr.bf16.gmra.mrb[0].mxu0 %v1936
    %v2139 = vpop.f32.mrb[0].mxu0
    %v2140 = vadd.f32 %v1991, %v2139
    %v2141 = vpop.f32.mrb[0].mxu0
    %v2142 = vpop.f32.mrb[0].mxu0
    %v2143 = vadd.f32 %v1991, %v2142
    %v2144 = vpop.f32.mrb[0].mxu0
    %2145 = vmatprep.mubr.bf16.mxu0 %v1939
    %2146 = vmatmul.mubr.bf16.gmra.mrb[0].mxu0 %v1938
    %v2147 = vpop.f32.mrb[0].mxu0
    %v2148 = vadd.f32 %v1991, %v2147
    %v2149 = vpop.f32.mrb[0].mxu0
    %v2150 = vpop.f32.mrb[0].mxu0
    %v2151 = vadd.f32 %v1991, %v2150
    %v2152 = vpop.f32.mrb[0].mxu0
    %2153 = vmatprep.mubr.bf16.mxu0 %v1941
    %2154 = vmatmul.mubr.bf16.gmra.mrb[0].mxu0 %v1940
    %v2155 = vpop.f32.mrb[0].mxu0
    %v2156 = vadd.f32 %v1991, %v2155
    %v2157 = vpop.f32.mrb[0].mxu0
    %v2158 = vpop.f32.mrb[0].mxu0
    %v2159 = vadd.f32 %v1991, %v2158
    %v2160 = vpop.f32.mrb[0].mxu0
    %2161 = vmatprep.mubr.bf16.mxu0 %v1943
    %2162 = vmatmul.mubr.bf16.gmra.mrb[0].mxu0 %v1942
    %v2163 = vpop.f32.mrb[0].mxu0
    %v2164 = vadd.f32 %v1991, %v2163
    %v2165 = vpop.f32.mrb[0].mxu0
    %v2166 = vpop.f32.mrb[0].mxu0
    %v2167 = vadd.f32 %v1991, %v2166
    %v2168 = vpop.f32.mrb[0].mxu0
    %2169 = vmatprep.mubr.bf16.mxu0 %v1945
    %2170 = vmatmul.mubr.bf16.gmra.mrb[0].mxu0 %v1944
    %v2171 = vpop.f32.mrb[0].mxu0
    %v2172 = vadd.f32 %v1991, %v2171
    %v2173 = vpop.f32.mrb[0].mxu0
    %v2174 = vpop.f32.mrb[0].mxu0
    %v2175 = vadd.f32 %v1991, %v2174
    %v2176 = vpop.f32.mrb[0].mxu0
    %2177 = vmatprep.mubr.bf16.mxu0 %v1947
    %2178 = vmatmul.mubr.bf16.gmra.mrb[0].mxu0 %v1946
    %v2179 = vpop.f32.mrb[0].mxu0
    %v2180 = vadd.f32 %v1991, %v2179
    %v2181 = vpop.f32.mrb[0].mxu0
    %v2182 = vpop.f32.mrb[0].mxu0
    %v2183 = vadd.f32 %v1991, %v2182
    %v2184 = vpop.f32.mrb[0].mxu0
    %2185 = vmatprep.mubr.bf16.mxu0 %v1949
    %2186 = vmatmul.mubr.bf16.gmra.mrb[0].mxu0 %v1948
    %v2187 = vpop.f32.mrb[0].mxu0
    %v2188 = vadd.f32 %v1991, %v2187
    %v2189 = vpop.f32.mrb[0].mxu0
    %v2190 = vpop.f32.mrb[0].mxu0
    %v2191 = vadd.f32 %v1991, %v2190
    %v2192 = vpop.f32.mrb[0].mxu0
    %2193 = vmatprep.mubr.bf16.mxu0 %v1951
    %2194 = vmatmul.mubr.bf16.gmra.mrb[0].mxu0 %v1950
    %v2195 = vpop.f32.mrb[0].mxu0
    %v2196 = vadd.f32 %v1991, %v2195
    %v2197 = vpop.f32.mrb[0].mxu0
    %v2198 = vpop.f32.mrb[0].mxu0
    %v2199 = vadd.f32 %v1991, %v2198
    %v2200 = vpop.f32.mrb[0].mxu0
    %2201 = vmatprep.mubr.bf16.mxu0 %v1953
    %2202 = vmatmul.mubr.bf16.gmra.mrb[0].mxu0 %v1952
    %v2203 = vpop.f32.mrb[0].mxu0
    %v2204 = vadd.f32 %v1991, %v2203
    %v2205 = vpop.f32.mrb[0].mxu0
    %v2206 = vpop.f32.mrb[0].mxu0
    %v2207 = vpop.f32.mrb[0].mxu0
    %2208 = vdwg.mxu0
    %v2209 = vmax.f32 %v2124, 0.0
    %v2210 = vmax.f32 %v2127, 0.0
    %v2211 = vmax.f32 %v2132, 0.0
    %v2212 = vmax.f32 %v2135, 0.0
    %v2213 = vmax.f32 %v2140, 0.0
    %v2214 = vmax.f32 %v2143, 0.0
    %v2215 = vmax.f32 %v2148, 0.0
    %v2216 = vmax.f32 %v2151, 0.0
    %v2217 = vmax.f32 %v2156, 0.0
    %v2218 = vmax.f32 %v2159, 0.0
    %v2219 = vmax.f32 %v2164, 0.0
    %v2220 = vmax.f32 %v2167, 0.0
    %v2221 = vmax.f32 %v2172, 0.0
    %v2222 = vmax.f32 %v2175, 0.0
    %v2223 = vmax.f32 %v2180, 0.0
    %v2224 = vmax.f32 %v2183, 0.0
    %v2225 = vmax.f32 %v2188, 0.0
    %v2226 = vmax.f32 %v2191, 0.0
    %v2227 = vmax.f32 %v2196, 0.0
    %v2228 = vmax.f32 %v2199, 0.0
    %v2229 = vmax.f32 %v2204, 0.0
    %vm2230 = vcmask 261120
    %2231 = vst.msk [vmem:[#allocation2] sm:$0xff] %vm2230, %v2209
    %2232 = vst.msk [vmem:[#allocation2 + $0x8] sm:$0xff] %vm2230, %v2210
    %2233 = vst.msk [vmem:[#allocation2 + $0x10] sm:$0xff] %vm2230, %v2211
    %2234 = vst.msk [vmem:[#allocation2 + $0x18] sm:$0xff] %vm2230, %v2212
    %2235 = vst.msk [vmem:[#allocation2 + $0x20] sm:$0xff] %vm2230, %v2213
    %2236 = vst.msk [vmem:[#allocation2 + $0x28] sm:$0xff] %vm2230, %v2214
    %2237 = vst.msk [vmem:[#allocation2 + $0x30] sm:$0xff] %vm2230, %v2215
    %2238 = vst.msk [vmem:[#allocation2 + $0x38] sm:$0xff] %vm2230, %v2216
    %2239 = vst.msk [vmem:[#allocation2 + $0x40] sm:$0xff] %vm2230, %v2217
    %2240 = vst.msk [vmem:[#allocation2 + $0x48] sm:$0xff] %vm2230, %v2218
    %2241 = vst.msk [vmem:[#allocation2 + $0x50] sm:$0xff] %vm2230, %v2219
    %2242 = vst.msk [vmem:[#allocation2 + $0x58] sm:$0xff] %vm2230, %v2220
    %2243 = vst.msk [vmem:[#allocation2 + $0x60] sm:$0xff] %vm2230, %v2221
    %2244 = vst.msk [vmem:[#allocation2 + $0x68] sm:$0xff] %vm2230, %v2222
    %2245 = vst.msk [vmem:[#allocation2 + $0x70] sm:$0xff] %vm2230, %v2223
    %2246 = vst.msk [vmem:[#allocation2 + $0x78] sm:$0xff] %vm2230, %v2224
    %2247 = vst.msk [vmem:[#allocation2 + $0x80] sm:$0xff] %vm2230, %v2225
    %2248 = vst.msk [vmem:[#allocation2 + $0x88] sm:$0xff] %vm2230, %v2226
    %2249 = vst.msk [vmem:[#allocation2 + $0x90] sm:$0xff] %vm2230, %v2227
    %2250 = vst.msk [vmem:[#allocation2 + $0x98] sm:$0xff] %vm2230, %v2228
    %vm2251 = vcmask 254976
    %2252 = vst.msk [vmem:[#allocation2 + $0xa0] sm:$0x3] %vm2251, %v2229
    %v2253 = vld [vmem:[#allocation2] sm:$0x3]
    %2254 = vst.msk [vmem:[#allocation3] sm:$0x3] %vm2251, %v2253
    %v2255 = vld [vmem:[#allocation2 + $0x2] sm:$0x3]
    %v2258 = vunpack.c.l.s4 1983009808
    %v2259 = vunpack.c.0.s8 %v2258
    %v2260 = vlaneseq
    %v2261 = vshrl.u32 %v2260, 7
    %v2262 = vsub.s32 %v2259, %v2261
    %v2263 = vrot.slane %v2255, %v2262
    %2264 = vrot.lane.b32.xlu0 %v2263, 32
    %v2265 = vpop.permute.xlu0 %2264
    %vm2267 = vcmask 517376
    %2268 = vst.msk [vmem:[#allocation3] sm:$0x3] %vm2267, %v2265
    %v2269 = vld [vmem:[#allocation2 + $0x4] sm:$0x3]
    %v2272 = vunpack.c.l.s4 1983009808
    %v2273 = vunpack.c.0.s8 %v2272
    %v2274 = vlaneseq
    %v2275 = vshrl.u32 %v2274, 7
    %v2276 = vsub.s32 %v2273, %v2275
    %v2277 = vrot.slane %v2269, %v2276
    %2278 = vrot.lane.b32.xlu0 %v2277, 64
    %v2279 = vpop.permute.xlu0 %2278
    %vm2281 = vcmask 779776
    %2282 = vst.msk [vmem:[#allocation3] sm:$0x3] %vm2281, %v2279
    %v2283 = vld [vmem:[#allocation2 + $0x6] sm:$0x3]
    %v2286 = vunpack.c.l.s4 1983009808
    %v2287 = vunpack.c.0.s8 %v2286
    %v2288 = vlaneseq
    %v2289 = vshrl.u32 %v2288, 7
    %v2290 = vsub.s32 %v2287, %v2289
    %v2291 = vrot.slane %v2283, %v2290
    %2292 = vrot.lane.b32.xlu0 %v2291, 96
    %v2293 = vpop.permute.xlu0 %2292
    %vm2295 = vcmask 1042176
    %2296 = vst.msk [vmem:[#allocation3] sm:$0x3] %vm2295, %v2293
    %v2297 = vld [vmem:[#allocation2 + $0x8] sm:$0x3]
    %2298 = vst.msk [vmem:[#allocation3 + $0x2] sm:$0x3] %vm2251, %v2297
    %v2299 = vld [vmem:[#allocation2 + $0xa] sm:$0x3]
    %v2302 = vunpack.c.l.s4 1983009808
    %v2303 = vunpack.c.0.s8 %v2302
    %v2304 = vlaneseq
    %v2305 = vshrl.u32 %v2304, 7
    %v2306 = vsub.s32 %v2303, %v2305
    %v2307 = vrot.slane %v2299, %v2306
    %2308 = vrot.lane.b32.xlu0 %v2307, 32
    %v2309 = vpop.permute.xlu0 %2308
    %2311 = vst.msk [vmem:[#allocation3 + $0x2] sm:$0x3] %vm2267, %v2309
    %v2312 = vld [vmem:[#allocation2 + $0xc] sm:$0x3]
    %v2315 = vunpack.c.l.s4 1983009808
    %v2316 = vunpack.c.0.s8 %v2315
    %v2317 = vlaneseq
    %v2318 = vshrl.u32 %v2317, 7
    %v2319 = vsub.s32 %v2316, %v2318
    %v2320 = vrot.slane %v2312, %v2319
    %2321 = vrot.lane.b32.xlu0 %v2320, 64
    %v2322 = vpop.permute.xlu0 %2321
    %2324 = vst.msk [vmem:[#allocation3 + $0x2] sm:$0x3] %vm2281, %v2322
    %v2325 = vld [vmem:[#allocation2 + $0xe] sm:$0x3]
    %v2328 = vunpack.c.l.s4 1983009808
    %v2329 = vunpack.c.0.s8 %v2328
    %v2330 = vlaneseq
    %v2331 = vshrl.u32 %v2330, 7
    %v2332 = vsub.s32 %v2329, %v2331
    %v2333 = vrot.slane %v2325, %v2332
    %2334 = vrot.lane.b32.xlu0 %v2333, 96
    %v2335 = vpop.permute.xlu0 %2334
    %2337 = vst.msk [vmem:[#allocation3 + $0x2] sm:$0x3] %vm2295, %v2335
    %v2338 = vld [vmem:[#allocation2 + $0x10] sm:$0x3]
    %2339 = vst.msk [vmem:[#allocation3 + $0x4] sm:$0x3] %vm2251, %v2338
    %v2340 = vld [vmem:[#allocation2 + $0x12] sm:$0x3]
    %v2343 = vunpack.c.l.s4 1983009808
    %v2344 = vunpack.c.0.s8 %v2343
    %v2345 = vlaneseq
    %v2346 = vshrl.u32 %v2345, 7
    %v2347 = vsub.s32 %v2344, %v2346
    %v2348 = vrot.slane %v2340, %v2347
    %2349 = vrot.lane.b32.xlu0 %v2348, 32
    %v2350 = vpop.permute.xlu0 %2349
    %2352 = vst.msk [vmem:[#allocation3 + $0x4] sm:$0x3] %vm2267, %v2350
    %v2353 = vld [vmem:[#allocation2 + $0x14] sm:$0x3]
    %v2356 = vunpack.c.l.s4 1983009808
    %v2357 = vunpack.c.0.s8 %v2356
    %v2358 = vlaneseq
    %v2359 = vshrl.u32 %v2358, 7
    %v2360 = vsub.s32 %v2357, %v2359
    %v2361 = vrot.slane %v2353, %v2360
    %2362 = vrot.lane.b32.xlu0 %v2361, 64
    %v2363 = vpop.permute.xlu0 %2362
    %2365 = vst.msk [vmem:[#allocation3 + $0x4] sm:$0x3] %vm2281, %v2363
    %v2366 = vld [vmem:[#allocation2 + $0x16] sm:$0x3]
    %v2369 = vunpack.c.l.s4 1983009808
    %v2370 = vunpack.c.0.s8 %v2369
    %v2371 = vlaneseq
    %v2372 = vshrl.u32 %v2371, 7
    %v2373 = vsub.s32 %v2370, %v2372
    %v2374 = vrot.slane %v2366, %v2373
    %2375 = vrot.lane.b32.xlu0 %v2374, 96
    %v2376 = vpop.permute.xlu0 %2375
    %2378 = vst.msk [vmem:[#allocation3 + $0x4] sm:$0x3] %vm2295, %v2376
    %v2379 = vld [vmem:[#allocation2 + $0x18] sm:$0x3]
    %2380 = vst.msk [vmem:[#allocation3 + $0x6] sm:$0x3] %vm2251, %v2379
    %v2381 = vld [vmem:[#allocation2 + $0x1a] sm:$0x3]
    %v2384 = vunpack.c.l.s4 1983009808
    %v2385 = vunpack.c.0.s8 %v2384
    %v2386 = vlaneseq
    %v2387 = vshrl.u32 %v2386, 7
    %v2388 = vsub.s32 %v2385, %v2387
    %v2389 = vrot.slane %v2381, %v2388
    %2390 = vrot.lane.b32.xlu0 %v2389, 32
    %v2391 = vpop.permute.xlu0 %2390
    %2393 = vst.msk [vmem:[#allocation3 + $0x6] sm:$0x3] %vm2267, %v2391
    %v2394 = vld [vmem:[#allocation2 + $0x1c] sm:$0x3]
    %v2397 = vunpack.c.l.s4 1983009808
    %v2398 = vunpack.c.0.s8 %v2397
    %v2399 = vlaneseq
    %v2400 = vshrl.u32 %v2399, 7
    %v2401 = vsub.s32 %v2398, %v2400
    %v2402 = vrot.slane %v2394, %v2401
    %2403 = vrot.lane.b32.xlu0 %v2402, 64
    %v2404 = vpop.permute.xlu0 %2403
    %2406 = vst.msk [vmem:[#allocation3 + $0x6] sm:$0x3] %vm2281, %v2404
    %v2407 = vld [vmem:[#allocation2 + $0x1e] sm:$0x3]
    %v2410 = vunpack.c.l.s4 1983009808
    %v2411 = vunpack.c.0.s8 %v2410
    %v2412 = vlaneseq
    %v2413 = vshrl.u32 %v2412, 7
    %v2414 = vsub.s32 %v2411, %v2413
    %v2415 = vrot.slane %v2407, %v2414
    %2416 = vrot.lane.b32.xlu0 %v2415, 96
    %v2417 = vpop.permute.xlu0 %2416
    %2419 = vst.msk [vmem:[#allocation3 + $0x6] sm:$0x3] %vm2295, %v2417
    %v2420 = vld [vmem:[#allocation2 + $0x20] sm:$0x3]
    %2421 = vst.msk [vmem:[#allocation3 + $0x8] sm:$0x3] %vm2251, %v2420
    %v2422 = vld [vmem:[#allocation2 + $0x22] sm:$0x3]
    %v2425 = vunpack.c.l.s4 1983009808
    %v2426 = vunpack.c.0.s8 %v2425
    %v2427 = vlaneseq
    %v2428 = vshrl.u32 %v2427, 7
    %v2429 = vsub.s32 %v2426, %v2428
    %v2430 = vrot.slane %v2422, %v2429
    %2431 = vrot.lane.b32.xlu0 %v2430, 32
    %v2432 = vpop.permute.xlu0 %2431
    %2434 = vst.msk [vmem:[#allocation3 + $0x8] sm:$0x3] %vm2267, %v2432
    %v2435 = vld [vmem:[#allocation2 + $0x24] sm:$0x3]
    %v2438 = vunpack.c.l.s4 1983009808
    %v2439 = vunpack.c.0.s8 %v2438
    %v2440 = vlaneseq
    %v2441 = vshrl.u32 %v2440, 7
    %v2442 = vsub.s32 %v2439, %v2441
    %v2443 = vrot.slane %v2435, %v2442
    %2444 = vrot.lane.b32.xlu0 %v2443, 64
    %v2445 = vpop.permute.xlu0 %2444
    %2447 = vst.msk [vmem:[#allocation3 + $0x8] sm:$0x3] %vm2281, %v2445
    %v2448 = vld [vmem:[#allocation2 + $0x26] sm:$0x3]
    %v2451 = vunpack.c.l.s4 1983009808
    %v2452 = vunpack.c.0.s8 %v2451
    %v2453 = vlaneseq
    %v2454 = vshrl.u32 %v2453, 7
    %v2455 = vsub.s32 %v2452, %v2454
    %v2456 = vrot.slane %v2448, %v2455
    %2457 = vrot.lane.b32.xlu0 %v2456, 96
    %v2458 = vpop.permute.xlu0 %2457
    %2460 = vst.msk [vmem:[#allocation3 + $0x8] sm:$0x3] %vm2295, %v2458
    %v2461 = vld [vmem:[#allocation2 + $0x28] sm:$0x3]
    %2462 = vst.msk [vmem:[#allocation3 + $0xa] sm:$0x3] %vm2251, %v2461
    %v2463 = vld [vmem:[#allocation2 + $0x2a] sm:$0x3]
    %v2466 = vunpack.c.l.s4 1983009808
    %v2467 = vunpack.c.0.s8 %v2466
    %v2468 = vlaneseq
    %v2469 = vshrl.u32 %v2468, 7
    %v2470 = vsub.s32 %v2467, %v2469
    %v2471 = vrot.slane %v2463, %v2470
    %2472 = vrot.lane.b32.xlu0 %v2471, 32
    %v2473 = vpop.permute.xlu0 %2472
    %2475 = vst.msk [vmem:[#allocation3 + $0xa] sm:$0x3] %vm2267, %v2473
    %v2476 = vld [vmem:[#allocation2 + $0x2c] sm:$0x3]
    %v2479 = vunpack.c.l.s4 1983009808
    %v2480 = vunpack.c.0.s8 %v2479
    %v2481 = vlaneseq
    %v2482 = vshrl.u32 %v2481, 7
    %v2483 = vsub.s32 %v2480, %v2482
    %v2484 = vrot.slane %v2476, %v2483
    %2485 = vrot.lane.b32.xlu0 %v2484, 64
    %v2486 = vpop.permute.xlu0 %2485
    %2488 = vst.msk [vmem:[#allocation3 + $0xa] sm:$0x3] %vm2281, %v2486
    %v2489 = vld [vmem:[#allocation2 + $0x2e] sm:$0x3]
    %v2492 = vunpack.c.l.s4 1983009808
    %v2493 = vunpack.c.0.s8 %v2492
    %v2494 = vlaneseq
    %v2495 = vshrl.u32 %v2494, 7
    %v2496 = vsub.s32 %v2493, %v2495
    %v2497 = vrot.slane %v2489, %v2496
    %2498 = vrot.lane.b32.xlu0 %v2497, 96
    %v2499 = vpop.permute.xlu0 %2498
    %2501 = vst.msk [vmem:[#allocation3 + $0xa] sm:$0x3] %vm2295, %v2499
    %v2502 = vld [vmem:[#allocation2 + $0x30] sm:$0x3]
    %2503 = vst.msk [vmem:[#allocation3 + $0xc] sm:$0x3] %vm2251, %v2502
    %v2504 = vld [vmem:[#allocation2 + $0x32] sm:$0x3]
    %v2507 = vunpack.c.l.s4 1983009808
    %v2508 = vunpack.c.0.s8 %v2507
    %v2509 = vlaneseq
    %v2510 = vshrl.u32 %v2509, 7
    %v2511 = vsub.s32 %v2508, %v2510
    %v2512 = vrot.slane %v2504, %v2511
    %2513 = vrot.lane.b32.xlu0 %v2512, 32
    %v2514 = vpop.permute.xlu0 %2513
    %2516 = vst.msk [vmem:[#allocation3 + $0xc] sm:$0x3] %vm2267, %v2514
    %v2517 = vld [vmem:[#allocation2 + $0x34] sm:$0x3]
    %v2520 = vunpack.c.l.s4 1983009808
    %v2521 = vunpack.c.0.s8 %v2520
    %v2522 = vlaneseq
    %v2523 = vshrl.u32 %v2522, 7
    %v2524 = vsub.s32 %v2521, %v2523
    %v2525 = vrot.slane %v2517, %v2524
    %2526 = vrot.lane.b32.xlu0 %v2525, 64
    %v2527 = vpop.permute.xlu0 %2526
    %2529 = vst.msk [vmem:[#allocation3 + $0xc] sm:$0x3] %vm2281, %v2527
    %v2530 = vld [vmem:[#allocation2 + $0x36] sm:$0x3]
    %v2533 = vunpack.c.l.s4 1983009808
    %v2534 = vunpack.c.0.s8 %v2533
    %v2535 = vlaneseq
    %v2536 = vshrl.u32 %v2535, 7
    %v2537 = vsub.s32 %v2534, %v2536
    %v2538 = vrot.slane %v2530, %v2537
    %2539 = vrot.lane.b32.xlu0 %v2538, 96
    %v2540 = vpop.permute.xlu0 %2539
    %2542 = vst.msk [vmem:[#allocation3 + $0xc] sm:$0x3] %vm2295, %v2540
    %v2543 = vld [vmem:[#allocation2 + $0x38] sm:$0x3]
    %2544 = vst.msk [vmem:[#allocation3 + $0xe] sm:$0x3] %vm2251, %v2543
    %v2545 = vld [vmem:[#allocation2 + $0x3a] sm:$0x3]
    %v2548 = vunpack.c.l.s4 1983009808
    %v2549 = vunpack.c.0.s8 %v2548
    %v2550 = vlaneseq
    %v2551 = vshrl.u32 %v2550, 7
    %v2552 = vsub.s32 %v2549, %v2551
    %v2553 = vrot.slane %v2545, %v2552
    %2554 = vrot.lane.b32.xlu0 %v2553, 32
    %v2555 = vpop.permute.xlu0 %2554
    %2557 = vst.msk [vmem:[#allocation3 + $0xe] sm:$0x3] %vm2267, %v2555
    %v2558 = vld [vmem:[#allocation2 + $0x3c] sm:$0x3]
    %v2561 = vunpack.c.l.s4 1983009808
    %v2562 = vunpack.c.0.s8 %v2561
    %v2563 = vlaneseq
    %v2564 = vshrl.u32 %v2563, 7
    %v2565 = vsub.s32 %v2562, %v2564
    %v2566 = vrot.slane %v2558, %v2565
    %2567 = vrot.lane.b32.xlu0 %v2566, 64
    %v2568 = vpop.permute.xlu0 %2567
    %2570 = vst.msk [vmem:[#allocation3 + $0xe] sm:$0x3] %vm2281, %v2568
    %v2571 = vld [vmem:[#allocation2 + $0x3e] sm:$0x3]
    %v2574 = vunpack.c.l.s4 1983009808
    %v2575 = vunpack.c.0.s8 %v2574
    %v2576 = vlaneseq
    %v2577 = vshrl.u32 %v2576, 7
    %v2578 = vsub.s32 %v2575, %v2577
    %v2579 = vrot.slane %v2571, %v2578
    %2580 = vrot.lane.b32.xlu0 %v2579, 96
    %v2581 = vpop.permute.xlu0 %2580
    %2583 = vst.msk [vmem:[#allocation3 + $0xe] sm:$0x3] %vm2295, %v2581
    %v2584 = vld [vmem:[#allocation2 + $0x40] sm:$0x3]
    %2585 = vst.msk [vmem:[#allocation3 + $0x10] sm:$0x3] %vm2251, %v2584
    %v2586 = vld [vmem:[#allocation2 + $0x42] sm:$0x3]
    %v2589 = vunpack.c.l.s4 1983009808
    %v2590 = vunpack.c.0.s8 %v2589
    %v2591 = vlaneseq
    %v2592 = vshrl.u32 %v2591, 7
    %v2593 = vsub.s32 %v2590, %v2592
    %v2594 = vrot.slane %v2586, %v2593
    %2595 = vrot.lane.b32.xlu0 %v2594, 32
    %v2596 = vpop.permute.xlu0 %2595
    %2598 = vst.msk [vmem:[#allocation3 + $0x10] sm:$0x3] %vm2267, %v2596
    %v2599 = vld [vmem:[#allocation2 + $0x44] sm:$0x3]
    %v2602 = vunpack.c.l.s4 1983009808
    %v2603 = vunpack.c.0.s8 %v2602
    %v2604 = vlaneseq
    %v2605 = vshrl.u32 %v2604, 7
    %v2606 = vsub.s32 %v2603, %v2605
    %v2607 = vrot.slane %v2599, %v2606
    %2608 = vrot.lane.b32.xlu0 %v2607, 64
    %v2609 = vpop.permute.xlu0 %2608
    %2611 = vst.msk [vmem:[#allocation3 + $0x10] sm:$0x3] %vm2281, %v2609
    %v2612 = vld [vmem:[#allocation2 + $0x46] sm:$0x3]
    %v2615 = vunpack.c.l.s4 1983009808
    %v2616 = vunpack.c.0.s8 %v2615
    %v2617 = vlaneseq
    %v2618 = vshrl.u32 %v2617, 7
    %v2619 = vsub.s32 %v2616, %v2618
    %v2620 = vrot.slane %v2612, %v2619
    %2621 = vrot.lane.b32.xlu0 %v2620, 96
    %v2622 = vpop.permute.xlu0 %2621
    %2624 = vst.msk [vmem:[#allocation3 + $0x10] sm:$0x3] %vm2295, %v2622
    %v2625 = vld [vmem:[#allocation2 + $0x48] sm:$0x3]
    %2626 = vst.msk [vmem:[#allocation3 + $0x12] sm:$0x3] %vm2251, %v2625
    %v2627 = vld [vmem:[#allocation2 + $0x4a] sm:$0x3]
    %v2630 = vunpack.c.l.s4 1983009808
    %v2631 = vunpack.c.0.s8 %v2630
    %v2632 = vlaneseq
    %v2633 = vshrl.u32 %v2632, 7
    %v2634 = vsub.s32 %v2631, %v2633
    %v2635 = vrot.slane %v2627, %v2634
    %2636 = vrot.lane.b32.xlu0 %v2635, 32
    %v2637 = vpop.permute.xlu0 %2636
    %2639 = vst.msk [vmem:[#allocation3 + $0x12] sm:$0x3] %vm2267, %v2637
    %v2640 = vld [vmem:[#allocation2 + $0x4c] sm:$0x3]
    %v2643 = vunpack.c.l.s4 1983009808
    %v2644 = vunpack.c.0.s8 %v2643
    %v2645 = vlaneseq
    %v2646 = vshrl.u32 %v2645, 7
    %v2647 = vsub.s32 %v2644, %v2646
    %v2648 = vrot.slane %v2640, %v2647
    %2649 = vrot.lane.b32.xlu0 %v2648, 64
    %v2650 = vpop.permute.xlu0 %2649
    %2652 = vst.msk [vmem:[#allocation3 + $0x12] sm:$0x3] %vm2281, %v2650
    %v2653 = vld [vmem:[#allocation2 + $0x4e] sm:$0x3]
    %v2656 = vunpack.c.l.s4 1983009808
    %v2657 = vunpack.c.0.s8 %v2656
    %v2658 = vlaneseq
    %v2659 = vshrl.u32 %v2658, 7
    %v2660 = vsub.s32 %v2657, %v2659
    %v2661 = vrot.slane %v2653, %v2660
    %2662 = vrot.lane.b32.xlu0 %v2661, 96
    %v2663 = vpop.permute.xlu0 %2662
    %2665 = vst.msk [vmem:[#allocation3 + $0x12] sm:$0x3] %vm2295, %v2663
    %v2666 = vld [vmem:[#allocation2 + $0x50] sm:$0x3]
    %2667 = vst.msk [vmem:[#allocation3 + $0x14] sm:$0x3] %vm2251, %v2666
    %v2668 = vld [vmem:[#allocation2 + $0x52] sm:$0x3]
    %v2671 = vunpack.c.l.s4 1983009808
    %v2672 = vunpack.c.0.s8 %v2671
    %v2673 = vlaneseq
    %v2674 = vshrl.u32 %v2673, 7
    %v2675 = vsub.s32 %v2672, %v2674
    %v2676 = vrot.slane %v2668, %v2675
    %2677 = vrot.lane.b32.xlu0 %v2676, 32
    %v2678 = vpop.permute.xlu0 %2677
    %2680 = vst.msk [vmem:[#allocation3 + $0x14] sm:$0x3] %vm2267, %v2678
    %v2681 = vld [vmem:[#allocation2 + $0x54] sm:$0x3]
    %v2684 = vunpack.c.l.s4 1983009808
    %v2685 = vunpack.c.0.s8 %v2684
    %v2686 = vlaneseq
    %v2687 = vshrl.u32 %v2686, 7
    %v2688 = vsub.s32 %v2685, %v2687
    %v2689 = vrot.slane %v2681, %v2688
    %2690 = vrot.lane.b32.xlu0 %v2689, 64
    %v2691 = vpop.permute.xlu0 %2690
    %2693 = vst.msk [vmem:[#allocation3 + $0x14] sm:$0x3] %vm2281, %v2691
    %v2694 = vld [vmem:[#allocation2 + $0x56] sm:$0x3]
    %v2697 = vunpack.c.l.s4 1983009808
    %v2698 = vunpack.c.0.s8 %v2697
    %v2699 = vlaneseq
    %v2700 = vshrl.u32 %v2699, 7
    %v2701 = vsub.s32 %v2698, %v2700
    %v2702 = vrot.slane %v2694, %v2701
    %2703 = vrot.lane.b32.xlu0 %v2702, 96
    %v2704 = vpop.permute.xlu0 %2703
    %2706 = vst.msk [vmem:[#allocation3 + $0x14] sm:$0x3] %vm2295, %v2704
    %v2707 = vld [vmem:[#allocation2 + $0x58] sm:$0x3]
    %2708 = vst.msk [vmem:[#allocation3 + $0x16] sm:$0x3] %vm2251, %v2707
    %v2709 = vld [vmem:[#allocation2 + $0x5a] sm:$0x3]
    %v2712 = vunpack.c.l.s4 1983009808
    %v2713 = vunpack.c.0.s8 %v2712
    %v2714 = vlaneseq
    %v2715 = vshrl.u32 %v2714, 7
    %v2716 = vsub.s32 %v2713, %v2715
    %v2717 = vrot.slane %v2709, %v2716
    %2718 = vrot.lane.b32.xlu0 %v2717, 32
    %v2719 = vpop.permute.xlu0 %2718
    %2721 = vst.msk [vmem:[#allocation3 + $0x16] sm:$0x3] %vm2267, %v2719
    %v2722 = vld [vmem:[#allocation2 + $0x5c] sm:$0x3]
    %v2725 = vunpack.c.l.s4 1983009808
    %v2726 = vunpack.c.0.s8 %v2725
    %v2727 = vlaneseq
    %v2728 = vshrl.u32 %v2727, 7
    %v2729 = vsub.s32 %v2726, %v2728
    %v2730 = vrot.slane %v2722, %v2729
    %2731 = vrot.lane.b32.xlu0 %v2730, 64
    %v2732 = vpop.permute.xlu0 %2731
    %2734 = vst.msk [vmem:[#allocation3 + $0x16] sm:$0x3] %vm2281, %v2732
    %v2735 = vld [vmem:[#allocation2 + $0x5e] sm:$0x3]
    %v2738 = vunpack.c.l.s4 1983009808
    %v2739 = vunpack.c.0.s8 %v2738
    %v2740 = vlaneseq
    %v2741 = vshrl.u32 %v2740, 7
    %v2742 = vsub.s32 %v2739, %v2741
    %v2743 = vrot.slane %v2735, %v2742
    %2744 = vrot.lane.b32.xlu0 %v2743, 96
    %v2745 = vpop.permute.xlu0 %2744
    %2747 = vst.msk [vmem:[#allocation3 + $0x16] sm:$0x3] %vm2295, %v2745
    %v2748 = vld [vmem:[#allocation2 + $0x60] sm:$0x3]
    %2749 = vst.msk [vmem:[#allocation3 + $0x18] sm:$0x3] %vm2251, %v2748
    %v2750 = vld [vmem:[#allocation2 + $0x62] sm:$0x3]
    %v2753 = vunpack.c.l.s4 1983009808
    %v2754 = vunpack.c.0.s8 %v2753
    %v2755 = vlaneseq
    %v2756 = vshrl.u32 %v2755, 7
    %v2757 = vsub.s32 %v2754, %v2756
    %v2758 = vrot.slane %v2750, %v2757
    %2759 = vrot.lane.b32.xlu0 %v2758, 32
    %v2760 = vpop.permute.xlu0 %2759
    %2762 = vst.msk [vmem:[#allocation3 + $0x18] sm:$0x3] %vm2267, %v2760
    %v2763 = vld [vmem:[#allocation2 + $0x64] sm:$0x3]
    %v2766 = vunpack.c.l.s4 1983009808
    %v2767 = vunpack.c.0.s8 %v2766
    %v2768 = vlaneseq
    %v2769 = vshrl.u32 %v2768, 7
    %v2770 = vsub.s32 %v2767, %v2769
    %v2771 = vrot.slane %v2763, %v2770
    %2772 = vrot.lane.b32.xlu0 %v2771, 64
    %v2773 = vpop.permute.xlu0 %2772
    %2775 = vst.msk [vmem:[#allocation3 + $0x18] sm:$0x3] %vm2281, %v2773
    %v2776 = vld [vmem:[#allocation2 + $0x66] sm:$0x3]
    %v2779 = vunpack.c.l.s4 1983009808
    %v2780 = vunpack.c.0.s8 %v2779
    %v2781 = vlaneseq
    %v2782 = vshrl.u32 %v2781, 7
    %v2783 = vsub.s32 %v2780, %v2782
    %v2784 = vrot.slane %v2776, %v2783
    %2785 = vrot.lane.b32.xlu0 %v2784, 96
    %v2786 = vpop.permute.xlu0 %2785
    %2788 = vst.msk [vmem:[#allocation3 + $0x18] sm:$0x3] %vm2295, %v2786
    %v2789 = vld [vmem:[#allocation2 + $0x68] sm:$0x3]
    %2790 = vst.msk [vmem:[#allocation3 + $0x1a] sm:$0x3] %vm2251, %v2789
    %v2791 = vld [vmem:[#allocation2 + $0x6a] sm:$0x3]
    %v2794 = vunpack.c.l.s4 1983009808
    %v2795 = vunpack.c.0.s8 %v2794
    %v2796 = vlaneseq
    %v2797 = vshrl.u32 %v2796, 7
    %v2798 = vsub.s32 %v2795, %v2797
    %v2799 = vrot.slane %v2791, %v2798
    %2800 = vrot.lane.b32.xlu0 %v2799, 32
    %v2801 = vpop.permute.xlu0 %2800
    %2803 = vst.msk [vmem:[#allocation3 + $0x1a] sm:$0x3] %vm2267, %v2801
    %v2804 = vld [vmem:[#allocation2 + $0x6c] sm:$0x3]
    %v2807 = vunpack.c.l.s4 1983009808
    %v2808 = vunpack.c.0.s8 %v2807
    %v2809 = vlaneseq
    %v2810 = vshrl.u32 %v2809, 7
    %v2811 = vsub.s32 %v2808, %v2810
    %v2812 = vrot.slane %v2804, %v2811
    %2813 = vrot.lane.b32.xlu0 %v2812, 64
    %v2814 = vpop.permute.xlu0 %2813
    %2816 = vst.msk [vmem:[#allocation3 + $0x1a] sm:$0x3] %vm2281, %v2814
    %v2817 = vld [vmem:[#allocation2 + $0x6e] sm:$0x3]
    %v2820 = vunpack.c.l.s4 1983009808
    %v2821 = vunpack.c.0.s8 %v2820
    %v2822 = vlaneseq
    %v2823 = vshrl.u32 %v2822, 7
    %v2824 = vsub.s32 %v2821, %v2823
    %v2825 = vrot.slane %v2817, %v2824
    %2826 = vrot.lane.b32.xlu0 %v2825, 96
    %v2827 = vpop.permute.xlu0 %2826
    %2829 = vst.msk [vmem:[#allocation3 + $0x1a] sm:$0x3] %vm2295, %v2827
    %v2830 = vld [vmem:[#allocation2 + $0x70] sm:$0x3]
    %2831 = vst.msk [vmem:[#allocation3 + $0x1c] sm:$0x3] %vm2251, %v2830
    %v2832 = vld [vmem:[#allocation2 + $0x72] sm:$0x3]
    %v2835 = vunpack.c.l.s4 1983009808
    %v2836 = vunpack.c.0.s8 %v2835
    %v2837 = vlaneseq
    %v2838 = vshrl.u32 %v2837, 7
    %v2839 = vsub.s32 %v2836, %v2838
    %v2840 = vrot.slane %v2832, %v2839
    %2841 = vrot.lane.b32.xlu0 %v2840, 32
    %v2842 = vpop.permute.xlu0 %2841
    %2844 = vst.msk [vmem:[#allocation3 + $0x1c] sm:$0x3] %vm2267, %v2842
    %v2845 = vld [vmem:[#allocation2 + $0x74] sm:$0x3]
    %v2848 = vunpack.c.l.s4 1983009808
    %v2849 = vunpack.c.0.s8 %v2848
    %v2850 = vlaneseq
    %v2851 = vshrl.u32 %v2850, 7
    %v2852 = vsub.s32 %v2849, %v2851
    %v2853 = vrot.slane %v2845, %v2852
    %2854 = vrot.lane.b32.xlu0 %v2853, 64
    %v2855 = vpop.permute.xlu0 %2854
    %2857 = vst.msk [vmem:[#allocation3 + $0x1c] sm:$0x3] %vm2281, %v2855
    %v2858 = vld [vmem:[#allocation2 + $0x76] sm:$0x3]
    %v2861 = vunpack.c.l.s4 1983009808
    %v2862 = vunpack.c.0.s8 %v2861
    %v2863 = vlaneseq
    %v2864 = vshrl.u32 %v2863, 7
    %v2865 = vsub.s32 %v2862, %v2864
    %v2866 = vrot.slane %v2858, %v2865
    %2867 = vrot.lane.b32.xlu0 %v2866, 96
    %v2868 = vpop.permute.xlu0 %2867
    %2870 = vst.msk [vmem:[#allocation3 + $0x1c] sm:$0x3] %vm2295, %v2868
    %v2871 = vld [vmem:[#allocation2 + $0x78] sm:$0x3]
    %2872 = vst.msk [vmem:[#allocation3 + $0x1e] sm:$0x3] %vm2251, %v2871
    %v2873 = vld [vmem:[#allocation2 + $0x7a] sm:$0x3]
    %v2876 = vunpack.c.l.s4 1983009808
    %v2877 = vunpack.c.0.s8 %v2876
    %v2878 = vlaneseq
    %v2879 = vshrl.u32 %v2878, 7
    %v2880 = vsub.s32 %v2877, %v2879
    %v2881 = vrot.slane %v2873, %v2880
    %2882 = vrot.lane.b32.xlu0 %v2881, 32
    %v2883 = vpop.permute.xlu0 %2882
    %2885 = vst.msk [vmem:[#allocation3 + $0x1e] sm:$0x3] %vm2267, %v2883
    %v2886 = vld [vmem:[#allocation2 + $0x7c] sm:$0x3]
    %v2889 = vunpack.c.l.s4 1983009808
    %v2890 = vunpack.c.0.s8 %v2889
    %v2891 = vlaneseq
    %v2892 = vshrl.u32 %v2891, 7
    %v2893 = vsub.s32 %v2890, %v2892
    %v2894 = vrot.slane %v2886, %v2893
    %2895 = vrot.lane.b32.xlu0 %v2894, 64
    %v2896 = vpop.permute.xlu0 %2895
    %2898 = vst.msk [vmem:[#allocation3 + $0x1e] sm:$0x3] %vm2281, %v2896
    %v2899 = vld [vmem:[#allocation2 + $0x7e] sm:$0x3]
    %v2902 = vunpack.c.l.s4 1983009808
    %v2903 = vunpack.c.0.s8 %v2902
    %v2904 = vlaneseq
    %v2905 = vshrl.u32 %v2904, 7
    %v2906 = vsub.s32 %v2903, %v2905
    %v2907 = vrot.slane %v2899, %v2906
    %2908 = vrot.lane.b32.xlu0 %v2907, 96
    %v2909 = vpop.permute.xlu0 %2908
    %2911 = vst.msk [vmem:[#allocation3 + $0x1e] sm:$0x3] %vm2295, %v2909
    %v2912 = vld [vmem:[#allocation2 + $0x80] sm:$0x3]
    %2913 = vst.msk [vmem:[#allocation3 + $0x20] sm:$0x3] %vm2251, %v2912
    %v2914 = vld [vmem:[#allocation2 + $0x82] sm:$0x3]
    %v2917 = vunpack.c.l.s4 1983009808
    %v2918 = vunpack.c.0.s8 %v2917
    %v2919 = vlaneseq
    %v2920 = vshrl.u32 %v2919, 7
    %v2921 = vsub.s32 %v2918, %v2920
    %v2922 = vrot.slane %v2914, %v2921
    %2923 = vrot.lane.b32.xlu0 %v2922, 32
    %v2924 = vpop.permute.xlu0 %2923
    %2926 = vst.msk [vmem:[#allocation3 + $0x20] sm:$0x3] %vm2267, %v2924
    %v2927 = vld [vmem:[#allocation2 + $0x84] sm:$0x3]
    %v2930 = vunpack.c.l.s4 1983009808
    %v2931 = vunpack.c.0.s8 %v2930
    %v2932 = vlaneseq
    %v2933 = vshrl.u32 %v2932, 7
    %v2934 = vsub.s32 %v2931, %v2933
    %v2935 = vrot.slane %v2927, %v2934
    %2936 = vrot.lane.b32.xlu0 %v2935, 64
    %v2937 = vpop.permute.xlu0 %2936
    %2939 = vst.msk [vmem:[#allocation3 + $0x20] sm:$0x3] %vm2281, %v2937
    %v2940 = vld [vmem:[#allocation2 + $0x86] sm:$0x3]
    %v2943 = vunpack.c.l.s4 1983009808
    %v2944 = vunpack.c.0.s8 %v2943
    %v2945 = vlaneseq
    %v2946 = vshrl.u32 %v2945, 7
    %v2947 = vsub.s32 %v2944, %v2946
    %v2948 = vrot.slane %v2940, %v2947
    %2949 = vrot.lane.b32.xlu0 %v2948, 96
    %v2950 = vpop.permute.xlu0 %2949
    %2952 = vst.msk [vmem:[#allocation3 + $0x20] sm:$0x3] %vm2295, %v2950
    %v2953 = vld [vmem:[#allocation2 + $0x88] sm:$0x3]
    %2954 = vst.msk [vmem:[#allocation3 + $0x22] sm:$0x3] %vm2251, %v2953
    %v2955 = vld [vmem:[#allocation2 + $0x8a] sm:$0x3]
    %v2958 = vunpack.c.l.s4 1983009808
    %v2959 = vunpack.c.0.s8 %v2958
    %v2960 = vlaneseq
    %v2961 = vshrl.u32 %v2960, 7
    %v2962 = vsub.s32 %v2959, %v2961
    %v2963 = vrot.slane %v2955, %v2962
    %2964 = vrot.lane.b32.xlu0 %v2963, 32
    %v2965 = vpop.permute.xlu0 %2964
    %2967 = vst.msk [vmem:[#allocation3 + $0x22] sm:$0x3] %vm2267, %v2965
    %v2968 = vld [vmem:[#allocation2 + $0x8c] sm:$0x3]
    %v2971 = vunpack.c.l.s4 1983009808
    %v2972 = vunpack.c.0.s8 %v2971
    %v2973 = vlaneseq
    %v2974 = vshrl.u32 %v2973, 7
    %v2975 = vsub.s32 %v2972, %v2974
    %v2976 = vrot.slane %v2968, %v2975
    %2977 = vrot.lane.b32.xlu0 %v2976, 64
    %v2978 = vpop.permute.xlu0 %2977
    %2980 = vst.msk [vmem:[#allocation3 + $0x22] sm:$0x3] %vm2281, %v2978
    %v2981 = vld [vmem:[#allocation2 + $0x8e] sm:$0x3]
    %v2984 = vunpack.c.l.s4 1983009808
    %v2985 = vunpack.c.0.s8 %v2984
    %v2986 = vlaneseq
    %v2987 = vshrl.u32 %v2986, 7
    %v2988 = vsub.s32 %v2985, %v2987
    %v2989 = vrot.slane %v2981, %v2988
    %2990 = vrot.lane.b32.xlu0 %v2989, 96
    %v2991 = vpop.permute.xlu0 %2990
    %2993 = vst.msk [vmem:[#allocation3 + $0x22] sm:$0x3] %vm2295, %v2991
    %v2994 = vld [vmem:[#allocation2 + $0x90] sm:$0x3]
    %2995 = vst.msk [vmem:[#allocation3 + $0x24] sm:$0x3] %vm2251, %v2994
    %v2996 = vld [vmem:[#allocation2 + $0x92] sm:$0x3]
    %v2999 = vunpack.c.l.s4 1983009808
    %v3000 = vunpack.c.0.s8 %v2999
    %v3001 = vlaneseq
    %v3002 = vshrl.u32 %v3001, 7
    %v3003 = vsub.s32 %v3000, %v3002
    %v3004 = vrot.slane %v2996, %v3003
    %3005 = vrot.lane.b32.xlu0 %v3004, 32
    %v3006 = vpop.permute.xlu0 %3005
    %3008 = vst.msk [vmem:[#allocation3 + $0x24] sm:$0x3] %vm2267, %v3006
    %v3009 = vld [vmem:[#allocation2 + $0x94] sm:$0x3]
    %v3012 = vunpack.c.l.s4 1983009808
    %v3013 = vunpack.c.0.s8 %v3012
    %v3014 = vlaneseq
    %v3015 = vshrl.u32 %v3014, 7
    %v3016 = vsub.s32 %v3013, %v3015
    %v3017 = vrot.slane %v3009, %v3016
    %3018 = vrot.lane.b32.xlu0 %v3017, 64
    %v3019 = vpop.permute.xlu0 %3018
    %3021 = vst.msk [vmem:[#allocation3 + $0x24] sm:$0x3] %vm2281, %v3019
    %v3022 = vld [vmem:[#allocation2 + $0x96] sm:$0x3]
    %v3025 = vunpack.c.l.s4 1983009808
    %v3026 = vunpack.c.0.s8 %v3025
    %v3027 = vlaneseq
    %v3028 = vshrl.u32 %v3027, 7
    %v3029 = vsub.s32 %v3026, %v3028
    %v3030 = vrot.slane %v3022, %v3029
    %3031 = vrot.lane.b32.xlu0 %v3030, 96
    %v3032 = vpop.permute.xlu0 %3031
    %3034 = vst.msk [vmem:[#allocation3 + $0x24] sm:$0x3] %vm2295, %v3032
    %v3035 = vld [vmem:[#allocation2 + $0x98] sm:$0x3]
    %3036 = vst.msk [vmem:[#allocation3 + $0x26] sm:$0x3] %vm2251, %v3035
    %v3037 = vld [vmem:[#allocation2 + $0x9a] sm:$0x3]
    %v3040 = vunpack.c.l.s4 1983009808
    %v3041 = vunpack.c.0.s8 %v3040
    %v3042 = vlaneseq
    %v3043 = vshrl.u32 %v3042, 7
    %v3044 = vsub.s32 %v3041, %v3043
    %v3045 = vrot.slane %v3037, %v3044
    %3046 = vrot.lane.b32.xlu0 %v3045, 32
    %v3047 = vpop.permute.xlu0 %3046
    %3049 = vst.msk [vmem:[#allocation3 + $0x26] sm:$0x3] %vm2267, %v3047
    %v3050 = vld [vmem:[#allocation2 + $0x9c] sm:$0x3]
    %v3053 = vunpack.c.l.s4 1983009808
    %v3054 = vunpack.c.0.s8 %v3053
    %v3055 = vlaneseq
    %v3056 = vshrl.u32 %v3055, 7
    %v3057 = vsub.s32 %v3054, %v3056
    %v3058 = vrot.slane %v3050, %v3057
    %3059 = vrot.lane.b32.xlu0 %v3058, 64
    %v3060 = vpop.permute.xlu0 %3059
    %3062 = vst.msk [vmem:[#allocation3 + $0x26] sm:$0x3] %vm2281, %v3060
    %v3063 = vld [vmem:[#allocation2 + $0x9e] sm:$0x3]
    %v3066 = vunpack.c.l.s4 1983009808
    %v3067 = vunpack.c.0.s8 %v3066
    %v3068 = vlaneseq
    %v3069 = vshrl.u32 %v3068, 7
    %v3070 = vsub.s32 %v3067, %v3069
    %v3071 = vrot.slane %v3063, %v3070
    %3072 = vrot.lane.b32.xlu0 %v3071, 96
    %v3073 = vpop.permute.xlu0 %3072
    %3075 = vst.msk [vmem:[#allocation3 + $0x26] sm:$0x3] %vm2295, %v3073
    %v3076 = vld [vmem:[#allocation2 + $0xa0] sm:$0x3]
    %3077 = vst.msk [vmem:[#allocation3 + $0x28] sm:$0x3] %vm2251, %v3076
    %v3078 = vld [vmem:[#allocation3] sm:$0xff]
    %v3079 = vld [vmem:[#allocation3 + $0x8] sm:$0xff]
    %v3080 = vld [vmem:[#allocation3 + $0x10] sm:$0xff]
    %v3081 = vld [vmem:[#allocation3 + $0x18] sm:$0xff]
    %v3082 = vld [vmem:[#allocation3 + $0x20] sm:$0xff]
    %v3083 = vld [vmem:[#allocation3 + $0x28] sm:$0x3]
    %v3090 = vcombine.high %v3078, %v3078
    %v3092 = vunpack.c.l.s4 1983009808
    %v3093 = vunpack.c.0.s8 %v3092
    %v3094 = vlaneseq
    %v3095 = vshrl.u32 %v3094, 7
    %v3096 = vsub.s32 %v3093, %v3095
    %v3097 = vrot.slane %v3078, %v3096
    %v3099 = vunpack.c.l.s4 1983009808
    %v3100 = vunpack.c.0.s8 %v3099
    %v3101 = vlaneseq
    %v3102 = vshrl.u32 %v3101, 7
    %v3103 = vsub.s32 %v3100, %v3102
    %v3104 = vrot.slane %v3090, %v3103
    %v3105 = vcombine.high %v3097, %v3097
    %v3106 = vcombine.high %v3104, %v3104
    %v3107 = vcombine.high %v3079, %v3079
    %v3109 = vunpack.c.l.s4 1983009808
    %v3110 = vunpack.c.0.s8 %v3109
    %v3111 = vlaneseq
    %v3112 = vshrl.u32 %v3111, 7
    %v3113 = vsub.s32 %v3110, %v3112
    %v3114 = vrot.slane %v3079, %v3113
    %v3116 = vunpack.c.l.s4 1983009808
    %v3117 = vunpack.c.0.s8 %v3116
    %v3118 = vlaneseq
    %v3119 = vshrl.u32 %v3118, 7
    %v3120 = vsub.s32 %v3117, %v3119
    %v3121 = vrot.slane %v3107, %v3120
    %v3122 = vcombine.high %v3114, %v3114
    %v3123 = vcombine.high %v3121, %v3121
    %v3124 = vcombine.high %v3080, %v3080
    %v3126 = vunpack.c.l.s4 1983009808
    %v3127 = vunpack.c.0.s8 %v3126
    %v3128 = vlaneseq
    %v3129 = vshrl.u32 %v3128, 7
    %v3130 = vsub.s32 %v3127, %v3129
    %v3131 = vrot.slane %v3080, %v3130
    %v3133 = vunpack.c.l.s4 1983009808
    %v3134 = vunpack.c.0.s8 %v3133
    %v3135 = vlaneseq
    %v3136 = vshrl.u32 %v3135, 7
    %v3137 = vsub.s32 %v3134, %v3136
    %v3138 = vrot.slane %v3124, %v3137
    %v3139 = vcombine.high %v3131, %v3131
    %v3140 = vcombine.high %v3138, %v3138
    %v3141 = vcombine.high %v3081, %v3081
    %v3143 = vunpack.c.l.s4 1983009808
    %v3144 = vunpack.c.0.s8 %v3143
    %v3145 = vlaneseq
    %v3146 = vshrl.u32 %v3145, 7
    %v3147 = vsub.s32 %v3144, %v3146
    %v3148 = vrot.slane %v3081, %v3147
    %v3150 = vunpack.c.l.s4 1983009808
    %v3151 = vunpack.c.0.s8 %v3150
    %v3152 = vlaneseq
    %v3153 = vshrl.u32 %v3152, 7
    %v3154 = vsub.s32 %v3151, %v3153
    %v3155 = vrot.slane %v3141, %v3154
    %v3156 = vcombine.high %v3148, %v3148
    %v3157 = vcombine.high %v3155, %v3155
    %v3158 = vcombine.high %v3082, %v3082
    %v3160 = vunpack.c.l.s4 1983009808
    %v3161 = vunpack.c.0.s8 %v3160
    %v3162 = vlaneseq
    %v3163 = vshrl.u32 %v3162, 7
    %v3164 = vsub.s32 %v3161, %v3163
    %v3165 = vrot.slane %v3082, %v3164
    %v3167 = vunpack.c.l.s4 1983009808
    %v3168 = vunpack.c.0.s8 %v3167
    %v3169 = vlaneseq
    %v3170 = vshrl.u32 %v3169, 7
    %v3171 = vsub.s32 %v3168, %v3170
    %v3172 = vrot.slane %v3158, %v3171
    %v3173 = vcombine.high %v3165, %v3165
    %v3174 = vcombine.high %v3172, %v3172
    %v3176 = vunpack.c.l.s4 1983009808
    %v3177 = vunpack.c.0.s8 %v3176
    %v3178 = vlaneseq
    %v3179 = vshrl.u32 %v3178, 7
    %v3180 = vsub.s32 %v3177, %v3179
    %v3181 = vrot.slane %v3083, %v3180
    %v3203 = vpack.c.bf16 %v3097, %v3097
    %v3204 = vpack.c.bf16 %v3105, %v3105
    %v3205 = vpack.c.bf16 %v3104, %v3104
    %v3206 = vpack.c.bf16 %v3106, %v3106
    %v3207 = vpack.c.bf16 %v3114, %v3114
    %v3208 = vpack.c.bf16 %v3122, %v3122
    %v3209 = vpack.c.bf16 %v3121, %v3121
    %v3210 = vpack.c.bf16 %v3123, %v3123
    %v3211 = vpack.c.bf16 %v3131, %v3131
    %v3212 = vpack.c.bf16 %v3139, %v3139
    %v3213 = vpack.c.bf16 %v3138, %v3138
    %v3214 = vpack.c.bf16 %v3140, %v3140
    %v3215 = vpack.c.bf16 %v3148, %v3148
    %v3216 = vpack.c.bf16 %v3156, %v3156
    %v3217 = vpack.c.bf16 %v3155, %v3155
    %v3218 = vpack.c.bf16 %v3157, %v3157
    %v3219 = vpack.c.bf16 %v3165, %v3165
    %v3220 = vpack.c.bf16 %v3173, %v3173
    %v3221 = vpack.c.bf16 %v3172, %v3172
    %v3222 = vpack.c.bf16 %v3174, %v3174
    %v3223 = vpack.c.bf16 %v3181, %v3181
    %v3224 = vld [vmem:[%s5] sm:$0xff]
    %v3225 = vld [vmem:[%s5 + $0x8] sm:$0xff]
    %v3226 = vld [vmem:[%s5 + $0x10] sm:$0xff]
    %v3227 = vld [vmem:[%s5 + $0x18] sm:$0xff]
    %v3228 = vld [vmem:[%s5 + $0x20] sm:$0xff]
    %v3229 = vld [vmem:[%s5 + $0x28] sm:$0xff]
    %v3230 = vld [vmem:[%s5 + $0x30] sm:$0xff]
    %v3231 = vld [vmem:[%s5 + $0x38] sm:$0xff]
    %v3232 = vld [vmem:[%s5 + $0x40] sm:$0xff]
    %v3233 = vld [vmem:[%s5 + $0x48] sm:$0xff]
    %v3234 = vld [vmem:[%s5 + $0x50] sm:$0xff]
    %v3235 = vld [vmem:[%s5 + $0x58] sm:$0xff]
    %v3236 = vld [vmem:[%s5 + $0x60] sm:$0xff]
    %v3237 = vld [vmem:[%s5 + $0x68] sm:$0xff]
    %v3238 = vld [vmem:[%s5 + $0x70] sm:$0xff]
    %v3239 = vld [vmem:[%s5 + $0x78] sm:$0xff]
    %v3240 = vld [vmem:[%s5 + $0x80] sm:$0xff]
    %v3241 = vld [vmem:[%s5 + $0x88] sm:$0xff]
    %v3242 = vld [vmem:[%s5 + $0x90] sm:$0xff]
    %v3243 = vld [vmem:[%s5 + $0x98] sm:$0xff]
    %v3244 = vld [vmem:[%s5 + $0xa0] sm:$0xff]
    %v3245 = vld [vmem:[%s5 + $0xa8] sm:$0xff]
    %v3246 = vld [vmem:[%s5 + $0xb0] sm:$0xff]
    %v3247 = vld [vmem:[%s5 + $0xb8] sm:$0xff]
    %v3248 = vld [vmem:[%s5 + $0xc0] sm:$0xff]
    %v3249 = vld [vmem:[%s5 + $0xc8] sm:$0xff]
    %v3250 = vld [vmem:[%s5 + $0xd0] sm:$0xff]
    %v3251 = vld [vmem:[%s5 + $0xd8] sm:$0xff]
    %v3252 = vld [vmem:[%s5 + $0xe0] sm:$0xff]
    %v3253 = vld [vmem:[%s5 + $0xe8] sm:$0xff]
    %v3254 = vld [vmem:[%s5 + $0xf0] sm:$0xff]
    %v3255 = vld [vmem:[%s5 + $0xf8] sm:$0xff]
    %v3256 = vld [vmem:[%s5 + $0x100] sm:$0xff]
    %v3257 = vld [vmem:[%s5 + $0x108] sm:$0xff]
    %v3258 = vld [vmem:[%s5 + $0x110] sm:$0xff]
    %v3259 = vld [vmem:[%s5 + $0x118] sm:$0xff]
    %v3260 = vld [vmem:[%s5 + $0x120] sm:$0xff]
    %v3261 = vld [vmem:[%s5 + $0x128] sm:$0xff]
    %v3262 = vld [vmem:[%s5 + $0x130] sm:$0xff]
    %v3263 = vld [vmem:[%s5 + $0x138] sm:$0xff]
    %v3264 = vld [vmem:[%s5 + $0x140] sm:$0xff]
    %v3265 = vld [vmem:[%s5 + $0x148] sm:$0xff]
    %v3266 = vld [vmem:[%s5 + $0x150] sm:$0xff]
    %v3267 = vld [vmem:[%s5 + $0x158] sm:$0xff]
    %v3268 = vld [vmem:[%s5 + $0x160] sm:$0xff]
    %v3269 = vld [vmem:[%s5 + $0x168] sm:$0xff]
    %v3270 = vld [vmem:[%s5 + $0x170] sm:$0xff]
    %v3271 = vld [vmem:[%s5 + $0x178] sm:$0xff]
    %v3272 = vld [vmem:[%s5 + $0x180] sm:$0xff]
    %v3273 = vld [vmem:[%s5 + $0x188] sm:$0xff]
    %v3274 = vld [vmem:[%s5 + $0x190] sm:$0xff]
    %v3275 = vld [vmem:[%s5 + $0x198] sm:$0xff]
    %v3276 = vld [vmem:[%s5 + $0x1a0] sm:$0xff]
    %v3277 = vld [vmem:[%s5 + $0x1a8] sm:$0xff]
    %v3278 = vld [vmem:[%s5 + $0x1b0] sm:$0xff]
    %v3279 = vld [vmem:[%s5 + $0x1b8] sm:$0xff]
    %v3280 = vld [vmem:[%s5 + $0x1c0] sm:$0xff]
    %v3281 = vld [vmem:[%s5 + $0x1c8] sm:$0xff]
    %v3282 = vld [vmem:[%s5 + $0x1d0] sm:$0xff]
    %v3283 = vld [vmem:[%s5 + $0x1d8] sm:$0xff]
    %v3284 = vld [vmem:[%s5 + $0x1e0] sm:$0xff]
    %v3285 = vld [vmem:[%s5 + $0x1e8] sm:$0xff]
    %v3286 = vld [vmem:[%s5 + $0x1f0] sm:$0xff]
    %v3287 = vld [vmem:[%s5 + $0x1f8] sm:$0xff]
    %v3288 = vld [vmem:[%s5 + $0x200] sm:$0xff]
    %v3289 = vld [vmem:[%s5 + $0x208] sm:$0xff]
    %v3290 = vld [vmem:[%s5 + $0x210] sm:$0xff]
    %v3291 = vld [vmem:[%s5 + $0x218] sm:$0xff]
    %v3292 = vld [vmem:[%s5 + $0x220] sm:$0xff]
    %v3293 = vld [vmem:[%s5 + $0x228] sm:$0xff]
    %v3294 = vld [vmem:[%s5 + $0x230] sm:$0xff]
    %v3295 = vld [vmem:[%s5 + $0x238] sm:$0xff]
    %v3296 = vld [vmem:[%s5 + $0x240] sm:$0xff]
    %v3297 = vld [vmem:[%s5 + $0x248] sm:$0xff]
    %v3298 = vld [vmem:[%s5 + $0x250] sm:$0xff]
    %v3299 = vld [vmem:[%s5 + $0x258] sm:$0xff]
    %v3300 = vld [vmem:[%s5 + $0x260] sm:$0xff]
    %v3301 = vld [vmem:[%s5 + $0x268] sm:$0xff]
    %v3302 = vld [vmem:[%s5 + $0x270] sm:$0xff]
    %v3303 = vld [vmem:[%s5 + $0x278] sm:$0xff]
    %v3304 = vld [vmem:[%s5 + $0x280] sm:$0xff]
    %v3305 = vld [vmem:[%s5 + $0x288] sm:$0xff]
    %v3306 = vld [vmem:[%s5 + $0x290] sm:$0xff]
    %v3307 = vld [vmem:[%s5 + $0x298] sm:$0xff]
    %v3308 = vld [vmem:[%s5 + $0x2a0] sm:$0xff]
    %v3309 = vld [vmem:[%s5 + $0x2a8] sm:$0xff]
    %v3310 = vld [vmem:[%s5 + $0x2b0] sm:$0xff]
    %v3311 = vld [vmem:[%s5 + $0x2b8] sm:$0xff]
    %v3312 = vld [vmem:[%s5 + $0x2c0] sm:$0xff]
    %v3313 = vld [vmem:[%s5 + $0x2c8] sm:$0xff]
    %v3314 = vld [vmem:[%s5 + $0x2d0] sm:$0xff]
    %v3315 = vld [vmem:[%s5 + $0x2d8] sm:$0xff]
    %v3316 = vld [vmem:[%s5 + $0x2e0] sm:$0xff]
    %v3317 = vld [vmem:[%s5 + $0x2e8] sm:$0xff]
    %v3318 = vld [vmem:[%s5 + $0x2f0] sm:$0xff]
    %v3319 = vld [vmem:[%s5 + $0x2f8] sm:$0xff]
    %v3320 = vld [vmem:[%s5 + $0x300] sm:$0xff]
    %v3321 = vld [vmem:[%s5 + $0x308] sm:$0xff]
    %v3322 = vld [vmem:[%s5 + $0x310] sm:$0xff]
    %v3323 = vld [vmem:[%s5 + $0x318] sm:$0xff]
    %v3324 = vld [vmem:[%s5 + $0x320] sm:$0xff]
    %v3325 = vld [vmem:[%s5 + $0x328] sm:$0xff]
    %v3326 = vld [vmem:[%s5 + $0x330] sm:$0xff]
    %v3327 = vld [vmem:[%s5 + $0x338] sm:$0xff]
    %v3328 = vld [vmem:[%s5 + $0x340] sm:$0xff]
    %v3329 = vld [vmem:[%s5 + $0x348] sm:$0xff]
    %v3330 = vld [vmem:[%s5 + $0x350] sm:$0xff]
    %v3331 = vld [vmem:[%s5 + $0x358] sm:$0xff]
    %v3332 = vld [vmem:[%s5 + $0x360] sm:$0xff]
    %v3333 = vld [vmem:[%s5 + $0x368] sm:$0xff]
    %v3334 = vld [vmem:[%s5 + $0x370] sm:$0xff]
    %v3335 = vld [vmem:[%s5 + $0x378] sm:$0xff]
    %v3336 = vld [vmem:[%s5 + $0x380] sm:$0xff]
    %v3337 = vld [vmem:[%s5 + $0x388] sm:$0xff]
    %v3338 = vld [vmem:[%s5 + $0x390] sm:$0xff]
    %v3339 = vld [vmem:[%s5 + $0x398] sm:$0xff]
    %v3340 = vld [vmem:[%s5 + $0x3a0] sm:$0xff]
    %v3341 = vld [vmem:[%s5 + $0x3a8] sm:$0xff]
    %v3342 = vld [vmem:[%s5 + $0x3b0] sm:$0xff]
    %v3343 = vld [vmem:[%s5 + $0x3b8] sm:$0xff]
    %v3344 = vld [vmem:[%s5 + $0x3c0] sm:$0xff]
    %v3345 = vld [vmem:[%s5 + $0x3c8] sm:$0xff]
    %v3346 = vld [vmem:[%s5 + $0x3d0] sm:$0xff]
    %v3347 = vld [vmem:[%s5 + $0x3d8] sm:$0xff]
    %v3348 = vld [vmem:[%s5 + $0x3e0] sm:$0xff]
    %v3349 = vld [vmem:[%s5 + $0x3e8] sm:$0xff]
    %v3350 = vld [vmem:[%s5 + $0x3f0] sm:$0xff]
    %v3351 = vld [vmem:[%s5 + $0x3f8] sm:$0xff]
    %v3352 = vld [vmem:[%s5 + $0x400] sm:$0xff]
    %v3353 = vld [vmem:[%s5 + $0x408] sm:$0xff]
    %v3354 = vld [vmem:[%s5 + $0x410] sm:$0xff]
    %v3355 = vld [vmem:[%s5 + $0x418] sm:$0xff]
    %v3356 = vld [vmem:[%s5 + $0x420] sm:$0xff]
    %v3357 = vld [vmem:[%s5 + $0x428] sm:$0xff]
    %v3358 = vld [vmem:[%s5 + $0x430] sm:$0xff]
    %v3359 = vld [vmem:[%s5 + $0x438] sm:$0xff]
    %v3360 = vld [vmem:[%s5 + $0x440] sm:$0xff]
    %v3361 = vld [vmem:[%s5 + $0x448] sm:$0xff]
    %v3362 = vld [vmem:[%s5 + $0x450] sm:$0xff]
    %v3363 = vld [vmem:[%s5 + $0x458] sm:$0xff]
    %v3364 = vld [vmem:[%s5 + $0x460] sm:$0xff]
    %v3365 = vld [vmem:[%s5 + $0x468] sm:$0xff]
    %v3366 = vld [vmem:[%s5 + $0x470] sm:$0xff]
    %v3367 = vld [vmem:[%s5 + $0x478] sm:$0xff]
    %v3368 = vld [vmem:[%s5 + $0x480] sm:$0xff]
    %v3369 = vld [vmem:[%s5 + $0x488] sm:$0xff]
    %v3370 = vld [vmem:[%s5 + $0x490] sm:$0xff]
    %v3371 = vld [vmem:[%s5 + $0x498] sm:$0xff]
    %v3372 = vld [vmem:[%s5 + $0x4a0] sm:$0xff]
    %v3373 = vld [vmem:[%s5 + $0x4a8] sm:$0xff]
    %v3374 = vld [vmem:[%s5 + $0x4b0] sm:$0xff]
    %v3375 = vld [vmem:[%s5 + $0x4b8] sm:$0xff]
    %v3376 = vld [vmem:[%s5 + $0x4c0] sm:$0xff]
    %v3377 = vld [vmem:[%s5 + $0x4c8] sm:$0xff]
    %v3378 = vld [vmem:[%s5 + $0x4d0] sm:$0xff]
    %v3379 = vld [vmem:[%s5 + $0x4d8] sm:$0xff]
    %v3380 = vld [vmem:[%s5 + $0x4e0] sm:$0xff]
    %v3381 = vld [vmem:[%s5 + $0x4e8] sm:$0xff]
    %v3382 = vld [vmem:[%s5 + $0x4f0] sm:$0xff]
    %v3383 = vld [vmem:[%s5 + $0x4f8] sm:$0xff]
    %v3384 = vld [vmem:[%s5 + $0x500] sm:$0xff]
    %v3385 = vld [vmem:[%s5 + $0x508] sm:$0xff]
    %v3386 = vld [vmem:[%s5 + $0x510] sm:$0xff]
    %v3387 = vld [vmem:[%s5 + $0x518] sm:$0xff]
    %v3388 = vld [vmem:[%s5 + $0x520] sm:$0xff]
    %v3389 = vld [vmem:[%s5 + $0x528] sm:$0xff]
    %v3390 = vld [vmem:[%s5 + $0x530] sm:$0xff]
    %v3391 = vld [vmem:[%s5 + $0x538] sm:$0xff]
    %v3392 = vld [vmem:[%s5 + $0x540] sm:$0xff]
    %v3393 = vld [vmem:[%s5 + $0x548] sm:$0xff]
    %v3394 = vld [vmem:[%s5 + $0x550] sm:$0xff]
    %v3395 = vld [vmem:[%s5 + $0x558] sm:$0xff]
    %v3396 = vld [vmem:[%s5 + $0x560] sm:$0xff]
    %v3397 = vld [vmem:[%s5 + $0x568] sm:$0xff]
    %v3398 = vld [vmem:[%s5 + $0x570] sm:$0xff]
    %v3399 = vld [vmem:[%s5 + $0x578] sm:$0xff]
    %v3400 = vld [vmem:[%s5 + $0x580] sm:$0xff]
    %v3401 = vld [vmem:[%s5 + $0x588] sm:$0xff]
    %v3402 = vld [vmem:[%s5 + $0x590] sm:$0xff]
    %v3403 = vld [vmem:[%s5 + $0x598] sm:$0xff]
    %v3404 = vld [vmem:[%s5 + $0x5a0] sm:$0xff]
    %v3405 = vld [vmem:[%s5 + $0x5a8] sm:$0xff]
    %v3406 = vld [vmem:[%s5 + $0x5b0] sm:$0xff]
    %v3407 = vld [vmem:[%s5 + $0x5b8] sm:$0xff]
    %v3408 = vld [vmem:[%s5 + $0x5c0] sm:$0xff]
    %v3409 = vld [vmem:[%s5 + $0x5c8] sm:$0xff]
    %v3410 = vld [vmem:[%s5 + $0x5d0] sm:$0xff]
    %v3411 = vld [vmem:[%s5 + $0x5d8] sm:$0xff]
    %v3412 = vld [vmem:[%s5 + $0x5e0] sm:$0xff]
    %v3413 = vld [vmem:[%s5 + $0x5e8] sm:$0xff]
    %v3414 = vld [vmem:[%s5 + $0x5f0] sm:$0xff]
    %v3415 = vld [vmem:[%s5 + $0x5f8] sm:$0xff]
    %v3416 = vld [vmem:[%s5 + $0x600] sm:$0xff]
    %v3417 = vld [vmem:[%s5 + $0x608] sm:$0xff]
    %v3418 = vld [vmem:[%s5 + $0x610] sm:$0xff]
    %v3419 = vld [vmem:[%s5 + $0x618] sm:$0xff]
    %v3420 = vld [vmem:[%s5 + $0x620] sm:$0xff]
    %v3421 = vld [vmem:[%s5 + $0x628] sm:$0xff]
    %v3422 = vld [vmem:[%s5 + $0x630] sm:$0xff]
    %v3423 = vld [vmem:[%s5 + $0x638] sm:$0xff]
    %v3424 = vld [vmem:[%s5 + $0x640] sm:$0xff]
    %v3425 = vld [vmem:[%s5 + $0x648] sm:$0xff]
    %v3426 = vld [vmem:[%s5 + $0x650] sm:$0xff]
    %v3427 = vld [vmem:[%s5 + $0x658] sm:$0xff]
    %v3428 = vld [vmem:[%s5 + $0x660] sm:$0xff]
    %v3429 = vld [vmem:[%s5 + $0x668] sm:$0xff]
    %v3430 = vld [vmem:[%s5 + $0x670] sm:$0xff]
    %v3431 = vld [vmem:[%s5 + $0x678] sm:$0xff]
    %v3432 = vld [vmem:[%s5 + $0x680] sm:$0xff]
    %v3433 = vld [vmem:[%s5 + $0x688] sm:$0xff]
    %v3434 = vld [vmem:[%s5 + $0x690] sm:$0xff]
    %v3435 = vld [vmem:[%s5 + $0x698] sm:$0xff]
    %v3436 = vld [vmem:[%s5 + $0x6a0] sm:$0xff]
    %v3437 = vld [vmem:[%s5 + $0x6a8] sm:$0xff]
    %v3438 = vld [vmem:[%s5 + $0x6b0] sm:$0xff]
    %v3439 = vld [vmem:[%s5 + $0x6b8] sm:$0xff]
    %v3440 = vld [vmem:[%s5 + $0x6c0] sm:$0xff]
    %v3441 = vld [vmem:[%s5 + $0x6c8] sm:$0xff]
    %v3442 = vld [vmem:[%s5 + $0x6d0] sm:$0xff]
    %v3443 = vld [vmem:[%s5 + $0x6d8] sm:$0xff]
    %v3444 = vld [vmem:[%s5 + $0x6e0] sm:$0xff]
    %v3445 = vld [vmem:[%s5 + $0x6e8] sm:$0xff]
    %v3446 = vld [vmem:[%s5 + $0x6f0] sm:$0xff]
    %v3447 = vld [vmem:[%s5 + $0x6f8] sm:$0xff]
    %v3448 = vld [vmem:[%s5 + $0x700] sm:$0xff]
    %v3449 = vld [vmem:[%s5 + $0x708] sm:$0xff]
    %v3450 = vld [vmem:[%s5 + $0x710] sm:$0xff]
    %v3451 = vld [vmem:[%s5 + $0x718] sm:$0xff]
    %v3452 = vld [vmem:[%s5 + $0x720] sm:$0xff]
    %v3453 = vld [vmem:[%s5 + $0x728] sm:$0xff]
    %v3454 = vld [vmem:[%s5 + $0x730] sm:$0xff]
    %v3455 = vld [vmem:[%s5 + $0x738] sm:$0xff]
    %v3456 = vld [vmem:[%s5 + $0x740] sm:$0xff]
    %v3457 = vld [vmem:[%s5 + $0x748] sm:$0xff]
    %v3458 = vld [vmem:[%s5 + $0x750] sm:$0xff]
    %v3459 = vld [vmem:[%s5 + $0x758] sm:$0xff]
    %v3460 = vld [vmem:[%s5 + $0x760] sm:$0xff]
    %v3461 = vld [vmem:[%s5 + $0x768] sm:$0xff]
    %v3462 = vld [vmem:[%s5 + $0x770] sm:$0xff]
    %v3463 = vld [vmem:[%s5 + $0x778] sm:$0xff]
    %v3464 = vld [vmem:[%s5 + $0x780] sm:$0xff]
    %v3465 = vld [vmem:[%s5 + $0x788] sm:$0xff]
    %v3466 = vld [vmem:[%s5 + $0x790] sm:$0xff]
    %v3467 = vld [vmem:[%s5 + $0x798] sm:$0xff]
    %v3468 = vld [vmem:[%s5 + $0x7a0] sm:$0xff]
    %v3469 = vld [vmem:[%s5 + $0x7a8] sm:$0xff]
    %v3470 = vld [vmem:[%s5 + $0x7b0] sm:$0xff]
    %v3471 = vld [vmem:[%s5 + $0x7b8] sm:$0xff]
    %v3472 = vld [vmem:[%s5 + $0x7c0] sm:$0xff]
    %v3473 = vld [vmem:[%s5 + $0x7c8] sm:$0xff]
    %v3474 = vld [vmem:[%s5 + $0x7d0] sm:$0xff]
    %v3475 = vld [vmem:[%s5 + $0x7d8] sm:$0xff]
    %v3476 = vld [vmem:[%s5 + $0x7e0] sm:$0xff]
    %v3477 = vld [vmem:[%s5 + $0x7e8] sm:$0xff]
    %v3478 = vld [vmem:[%s5 + $0x7f0] sm:$0xff]
    %v3479 = vld [vmem:[%s5 + $0x7f8] sm:$0xff]
    %v3480 = vld [vmem:[%s5 + $0x800] sm:$0xff]
    %v3481 = vld [vmem:[%s5 + $0x808] sm:$0xff]
    %v3482 = vld [vmem:[%s5 + $0x810] sm:$0xff]
    %v3483 = vld [vmem:[%s5 + $0x818] sm:$0xff]
    %v3484 = vld [vmem:[%s5 + $0x820] sm:$0xff]
    %v3485 = vld [vmem:[%s5 + $0x828] sm:$0xff]
    %v3486 = vld [vmem:[%s5 + $0x830] sm:$0xff]
    %v3487 = vld [vmem:[%s5 + $0x838] sm:$0xff]
    %v3488 = vld [vmem:[%s5 + $0x840] sm:$0xff]
    %v3489 = vld [vmem:[%s5 + $0x848] sm:$0xff]
    %v3490 = vld [vmem:[%s5 + $0x850] sm:$0xff]
    %v3491 = vld [vmem:[%s5 + $0x858] sm:$0xff]
    %v3492 = vld [vmem:[%s5 + $0x860] sm:$0xff]
    %v3493 = vld [vmem:[%s5 + $0x868] sm:$0xff]
    %v3494 = vld [vmem:[%s5 + $0x870] sm:$0xff]
    %v3495 = vld [vmem:[%s5 + $0x878] sm:$0xff]
    %v3496 = vld [vmem:[%s5 + $0x880] sm:$0xff]
    %v3497 = vld [vmem:[%s5 + $0x888] sm:$0xff]
    %v3498 = vld [vmem:[%s5 + $0x890] sm:$0xff]
    %v3499 = vld [vmem:[%s5 + $0x898] sm:$0xff]
    %v3500 = vld [vmem:[%s5 + $0x8a0] sm:$0xff]
    %v3501 = vld [vmem:[%s5 + $0x8a8] sm:$0xff]
    %v3502 = vld [vmem:[%s5 + $0x8b0] sm:$0xff]
    %v3503 = vld [vmem:[%s5 + $0x8b8] sm:$0xff]
    %v3504 = vld [vmem:[%s5 + $0x8c0] sm:$0xff]
    %v3505 = vld [vmem:[%s5 + $0x8c8] sm:$0xff]
    %v3506 = vld [vmem:[%s5 + $0x8d0] sm:$0xff]
    %v3507 = vld [vmem:[%s5 + $0x8d8] sm:$0xff]
    %v3508 = vld [vmem:[%s5 + $0x8e0] sm:$0xff]
    %v3509 = vld [vmem:[%s5 + $0x8e8] sm:$0xff]
    %v3510 = vld [vmem:[%s5 + $0x8f0] sm:$0xff]
    %v3511 = vld [vmem:[%s5 + $0x8f8] sm:$0xff]
    %v3512 = vld [vmem:[%s5 + $0x900] sm:$0xff]
    %v3513 = vld [vmem:[%s5 + $0x908] sm:$0xff]
    %v3514 = vld [vmem:[%s5 + $0x910] sm:$0xff]
    %v3515 = vld [vmem:[%s5 + $0x918] sm:$0xff]
    %v3516 = vld [vmem:[%s5 + $0x920] sm:$0xff]
    %v3517 = vld [vmem:[%s5 + $0x928] sm:$0xff]
    %v3518 = vld [vmem:[%s5 + $0x930] sm:$0xff]
    %v3519 = vld [vmem:[%s5 + $0x938] sm:$0xff]
    %v3520 = vld [vmem:[%s5 + $0x940] sm:$0xff]
    %v3521 = vld [vmem:[%s5 + $0x948] sm:$0xff]
    %v3522 = vld [vmem:[%s5 + $0x950] sm:$0xff]
    %v3523 = vld [vmem:[%s5 + $0x958] sm:$0xff]
    %v3524 = vld [vmem:[%s5 + $0x960] sm:$0xff]
    %v3525 = vld [vmem:[%s5 + $0x968] sm:$0xff]
    %v3526 = vld [vmem:[%s5 + $0x970] sm:$0xff]
    %v3527 = vld [vmem:[%s5 + $0x978] sm:$0xff]
    %v3528 = vld [vmem:[%s5 + $0x980] sm:$0xff]
    %v3529 = vld [vmem:[%s5 + $0x988] sm:$0xff]
    %v3530 = vld [vmem:[%s5 + $0x990] sm:$0xff]
    %v3531 = vld [vmem:[%s5 + $0x998] sm:$0xff]
    %v3532 = vld [vmem:[%s5 + $0x9a0] sm:$0xff]
    %v3533 = vld [vmem:[%s5 + $0x9a8] sm:$0xff]
    %v3534 = vld [vmem:[%s5 + $0x9b0] sm:$0xff]
    %v3535 = vld [vmem:[%s5 + $0x9b8] sm:$0xff]
    %v3536 = vld [vmem:[%s5 + $0x9c0] sm:$0xff]
    %v3537 = vld [vmem:[%s5 + $0x9c8] sm:$0xff]
    %v3538 = vld [vmem:[%s5 + $0x9d0] sm:$0xff]
    %v3539 = vld [vmem:[%s5 + $0x9d8] sm:$0xff]
    %v3540 = vld [vmem:[%s5 + $0x9e0] sm:$0xff]
    %v3541 = vld [vmem:[%s5 + $0x9e8] sm:$0xff]
    %v3542 = vld [vmem:[%s5 + $0x9f0] sm:$0xff]
    %v3543 = vld [vmem:[%s5 + $0x9f8] sm:$0xff]
    %v3544 = vld [vmem:[%s5 + $0xa00] sm:$0xff]
    %v3545 = vld [vmem:[%s5 + $0xa08] sm:$0xff]
    %v3546 = vld [vmem:[%s5 + $0xa10] sm:$0xff]
    %v3547 = vld [vmem:[%s5 + $0xa18] sm:$0xff]
    %v3548 = vld [vmem:[%s6] sm:$0x3]
    %v3550 = vlaneseq
    %v3551 = vshrl.u32 %v3550, 7
    %v3552 = vsub.s32 0, %v3551
    %v3553 = vrot.slane %v3548, %v3552
    %v3554 = vlaneseq
    %v3555 = vshrl.u32 %v3554, 7
    %v3556 = vsub.s32 1, %v3555
    %v3557 = vrot.slane %v3548, %v3556
    %v3884 = vunpack.c.l.b16 %v3224
    %v3885 = vunpack.c.h.b16 %v3224
    %v3886 = vunpack.c.l.b16 %v3225
    %v3887 = vunpack.c.h.b16 %v3225
    %v3888 = vunpack.c.l.b16 %v3226
    %v3889 = vunpack.c.h.b16 %v3226
    %v3890 = vunpack.c.l.b16 %v3227
    %v3891 = vunpack.c.h.b16 %v3227
    %v3892 = vunpack.c.l.b16 %v3228
    %v3893 = vunpack.c.h.b16 %v3228
    %v3894 = vunpack.c.l.b16 %v3229
    %v3895 = vunpack.c.h.b16 %v3229
    %v3896 = vunpack.c.l.b16 %v3230
    %v3897 = vunpack.c.h.b16 %v3230
    %v3898 = vunpack.c.l.b16 %v3231
    %v3899 = vunpack.c.h.b16 %v3231
    %v3900 = vunpack.c.l.b16 %v3232
    %v3901 = vunpack.c.h.b16 %v3232
    %v3902 = vunpack.c.l.b16 %v3233
    %v3903 = vunpack.c.h.b16 %v3233
    %v3904 = vunpack.c.l.b16 %v3234
    %v3905 = vunpack.c.h.b16 %v3234
    %v3906 = vunpack.c.l.b16 %v3235
    %v3907 = vunpack.c.h.b16 %v3235
    %v3908 = vunpack.c.l.b16 %v3236
    %v3909 = vunpack.c.h.b16 %v3236
    %v3910 = vunpack.c.l.b16 %v3237
    %v3911 = vunpack.c.h.b16 %v3237
    %v3912 = vunpack.c.l.b16 %v3238
    %v3913 = vunpack.c.h.b16 %v3238
    %v3914 = vunpack.c.l.b16 %v3239
    %v3915 = vunpack.c.h.b16 %v3239
    %v3916 = vunpack.c.l.b16 %v3240
    %v3917 = vunpack.c.h.b16 %v3240
    %v3918 = vunpack.c.l.b16 %v3241
    %v3919 = vunpack.c.h.b16 %v3241
    %v3920 = vunpack.c.l.b16 %v3242
    %v3921 = vunpack.c.h.b16 %v3242
    %v3922 = vunpack.c.l.b16 %v3243
    %v3923 = vunpack.c.h.b16 %v3243
    %v3924 = vunpack.c.l.b16 %v3244
    %v3925 = vunpack.c.h.b16 %v3244
    %v3926 = vunpack.c.l.b16 %v3245
    %v3927 = vunpack.c.h.b16 %v3245
    %v3928 = vunpack.c.l.b16 %v3246
    %v3929 = vunpack.c.h.b16 %v3246
    %v3930 = vunpack.c.l.b16 %v3247
    %v3931 = vunpack.c.h.b16 %v3247
    %v3932 = vunpack.c.l.b16 %v3248
    %v3933 = vunpack.c.h.b16 %v3248
    %v3934 = vunpack.c.l.b16 %v3249
    %v3935 = vunpack.c.h.b16 %v3249
    %v3936 = vunpack.c.l.b16 %v3250
    %v3937 = vunpack.c.h.b16 %v3250
    %v3938 = vunpack.c.l.b16 %v3251
    %v3939 = vunpack.c.h.b16 %v3251
    %v3940 = vunpack.c.l.b16 %v3252
    %v3941 = vunpack.c.h.b16 %v3252
    %v3942 = vunpack.c.l.b16 %v3253
    %v3943 = vunpack.c.h.b16 %v3253
    %v3944 = vunpack.c.l.b16 %v3254
    %v3945 = vunpack.c.h.b16 %v3254
    %v3946 = vunpack.c.l.b16 %v3255
    %v3947 = vunpack.c.h.b16 %v3255
    %v3948 = vunpack.c.l.b16 %v3256
    %v3949 = vunpack.c.h.b16 %v3256
    %v3950 = vunpack.c.l.b16 %v3257
    %v3951 = vunpack.c.h.b16 %v3257
    %v3952 = vunpack.c.l.b16 %v3258
    %v3953 = vunpack.c.h.b16 %v3258
    %v3954 = vunpack.c.l.b16 %v3259
    %v3955 = vunpack.c.h.b16 %v3259
    %v3956 = vunpack.c.l.b16 %v3260
    %v3957 = vunpack.c.h.b16 %v3260
    %v3958 = vunpack.c.l.b16 %v3261
    %v3959 = vunpack.c.h.b16 %v3261
    %v3960 = vunpack.c.l.b16 %v3262
    %v3961 = vunpack.c.h.b16 %v3262
    %v3962 = vunpack.c.l.b16 %v3263
    %v3963 = vunpack.c.h.b16 %v3263
    %v3964 = vunpack.c.l.b16 %v3264
    %v3965 = vunpack.c.h.b16 %v3264
    %v3966 = vunpack.c.l.b16 %v3265
    %v3967 = vunpack.c.h.b16 %v3265
    %v3968 = vunpack.c.l.b16 %v3266
    %v3969 = vunpack.c.h.b16 %v3266
    %v3970 = vunpack.c.l.b16 %v3267
    %v3971 = vunpack.c.h.b16 %v3267
    %v3972 = vunpack.c.l.b16 %v3268
    %v3973 = vunpack.c.h.b16 %v3268
    %v3974 = vunpack.c.l.b16 %v3269
    %v3975 = vunpack.c.h.b16 %v3269
    %v3976 = vunpack.c.l.b16 %v3270
    %v3977 = vunpack.c.h.b16 %v3270
    %v3978 = vunpack.c.l.b16 %v3271
    %v3979 = vunpack.c.h.b16 %v3271
    %v3980 = vunpack.c.l.b16 %v3272
    %v3981 = vunpack.c.h.b16 %v3272
    %v3982 = vunpack.c.l.b16 %v3273
    %v3983 = vunpack.c.h.b16 %v3273
    %v3984 = vunpack.c.l.b16 %v3274
    %v3985 = vunpack.c.h.b16 %v3274
    %v3986 = vunpack.c.l.b16 %v3275
    %v3987 = vunpack.c.h.b16 %v3275
    %v3988 = vunpack.c.l.b16 %v3276
    %v3989 = vunpack.c.h.b16 %v3276
    %v3990 = vunpack.c.l.b16 %v3277
    %v3991 = vunpack.c.h.b16 %v3277
    %v3992 = vunpack.c.l.b16 %v3278
    %v3993 = vunpack.c.h.b16 %v3278
    %v3994 = vunpack.c.l.b16 %v3279
    %v3995 = vunpack.c.h.b16 %v3279
    %v3996 = vunpack.c.l.b16 %v3280
    %v3997 = vunpack.c.h.b16 %v3280
    %v3998 = vunpack.c.l.b16 %v3281
    %v3999 = vunpack.c.h.b16 %v3281
    %v4000 = vunpack.c.l.b16 %v3282
    %v4001 = vunpack.c.h.b16 %v3282
    %v4002 = vunpack.c.l.b16 %v3283
    %v4003 = vunpack.c.h.b16 %v3283
    %v4004 = vunpack.c.l.b16 %v3284
    %v4005 = vunpack.c.h.b16 %v3284
    %v4006 = vunpack.c.l.b16 %v3285
    %v4007 = vunpack.c.h.b16 %v3285
    %v4008 = vunpack.c.l.b16 %v3286
    %v4009 = vunpack.c.h.b16 %v3286
    %v4010 = vunpack.c.l.b16 %v3287
    %v4011 = vunpack.c.h.b16 %v3287
    %v4012 = vunpack.c.l.b16 %v3288
    %v4013 = vunpack.c.h.b16 %v3288
    %v4014 = vunpack.c.l.b16 %v3289
    %v4015 = vunpack.c.h.b16 %v3289
    %v4016 = vunpack.c.l.b16 %v3290
    %v4017 = vunpack.c.h.b16 %v3290
    %v4018 = vunpack.c.l.b16 %v3291
    %v4019 = vunpack.c.h.b16 %v3291
    %v4020 = vunpack.c.l.b16 %v3292
    %v4021 = vunpack.c.h.b16 %v3292
    %v4022 = vunpack.c.l.b16 %v3293
    %v4023 = vunpack.c.h.b16 %v3293
    %v4024 = vunpack.c.l.b16 %v3294
    %v4025 = vunpack.c.h.b16 %v3294
    %v4026 = vunpack.c.l.b16 %v3295
    %v4027 = vunpack.c.h.b16 %v3295
    %v4028 = vunpack.c.l.b16 %v3296
    %v4029 = vunpack.c.h.b16 %v3296
    %v4030 = vunpack.c.l.b16 %v3297
    %v4031 = vunpack.c.h.b16 %v3297
    %v4032 = vunpack.c.l.b16 %v3298
    %v4033 = vunpack.c.h.b16 %v3298
    %v4034 = vunpack.c.l.b16 %v3299
    %v4035 = vunpack.c.h.b16 %v3299
    %v4036 = vunpack.c.l.b16 %v3300
    %v4037 = vunpack.c.h.b16 %v3300
    %v4038 = vunpack.c.l.b16 %v3301
    %v4039 = vunpack.c.h.b16 %v3301
    %v4040 = vunpack.c.l.b16 %v3302
    %v4041 = vunpack.c.h.b16 %v3302
    %v4042 = vunpack.c.l.b16 %v3303
    %v4043 = vunpack.c.h.b16 %v3303
    %v4044 = vunpack.c.l.b16 %v3304
    %v4045 = vunpack.c.h.b16 %v3304
    %v4046 = vunpack.c.l.b16 %v3305
    %v4047 = vunpack.c.h.b16 %v3305
    %v4048 = vunpack.c.l.b16 %v3306
    %v4049 = vunpack.c.h.b16 %v3306
    %v4050 = vunpack.c.l.b16 %v3307
    %v4051 = vunpack.c.h.b16 %v3307
    %v4052 = vunpack.c.l.b16 %v3308
    %v4053 = vunpack.c.h.b16 %v3308
    %v4054 = vunpack.c.l.b16 %v3309
    %v4055 = vunpack.c.h.b16 %v3309
    %v4056 = vunpack.c.l.b16 %v3310
    %v4057 = vunpack.c.h.b16 %v3310
    %v4058 = vunpack.c.l.b16 %v3311
    %v4059 = vunpack.c.h.b16 %v3311
    %v4060 = vunpack.c.l.b16 %v3312
    %v4061 = vunpack.c.h.b16 %v3312
    %v4062 = vunpack.c.l.b16 %v3313
    %v4063 = vunpack.c.h.b16 %v3313
    %v4064 = vunpack.c.l.b16 %v3314
    %v4065 = vunpack.c.h.b16 %v3314
    %v4066 = vunpack.c.l.b16 %v3315
    %v4067 = vunpack.c.h.b16 %v3315
    %v4068 = vunpack.c.l.b16 %v3316
    %v4069 = vunpack.c.h.b16 %v3316
    %v4070 = vunpack.c.l.b16 %v3317
    %v4071 = vunpack.c.h.b16 %v3317
    %v4072 = vunpack.c.l.b16 %v3318
    %v4073 = vunpack.c.h.b16 %v3318
    %v4074 = vunpack.c.l.b16 %v3319
    %v4075 = vunpack.c.h.b16 %v3319
    %v4076 = vunpack.c.l.b16 %v3320
    %v4077 = vunpack.c.h.b16 %v3320
    %v4078 = vunpack.c.l.b16 %v3321
    %v4079 = vunpack.c.h.b16 %v3321
    %v4080 = vunpack.c.l.b16 %v3322
    %v4081 = vunpack.c.h.b16 %v3322
    %v4082 = vunpack.c.l.b16 %v3323
    %v4083 = vunpack.c.h.b16 %v3323
    %v4084 = vunpack.c.l.b16 %v3324
    %v4085 = vunpack.c.h.b16 %v3324
    %v4086 = vunpack.c.l.b16 %v3325
    %v4087 = vunpack.c.h.b16 %v3325
    %v4088 = vunpack.c.l.b16 %v3326
    %v4089 = vunpack.c.h.b16 %v3326
    %v4090 = vunpack.c.l.b16 %v3327
    %v4091 = vunpack.c.h.b16 %v3327
    %v4092 = vunpack.c.l.b16 %v3328
    %v4093 = vunpack.c.h.b16 %v3328
    %v4094 = vunpack.c.l.b16 %v3329
    %v4095 = vunpack.c.h.b16 %v3329
    %v4096 = vunpack.c.l.b16 %v3330
    %v4097 = vunpack.c.h.b16 %v3330
    %v4098 = vunpack.c.l.b16 %v3331
    %v4099 = vunpack.c.h.b16 %v3331
    %v4100 = vunpack.c.l.b16 %v3332
    %v4101 = vunpack.c.h.b16 %v3332
    %v4102 = vunpack.c.l.b16 %v3333
    %v4103 = vunpack.c.h.b16 %v3333
    %v4104 = vunpack.c.l.b16 %v3334
    %v4105 = vunpack.c.h.b16 %v3334
    %v4106 = vunpack.c.l.b16 %v3335
    %v4107 = vunpack.c.h.b16 %v3335
    %v4108 = vunpack.c.l.b16 %v3336
    %v4109 = vunpack.c.h.b16 %v3336
    %v4110 = vunpack.c.l.b16 %v3337
    %v4111 = vunpack.c.h.b16 %v3337
    %v4112 = vunpack.c.l.b16 %v3338
    %v4113 = vunpack.c.h.b16 %v3338
    %v4114 = vunpack.c.l.b16 %v3339
    %v4115 = vunpack.c.h.b16 %v3339
    %v4116 = vunpack.c.l.b16 %v3340
    %v4117 = vunpack.c.h.b16 %v3340
    %v4118 = vunpack.c.l.b16 %v3341
    %v4119 = vunpack.c.h.b16 %v3341
    %v4120 = vunpack.c.l.b16 %v3342
    %v4121 = vunpack.c.h.b16 %v3342
    %v4122 = vunpack.c.l.b16 %v3343
    %v4123 = vunpack.c.h.b16 %v3343
    %v4124 = vunpack.c.l.b16 %v3344
    %v4125 = vunpack.c.h.b16 %v3344
    %v4126 = vunpack.c.l.b16 %v3345
    %v4127 = vunpack.c.h.b16 %v3345
    %v4128 = vunpack.c.l.b16 %v3346
    %v4129 = vunpack.c.h.b16 %v3346
    %v4130 = vunpack.c.l.b16 %v3347
    %v4131 = vunpack.c.h.b16 %v3347
    %v4132 = vunpack.c.l.b16 %v3348
    %v4133 = vunpack.c.h.b16 %v3348
    %v4134 = vunpack.c.l.b16 %v3349
    %v4135 = vunpack.c.h.b16 %v3349
    %v4136 = vunpack.c.l.b16 %v3350
    %v4137 = vunpack.c.h.b16 %v3350
    %v4138 = vunpack.c.l.b16 %v3351
    %v4139 = vunpack.c.h.b16 %v3351
    %v4140 = vunpack.c.l.b16 %v3352
    %v4141 = vunpack.c.h.b16 %v3352
    %v4142 = vunpack.c.l.b16 %v3353
    %v4143 = vunpack.c.h.b16 %v3353
    %v4144 = vunpack.c.l.b16 %v3354
    %v4145 = vunpack.c.h.b16 %v3354
    %v4146 = vunpack.c.l.b16 %v3355
    %v4147 = vunpack.c.h.b16 %v3355
    %v4148 = vunpack.c.l.b16 %v3356
    %v4149 = vunpack.c.h.b16 %v3356
    %v4150 = vunpack.c.l.b16 %v3357
    %v4151 = vunpack.c.h.b16 %v3357
    %v4152 = vunpack.c.l.b16 %v3358
    %v4153 = vunpack.c.h.b16 %v3358
    %v4154 = vunpack.c.l.b16 %v3359
    %v4155 = vunpack.c.h.b16 %v3359
    %v4156 = vunpack.c.l.b16 %v3360
    %v4157 = vunpack.c.h.b16 %v3360
    %v4158 = vunpack.c.l.b16 %v3361
    %v4159 = vunpack.c.h.b16 %v3361
    %v4160 = vunpack.c.l.b16 %v3362
    %v4161 = vunpack.c.h.b16 %v3362
    %v4162 = vunpack.c.l.b16 %v3363
    %v4163 = vunpack.c.h.b16 %v3363
    %v4164 = vunpack.c.l.b16 %v3364
    %v4165 = vunpack.c.h.b16 %v3364
    %v4166 = vunpack.c.l.b16 %v3365
    %v4167 = vunpack.c.h.b16 %v3365
    %v4168 = vunpack.c.l.b16 %v3366
    %v4169 = vunpack.c.h.b16 %v3366
    %v4170 = vunpack.c.l.b16 %v3367
    %v4171 = vunpack.c.h.b16 %v3367
    %v4172 = vunpack.c.l.b16 %v3368
    %v4173 = vunpack.c.h.b16 %v3368
    %v4174 = vunpack.c.l.b16 %v3369
    %v4175 = vunpack.c.h.b16 %v3369
    %v4176 = vunpack.c.l.b16 %v3370
    %v4177 = vunpack.c.h.b16 %v3370
    %v4178 = vunpack.c.l.b16 %v3371
    %v4179 = vunpack.c.h.b16 %v3371
    %v4180 = vunpack.c.l.b16 %v3372
    %v4181 = vunpack.c.h.b16 %v3372
    %v4182 = vunpack.c.l.b16 %v3373
    %v4183 = vunpack.c.h.b16 %v3373
    %v4184 = vunpack.c.l.b16 %v3374
    %v4185 = vunpack.c.h.b16 %v3374
    %v4186 = vunpack.c.l.b16 %v3375
    %v4187 = vunpack.c.h.b16 %v3375
    %v4188 = vunpack.c.l.b16 %v3376
    %v4189 = vunpack.c.h.b16 %v3376
    %v4190 = vunpack.c.l.b16 %v3377
    %v4191 = vunpack.c.h.b16 %v3377
    %v4192 = vunpack.c.l.b16 %v3378
    %v4193 = vunpack.c.h.b16 %v3378
    %v4194 = vunpack.c.l.b16 %v3379
    %v4195 = vunpack.c.h.b16 %v3379
    %v4196 = vunpack.c.l.b16 %v3380
    %v4197 = vunpack.c.h.b16 %v3380
    %v4198 = vunpack.c.l.b16 %v3381
    %v4199 = vunpack.c.h.b16 %v3381
    %v4200 = vunpack.c.l.b16 %v3382
    %v4201 = vunpack.c.h.b16 %v3382
    %v4202 = vunpack.c.l.b16 %v3383
    %v4203 = vunpack.c.h.b16 %v3383
    %v4204 = vunpack.c.l.b16 %v3384
    %v4205 = vunpack.c.h.b16 %v3384
    %v4206 = vunpack.c.l.b16 %v3385
    %v4207 = vunpack.c.h.b16 %v3385
    %v4208 = vunpack.c.l.b16 %v3386
    %v4209 = vunpack.c.h.b16 %v3386
    %v4210 = vunpack.c.l.b16 %v3387
    %v4211 = vunpack.c.h.b16 %v3387
    %v4212 = vunpack.c.l.b16 %v3388
    %v4213 = vunpack.c.h.b16 %v3388
    %v4214 = vunpack.c.l.b16 %v3389
    %v4215 = vunpack.c.h.b16 %v3389
    %v4216 = vunpack.c.l.b16 %v3390
    %v4217 = vunpack.c.h.b16 %v3390
    %v4218 = vunpack.c.l.b16 %v3391
    %v4219 = vunpack.c.h.b16 %v3391
    %v4220 = vunpack.c.l.b16 %v3392
    %v4221 = vunpack.c.h.b16 %v3392
    %v4222 = vunpack.c.l.b16 %v3393
    %v4223 = vunpack.c.h.b16 %v3393
    %v4224 = vunpack.c.l.b16 %v3394
    %v4225 = vunpack.c.h.b16 %v3394
    %v4226 = vunpack.c.l.b16 %v3395
    %v4227 = vunpack.c.h.b16 %v3395
    %v4228 = vunpack.c.l.b16 %v3396
    %v4229 = vunpack.c.h.b16 %v3396
    %v4230 = vunpack.c.l.b16 %v3397
    %v4231 = vunpack.c.h.b16 %v3397
    %v4232 = vunpack.c.l.b16 %v3398
    %v4233 = vunpack.c.h.b16 %v3398
    %v4234 = vunpack.c.l.b16 %v3399
    %v4235 = vunpack.c.h.b16 %v3399
    %v4236 = vunpack.c.l.b16 %v3400
    %v4237 = vunpack.c.h.b16 %v3400
    %v4238 = vunpack.c.l.b16 %v3401
    %v4239 = vunpack.c.h.b16 %v3401
    %v4240 = vunpack.c.l.b16 %v3402
    %v4241 = vunpack.c.h.b16 %v3402
    %v4242 = vunpack.c.l.b16 %v3403
    %v4243 = vunpack.c.h.b16 %v3403
    %v4244 = vunpack.c.l.b16 %v3404
    %v4245 = vunpack.c.h.b16 %v3404
    %v4246 = vunpack.c.l.b16 %v3405
    %v4247 = vunpack.c.h.b16 %v3405
    %v4248 = vunpack.c.l.b16 %v3406
    %v4249 = vunpack.c.h.b16 %v3406
    %v4250 = vunpack.c.l.b16 %v3407
    %v4251 = vunpack.c.h.b16 %v3407
    %v4252 = vunpack.c.l.b16 %v3408
    %v4253 = vunpack.c.h.b16 %v3408
    %v4254 = vunpack.c.l.b16 %v3409
    %v4255 = vunpack.c.h.b16 %v3409
    %v4256 = vunpack.c.l.b16 %v3410
    %v4257 = vunpack.c.h.b16 %v3410
    %v4258 = vunpack.c.l.b16 %v3411
    %v4259 = vunpack.c.h.b16 %v3411
    %v4260 = vunpack.c.l.b16 %v3412
    %v4261 = vunpack.c.h.b16 %v3412
    %v4262 = vunpack.c.l.b16 %v3413
    %v4263 = vunpack.c.h.b16 %v3413
    %v4264 = vunpack.c.l.b16 %v3414
    %v4265 = vunpack.c.h.b16 %v3414
    %v4266 = vunpack.c.l.b16 %v3415
    %v4267 = vunpack.c.h.b16 %v3415
    %v4268 = vunpack.c.l.b16 %v3416
    %v4269 = vunpack.c.h.b16 %v3416
    %v4270 = vunpack.c.l.b16 %v3417
    %v4271 = vunpack.c.h.b16 %v3417
    %v4272 = vunpack.c.l.b16 %v3418
    %v4273 = vunpack.c.h.b16 %v3418
    %v4274 = vunpack.c.l.b16 %v3419
    %v4275 = vunpack.c.h.b16 %v3419
    %v4276 = vunpack.c.l.b16 %v3420
    %v4277 = vunpack.c.h.b16 %v3420
    %v4278 = vunpack.c.l.b16 %v3421
    %v4279 = vunpack.c.h.b16 %v3421
    %v4280 = vunpack.c.l.b16 %v3422
    %v4281 = vunpack.c.h.b16 %v3422
    %v4282 = vunpack.c.l.b16 %v3423
    %v4283 = vunpack.c.h.b16 %v3423
    %v4284 = vunpack.c.l.b16 %v3424
    %v4285 = vunpack.c.h.b16 %v3424
    %v4286 = vunpack.c.l.b16 %v3425
    %v4287 = vunpack.c.h.b16 %v3425
    %v4288 = vunpack.c.l.b16 %v3426
    %v4289 = vunpack.c.h.b16 %v3426
    %v4290 = vunpack.c.l.b16 %v3427
    %v4291 = vunpack.c.h.b16 %v3427
    %v4292 = vunpack.c.l.b16 %v3428
    %v4293 = vunpack.c.h.b16 %v3428
    %v4294 = vunpack.c.l.b16 %v3429
    %v4295 = vunpack.c.h.b16 %v3429
    %v4296 = vunpack.c.l.b16 %v3430
    %v4297 = vunpack.c.h.b16 %v3430
    %v4298 = vunpack.c.l.b16 %v3431
    %v4299 = vunpack.c.h.b16 %v3431
    %v4300 = vunpack.c.l.b16 %v3432
    %v4301 = vunpack.c.h.b16 %v3432
    %v4302 = vunpack.c.l.b16 %v3433
    %v4303 = vunpack.c.h.b16 %v3433
    %v4304 = vunpack.c.l.b16 %v3434
    %v4305 = vunpack.c.h.b16 %v3434
    %v4306 = vunpack.c.l.b16 %v3435
    %v4307 = vunpack.c.h.b16 %v3435
    %v4308 = vunpack.c.l.b16 %v3436
    %v4309 = vunpack.c.h.b16 %v3436
    %v4310 = vunpack.c.l.b16 %v3437
    %v4311 = vunpack.c.h.b16 %v3437
    %v4312 = vunpack.c.l.b16 %v3438
    %v4313 = vunpack.c.h.b16 %v3438
    %v4314 = vunpack.c.l.b16 %v3439
    %v4315 = vunpack.c.h.b16 %v3439
    %v4316 = vunpack.c.l.b16 %v3440
    %v4317 = vunpack.c.h.b16 %v3440
    %v4318 = vunpack.c.l.b16 %v3441
    %v4319 = vunpack.c.h.b16 %v3441
    %v4320 = vunpack.c.l.b16 %v3442
    %v4321 = vunpack.c.h.b16 %v3442
    %v4322 = vunpack.c.l.b16 %v3443
    %v4323 = vunpack.c.h.b16 %v3443
    %v4324 = vunpack.c.l.b16 %v3444
    %v4325 = vunpack.c.h.b16 %v3444
    %v4326 = vunpack.c.l.b16 %v3445
    %v4327 = vunpack.c.h.b16 %v3445
    %v4328 = vunpack.c.l.b16 %v3446
    %v4329 = vunpack.c.h.b16 %v3446
    %v4330 = vunpack.c.l.b16 %v3447
    %v4331 = vunpack.c.h.b16 %v3447
    %v4332 = vunpack.c.l.b16 %v3448
    %v4333 = vunpack.c.h.b16 %v3448
    %v4334 = vunpack.c.l.b16 %v3449
    %v4335 = vunpack.c.h.b16 %v3449
    %v4336 = vunpack.c.l.b16 %v3450
    %v4337 = vunpack.c.h.b16 %v3450
    %v4338 = vunpack.c.l.b16 %v3451
    %v4339 = vunpack.c.h.b16 %v3451
    %v4340 = vunpack.c.l.b16 %v3452
    %v4341 = vunpack.c.h.b16 %v3452
    %v4342 = vunpack.c.l.b16 %v3453
    %v4343 = vunpack.c.h.b16 %v3453
    %v4344 = vunpack.c.l.b16 %v3454
    %v4345 = vunpack.c.h.b16 %v3454
    %v4346 = vunpack.c.l.b16 %v3455
    %v4347 = vunpack.c.h.b16 %v3455
    %v4348 = vunpack.c.l.b16 %v3456
    %v4349 = vunpack.c.h.b16 %v3456
    %v4350 = vunpack.c.l.b16 %v3457
    %v4351 = vunpack.c.h.b16 %v3457
    %v4352 = vunpack.c.l.b16 %v3458
    %v4353 = vunpack.c.h.b16 %v3458
    %v4354 = vunpack.c.l.b16 %v3459
    %v4355 = vunpack.c.h.b16 %v3459
    %v4356 = vunpack.c.l.b16 %v3460
    %v4357 = vunpack.c.h.b16 %v3460
    %v4358 = vunpack.c.l.b16 %v3461
    %v4359 = vunpack.c.h.b16 %v3461
    %v4360 = vunpack.c.l.b16 %v3462
    %v4361 = vunpack.c.h.b16 %v3462
    %v4362 = vunpack.c.l.b16 %v3463
    %v4363 = vunpack.c.h.b16 %v3463
    %v4364 = vunpack.c.l.b16 %v3464
    %v4365 = vunpack.c.h.b16 %v3464
    %v4366 = vunpack.c.l.b16 %v3465
    %v4367 = vunpack.c.h.b16 %v3465
    %v4368 = vunpack.c.l.b16 %v3466
    %v4369 = vunpack.c.h.b16 %v3466
    %v4370 = vunpack.c.l.b16 %v3467
    %v4371 = vunpack.c.h.b16 %v3467
    %v4372 = vunpack.c.l.b16 %v3468
    %v4373 = vunpack.c.h.b16 %v3468
    %v4374 = vunpack.c.l.b16 %v3469
    %v4375 = vunpack.c.h.b16 %v3469
    %v4376 = vunpack.c.l.b16 %v3470
    %v4377 = vunpack.c.h.b16 %v3470
    %v4378 = vunpack.c.l.b16 %v3471
    %v4379 = vunpack.c.h.b16 %v3471
    %v4380 = vunpack.c.l.b16 %v3472
    %v4381 = vunpack.c.h.b16 %v3472
    %v4382 = vunpack.c.l.b16 %v3473
    %v4383 = vunpack.c.h.b16 %v3473
    %v4384 = vunpack.c.l.b16 %v3474
    %v4385 = vunpack.c.h.b16 %v3474
    %v4386 = vunpack.c.l.b16 %v3475
    %v4387 = vunpack.c.h.b16 %v3475
    %v4388 = vunpack.c.l.b16 %v3476
    %v4389 = vunpack.c.h.b16 %v3476
    %v4390 = vunpack.c.l.b16 %v3477
    %v4391 = vunpack.c.h.b16 %v3477
    %v4392 = vunpack.c.l.b16 %v3478
    %v4393 = vunpack.c.h.b16 %v3478
    %v4394 = vunpack.c.l.b16 %v3479
    %v4395 = vunpack.c.h.b16 %v3479
    %v4396 = vunpack.c.l.b16 %v3480
    %v4397 = vunpack.c.h.b16 %v3480
    %v4398 = vunpack.c.l.b16 %v3481
    %v4399 = vunpack.c.h.b16 %v3481
    %v4400 = vunpack.c.l.b16 %v3482
    %v4401 = vunpack.c.h.b16 %v3482
    %v4402 = vunpack.c.l.b16 %v3483
    %v4403 = vunpack.c.h.b16 %v3483
    %v4404 = vunpack.c.l.b16 %v3484
    %v4405 = vunpack.c.h.b16 %v3484
    %v4406 = vunpack.c.l.b16 %v3485
    %v4407 = vunpack.c.h.b16 %v3485
    %v4408 = vunpack.c.l.b16 %v3486
    %v4409 = vunpack.c.h.b16 %v3486
    %v4410 = vunpack.c.l.b16 %v3487
    %v4411 = vunpack.c.h.b16 %v3487
    %v4412 = vunpack.c.l.b16 %v3488
    %v4413 = vunpack.c.h.b16 %v3488
    %v4414 = vunpack.c.l.b16 %v3489
    %v4415 = vunpack.c.h.b16 %v3489
    %v4416 = vunpack.c.l.b16 %v3490
    %v4417 = vunpack.c.h.b16 %v3490
    %v4418 = vunpack.c.l.b16 %v3491
    %v4419 = vunpack.c.h.b16 %v3491
    %v4420 = vunpack.c.l.b16 %v3492
    %v4421 = vunpack.c.h.b16 %v3492
    %v4422 = vunpack.c.l.b16 %v3493
    %v4423 = vunpack.c.h.b16 %v3493
    %v4424 = vunpack.c.l.b16 %v3494
    %v4425 = vunpack.c.h.b16 %v3494
    %v4426 = vunpack.c.l.b16 %v3495
    %v4427 = vunpack.c.h.b16 %v3495
    %v4428 = vunpack.c.l.b16 %v3496
    %v4429 = vunpack.c.h.b16 %v3496
    %v4430 = vunpack.c.l.b16 %v3497
    %v4431 = vunpack.c.h.b16 %v3497
    %v4432 = vunpack.c.l.b16 %v3498
    %v4433 = vunpack.c.h.b16 %v3498
    %v4434 = vunpack.c.l.b16 %v3499
    %v4435 = vunpack.c.h.b16 %v3499
    %v4436 = vunpack.c.l.b16 %v3500
    %v4437 = vunpack.c.h.b16 %v3500
    %v4438 = vunpack.c.l.b16 %v3501
    %v4439 = vunpack.c.h.b16 %v3501
    %v4440 = vunpack.c.l.b16 %v3502
    %v4441 = vunpack.c.h.b16 %v3502
    %v4442 = vunpack.c.l.b16 %v3503
    %v4443 = vunpack.c.h.b16 %v3503
    %v4444 = vunpack.c.l.b16 %v3504
    %v4445 = vunpack.c.h.b16 %v3504
    %v4446 = vunpack.c.l.b16 %v3505
    %v4447 = vunpack.c.h.b16 %v3505
    %v4448 = vunpack.c.l.b16 %v3506
    %v4449 = vunpack.c.h.b16 %v3506
    %v4450 = vunpack.c.l.b16 %v3507
    %v4451 = vunpack.c.h.b16 %v3507
    %v4452 = vunpack.c.l.b16 %v3508
    %v4453 = vunpack.c.h.b16 %v3508
    %v4454 = vunpack.c.l.b16 %v3509
    %v4455 = vunpack.c.h.b16 %v3509
    %v4456 = vunpack.c.l.b16 %v3510
    %v4457 = vunpack.c.h.b16 %v3510
    %v4458 = vunpack.c.l.b16 %v3511
    %v4459 = vunpack.c.h.b16 %v3511
    %v4460 = vunpack.c.l.b16 %v3512
    %v4461 = vunpack.c.h.b16 %v3512
    %v4462 = vunpack.c.l.b16 %v3513
    %v4463 = vunpack.c.h.b16 %v3513
    %v4464 = vunpack.c.l.b16 %v3514
    %v4465 = vunpack.c.h.b16 %v3514
    %v4466 = vunpack.c.l.b16 %v3515
    %v4467 = vunpack.c.h.b16 %v3515
    %v4468 = vunpack.c.l.b16 %v3516
    %v4469 = vunpack.c.h.b16 %v3516
    %v4470 = vunpack.c.l.b16 %v3517
    %v4471 = vunpack.c.h.b16 %v3517
    %v4472 = vunpack.c.l.b16 %v3518
    %v4473 = vunpack.c.h.b16 %v3518
    %v4474 = vunpack.c.l.b16 %v3519
    %v4475 = vunpack.c.h.b16 %v3519
    %v4476 = vunpack.c.l.b16 %v3520
    %v4477 = vunpack.c.h.b16 %v3520
    %v4478 = vunpack.c.l.b16 %v3521
    %v4479 = vunpack.c.h.b16 %v3521
    %v4480 = vunpack.c.l.b16 %v3522
    %v4481 = vunpack.c.h.b16 %v3522
    %v4482 = vunpack.c.l.b16 %v3523
    %v4483 = vunpack.c.h.b16 %v3523
    %v4484 = vunpack.c.l.b16 %v3524
    %v4485 = vunpack.c.h.b16 %v3524
    %v4486 = vunpack.c.l.b16 %v3525
    %v4487 = vunpack.c.h.b16 %v3525
    %v4488 = vunpack.c.l.b16 %v3526
    %v4489 = vunpack.c.h.b16 %v3526
    %v4490 = vunpack.c.l.b16 %v3527
    %v4491 = vunpack.c.h.b16 %v3527
    %v4492 = vunpack.c.l.b16 %v3528
    %v4493 = vunpack.c.h.b16 %v3528
    %v4494 = vunpack.c.l.b16 %v3529
    %v4495 = vunpack.c.h.b16 %v3529
    %v4496 = vunpack.c.l.b16 %v3530
    %v4497 = vunpack.c.h.b16 %v3530
    %v4498 = vunpack.c.l.b16 %v3531
    %v4499 = vunpack.c.h.b16 %v3531
    %v4500 = vunpack.c.l.b16 %v3532
    %v4501 = vunpack.c.h.b16 %v3532
    %v4502 = vunpack.c.l.b16 %v3533
    %v4503 = vunpack.c.h.b16 %v3533
    %v4504 = vunpack.c.l.b16 %v3534
    %v4505 = vunpack.c.h.b16 %v3534
    %v4506 = vunpack.c.l.b16 %v3535
    %v4507 = vunpack.c.h.b16 %v3535
    %v4508 = vunpack.c.l.b16 %v3536
    %v4509 = vunpack.c.h.b16 %v3536
    %v4510 = vunpack.c.l.b16 %v3537
    %v4511 = vunpack.c.h.b16 %v3537
    %v4512 = vunpack.c.l.b16 %v3538
    %v4513 = vunpack.c.h.b16 %v3538
    %v4514 = vunpack.c.l.b16 %v3539
    %v4515 = vunpack.c.h.b16 %v3539
    %v4516 = vunpack.c.l.b16 %v3540
    %v4517 = vunpack.c.h.b16 %v3540
    %v4518 = vunpack.c.l.b16 %v3541
    %v4519 = vunpack.c.h.b16 %v3541
    %v4520 = vunpack.c.l.b16 %v3542
    %v4521 = vunpack.c.h.b16 %v3542
    %v4522 = vunpack.c.l.b16 %v3543
    %v4523 = vunpack.c.h.b16 %v3543
    %v4524 = vunpack.c.l.b16 %v3544
    %v4525 = vunpack.c.h.b16 %v3544
    %v4526 = vunpack.c.l.b16 %v3545
    %v4527 = vunpack.c.h.b16 %v3545
    %v4528 = vunpack.c.l.b16 %v3546
    %v4529 = vunpack.c.h.b16 %v3546
    %v4530 = vunpack.c.l.b16 %v3547
    %v4531 = vunpack.c.h.b16 %v3547
    %v4532 = vpack.c.b16 %v3886, %v3884
    %v4533 = vpack.c.b16 %v3887, %v3885
    %v4534 = vpack.c.b16 %v3890, %v3888
    %v4535 = vpack.c.b16 %v3891, %v3889
    %v4536 = vpack.c.b16 %v3894, %v3892
    %v4537 = vpack.c.b16 %v3895, %v3893
    %v4538 = vpack.c.b16 %v3898, %v3896
    %v4539 = vpack.c.b16 %v3899, %v3897
    %v4540 = vpack.c.b16 %v3902, %v3900
    %v4541 = vpack.c.b16 %v3903, %v3901
    %v4542 = vpack.c.b16 %v3906, %v3904
    %v4543 = vpack.c.b16 %v3907, %v3905
    %v4544 = vpack.c.b16 %v3910, %v3908
    %v4545 = vpack.c.b16 %v3911, %v3909
    %v4546 = vpack.c.b16 %v3914, %v3912
    %v4547 = vpack.c.b16 %v3915, %v3913
    %v4548 = vpack.c.b16 %v3918, %v3916
    %v4549 = vpack.c.b16 %v3919, %v3917
    %v4550 = vpack.c.b16 %v3922, %v3920
    %v4551 = vpack.c.b16 %v3923, %v3921
    %v4552 = vpack.c.b16 %v3926, %v3924
    %v4553 = vpack.c.b16 %v3927, %v3925
    %v4554 = vpack.c.b16 %v3930, %v3928
    %v4555 = vpack.c.b16 %v3931, %v3929
    %v4556 = vpack.c.b16 %v3934, %v3932
    %v4557 = vpack.c.b16 %v3935, %v3933
    %v4558 = vpack.c.b16 %v3938, %v3936
    %v4559 = vpack.c.b16 %v3939, %v3937
    %v4560 = vpack.c.b16 %v3942, %v3940
    %v4561 = vpack.c.b16 %v3943, %v3941
    %v4562 = vpack.c.b16 %v3946, %v3944
    %v4563 = vpack.c.b16 %v3947, %v3945
    %v4564 = vpack.c.b16 %v3950, %v3948
    %v4565 = vpack.c.b16 %v3951, %v3949
    %v4566 = vpack.c.b16 %v3954, %v3952
    %v4567 = vpack.c.b16 %v3955, %v3953
    %v4568 = vpack.c.b16 %v3958, %v3956
    %v4569 = vpack.c.b16 %v3959, %v3957
    %v4570 = vpack.c.b16 %v3962, %v3960
    %v4571 = vpack.c.b16 %v3963, %v3961
    %v4572 = vpack.c.b16 %v3966, %v3964
    %v4573 = vpack.c.b16 %v3967, %v3965
    %v4574 = vpack.c.b16 %v3970, %v3968
    %v4575 = vpack.c.b16 %v3971, %v3969
    %v4576 = vpack.c.b16 %v3974, %v3972
    %v4577 = vpack.c.b16 %v3975, %v3973
    %v4578 = vpack.c.b16 %v3978, %v3976
    %v4579 = vpack.c.b16 %v3979, %v3977
    %v4580 = vpack.c.b16 %v3982, %v3980
    %v4581 = vpack.c.b16 %v3983, %v3981
    %v4582 = vpack.c.b16 %v3986, %v3984
    %v4583 = vpack.c.b16 %v3987, %v3985
    %v4584 = vpack.c.b16 %v3990, %v3988
    %v4585 = vpack.c.b16 %v3991, %v3989
    %v4586 = vpack.c.b16 %v3994, %v3992
    %v4587 = vpack.c.b16 %v3995, %v3993
    %v4588 = vpack.c.b16 %v3998, %v3996
    %v4589 = vpack.c.b16 %v3999, %v3997
    %v4590 = vpack.c.b16 %v4002, %v4000
    %v4591 = vpack.c.b16 %v4003, %v4001
    %v4592 = vpack.c.b16 %v4006, %v4004
    %v4593 = vpack.c.b16 %v4007, %v4005
    %v4594 = vpack.c.b16 %v4010, %v4008
    %v4595 = vpack.c.b16 %v4011, %v4009
    %v4596 = vpack.c.b16 %v4014, %v4012
    %v4597 = vpack.c.b16 %v4015, %v4013
    %v4598 = vpack.c.b16 %v4018, %v4016
    %v4599 = vpack.c.b16 %v4019, %v4017
    %v4600 = vpack.c.b16 %v4022, %v4020
    %v4601 = vpack.c.b16 %v4023, %v4021
    %v4602 = vpack.c.b16 %v4026, %v4024
    %v4603 = vpack.c.b16 %v4027, %v4025
    %v4604 = vpack.c.b16 %v4030, %v4028
    %v4605 = vpack.c.b16 %v4031, %v4029
    %v4606 = vpack.c.b16 %v4034, %v4032
    %v4607 = vpack.c.b16 %v4035, %v4033
    %v4608 = vpack.c.b16 %v4038, %v4036
    %v4609 = vpack.c.b16 %v4039, %v4037
    %v4610 = vpack.c.b16 %v4042, %v4040
    %v4611 = vpack.c.b16 %v4043, %v4041
    %v4612 = vpack.c.b16 %v4046, %v4044
    %v4613 = vpack.c.b16 %v4047, %v4045
    %v4614 = vpack.c.b16 %v4050, %v4048
    %v4615 = vpack.c.b16 %v4051, %v4049
    %v4616 = vpack.c.b16 %v4054, %v4052
    %v4617 = vpack.c.b16 %v4055, %v4053
    %v4618 = vpack.c.b16 %v4058, %v4056
    %v4619 = vpack.c.b16 %v4059, %v4057
    %v4620 = vpack.c.b16 %v4062, %v4060
    %v4621 = vpack.c.b16 %v4063, %v4061
    %v4622 = vpack.c.b16 %v4066, %v4064
    %v4623 = vpack.c.b16 %v4067, %v4065
    %v4624 = vpack.c.b16 %v4070, %v4068
    %v4625 = vpack.c.b16 %v4071, %v4069
    %v4626 = vpack.c.b16 %v4074, %v4072
    %v4627 = vpack.c.b16 %v4075, %v4073
    %v4628 = vpack.c.b16 %v4078, %v4076
    %v4629 = vpack.c.b16 %v4079, %v4077
    %v4630 = vpack.c.b16 %v4082, %v4080
    %v4631 = vpack.c.b16 %v4083, %v4081
    %v4632 = vpack.c.b16 %v4086, %v4084
    %v4633 = vpack.c.b16 %v4087, %v4085
    %v4634 = vpack.c.b16 %v4090, %v4088
    %v4635 = vpack.c.b16 %v4091, %v4089
    %v4636 = vpack.c.b16 %v4094, %v4092
    %v4637 = vpack.c.b16 %v4095, %v4093
    %v4638 = vpack.c.b16 %v4098, %v4096
    %v4639 = vpack.c.b16 %v4099, %v4097
    %v4640 = vpack.c.b16 %v4102, %v4100
    %v4641 = vpack.c.b16 %v4103, %v4101
    %v4642 = vpack.c.b16 %v4106, %v4104
    %v4643 = vpack.c.b16 %v4107, %v4105
    %v4644 = vpack.c.b16 %v4110, %v4108
    %v4645 = vpack.c.b16 %v4111, %v4109
    %v4646 = vpack.c.b16 %v4114, %v4112
    %v4647 = vpack.c.b16 %v4115, %v4113
    %v4648 = vpack.c.b16 %v4118, %v4116
    %v4649 = vpack.c.b16 %v4119, %v4117
    %v4650 = vpack.c.b16 %v4122, %v4120
    %v4651 = vpack.c.b16 %v4123, %v4121
    %v4652 = vpack.c.b16 %v4126, %v4124
    %v4653 = vpack.c.b16 %v4127, %v4125
    %v4654 = vpack.c.b16 %v4130, %v4128
    %v4655 = vpack.c.b16 %v4131, %v4129
    %v4656 = vpack.c.b16 %v4134, %v4132
    %v4657 = vpack.c.b16 %v4135, %v4133
    %v4658 = vpack.c.b16 %v4138, %v4136
    %v4659 = vpack.c.b16 %v4139, %v4137
    %v4660 = vpack.c.b16 %v4142, %v4140
    %v4661 = vpack.c.b16 %v4143, %v4141
    %v4662 = vpack.c.b16 %v4146, %v4144
    %v4663 = vpack.c.b16 %v4147, %v4145
    %v4664 = vpack.c.b16 %v4150, %v4148
    %v4665 = vpack.c.b16 %v4151, %v4149
    %v4666 = vpack.c.b16 %v4154, %v4152
    %v4667 = vpack.c.b16 %v4155, %v4153
    %v4668 = vpack.c.b16 %v4158, %v4156
    %v4669 = vpack.c.b16 %v4159, %v4157
    %v4670 = vpack.c.b16 %v4162, %v4160
    %v4671 = vpack.c.b16 %v4163, %v4161
    %v4672 = vpack.c.b16 %v4166, %v4164
    %v4673 = vpack.c.b16 %v4167, %v4165
    %v4674 = vpack.c.b16 %v4170, %v4168
    %v4675 = vpack.c.b16 %v4171, %v4169
    %v4676 = vpack.c.b16 %v4174, %v4172
    %v4677 = vpack.c.b16 %v4175, %v4173
    %v4678 = vpack.c.b16 %v4178, %v4176
    %v4679 = vpack.c.b16 %v4179, %v4177
    %v4680 = vpack.c.b16 %v4182, %v4180
    %v4681 = vpack.c.b16 %v4183, %v4181
    %v4682 = vpack.c.b16 %v4186, %v4184
    %v4683 = vpack.c.b16 %v4187, %v4185
    %v4684 = vpack.c.b16 %v4190, %v4188
    %v4685 = vpack.c.b16 %v4191, %v4189
    %v4686 = vpack.c.b16 %v4194, %v4192
    %v4687 = vpack.c.b16 %v4195, %v4193
    %v4688 = vpack.c.b16 %v4198, %v4196
    %v4689 = vpack.c.b16 %v4199, %v4197
    %v4690 = vpack.c.b16 %v4202, %v4200
    %v4691 = vpack.c.b16 %v4203, %v4201
    %v4692 = vpack.c.b16 %v4206, %v4204
    %v4693 = vpack.c.b16 %v4207, %v4205
    %v4694 = vpack.c.b16 %v4210, %v4208
    %v4695 = vpack.c.b16 %v4211, %v4209
    %v4696 = vpack.c.b16 %v4214, %v4212
    %v4697 = vpack.c.b16 %v4215, %v4213
    %v4698 = vpack.c.b16 %v4218, %v4216
    %v4699 = vpack.c.b16 %v4219, %v4217
    %v4700 = vpack.c.b16 %v4222, %v4220
    %v4701 = vpack.c.b16 %v4223, %v4221
    %v4702 = vpack.c.b16 %v4226, %v4224
    %v4703 = vpack.c.b16 %v4227, %v4225
    %v4704 = vpack.c.b16 %v4230, %v4228
    %v4705 = vpack.c.b16 %v4231, %v4229
    %v4706 = vpack.c.b16 %v4234, %v4232
    %v4707 = vpack.c.b16 %v4235, %v4233
    %v4708 = vpack.c.b16 %v4238, %v4236
    %v4709 = vpack.c.b16 %v4239, %v4237
    %v4710 = vpack.c.b16 %v4242, %v4240
    %v4711 = vpack.c.b16 %v4243, %v4241
    %v4712 = vpack.c.b16 %v4246, %v4244
    %v4713 = vpack.c.b16 %v4247, %v4245
    %v4714 = vpack.c.b16 %v4250, %v4248
    %v4715 = vpack.c.b16 %v4251, %v4249
    %v4716 = vpack.c.b16 %v4254, %v4252
    %v4717 = vpack.c.b16 %v4255, %v4253
    %v4718 = vpack.c.b16 %v4258, %v4256
    %v4719 = vpack.c.b16 %v4259, %v4257
    %v4720 = vpack.c.b16 %v4262, %v4260
    %v4721 = vpack.c.b16 %v4263, %v4261
    %v4722 = vpack.c.b16 %v4266, %v4264
    %v4723 = vpack.c.b16 %v4267, %v4265
    %v4724 = vpack.c.b16 %v4270, %v4268
    %v4725 = vpack.c.b16 %v4271, %v4269
    %v4726 = vpack.c.b16 %v4274, %v4272
    %v4727 = vpack.c.b16 %v4275, %v4273
    %v4728 = vpack.c.b16 %v4278, %v4276
    %v4729 = vpack.c.b16 %v4279, %v4277
    %v4730 = vpack.c.b16 %v4282, %v4280
    %v4731 = vpack.c.b16 %v4283, %v4281
    %v4732 = vpack.c.b16 %v4286, %v4284
    %v4733 = vpack.c.b16 %v4287, %v4285
    %v4734 = vpack.c.b16 %v4290, %v4288
    %v4735 = vpack.c.b16 %v4291, %v4289
    %v4736 = vpack.c.b16 %v4294, %v4292
    %v4737 = vpack.c.b16 %v4295, %v4293
    %v4738 = vpack.c.b16 %v4298, %v4296
    %v4739 = vpack.c.b16 %v4299, %v4297
    %v4740 = vpack.c.b16 %v4302, %v4300
    %v4741 = vpack.c.b16 %v4303, %v4301
    %v4742 = vpack.c.b16 %v4306, %v4304
    %v4743 = vpack.c.b16 %v4307, %v4305
    %v4744 = vpack.c.b16 %v4310, %v4308
    %v4745 = vpack.c.b16 %v4311, %v4309
    %v4746 = vpack.c.b16 %v4314, %v4312
    %v4747 = vpack.c.b16 %v4315, %v4313
    %v4748 = vpack.c.b16 %v4318, %v4316
    %v4749 = vpack.c.b16 %v4319, %v4317
    %v4750 = vpack.c.b16 %v4322, %v4320
    %v4751 = vpack.c.b16 %v4323, %v4321
    %v4752 = vpack.c.b16 %v4326, %v4324
    %v4753 = vpack.c.b16 %v4327, %v4325
    %v4754 = vpack.c.b16 %v4330, %v4328
    %v4755 = vpack.c.b16 %v4331, %v4329
    %v4756 = vpack.c.b16 %v4334, %v4332
    %v4757 = vpack.c.b16 %v4335, %v4333
    %v4758 = vpack.c.b16 %v4338, %v4336
    %v4759 = vpack.c.b16 %v4339, %v4337
    %v4760 = vpack.c.b16 %v4342, %v4340
    %v4761 = vpack.c.b16 %v4343, %v4341
    %v4762 = vpack.c.b16 %v4346, %v4344
    %v4763 = vpack.c.b16 %v4347, %v4345
    %v4764 = vpack.c.b16 %v4350, %v4348
    %v4765 = vpack.c.b16 %v4351, %v4349
    %v4766 = vpack.c.b16 %v4354, %v4352
    %v4767 = vpack.c.b16 %v4355, %v4353
    %v4768 = vpack.c.b16 %v4358, %v4356
    %v4769 = vpack.c.b16 %v4359, %v4357
    %v4770 = vpack.c.b16 %v4362, %v4360
    %v4771 = vpack.c.b16 %v4363, %v4361
    %v4772 = vpack.c.b16 %v4366, %v4364
    %v4773 = vpack.c.b16 %v4367, %v4365
    %v4774 = vpack.c.b16 %v4370, %v4368
    %v4775 = vpack.c.b16 %v4371, %v4369
    %v4776 = vpack.c.b16 %v4374, %v4372
    %v4777 = vpack.c.b16 %v4375, %v4373
    %v4778 = vpack.c.b16 %v4378, %v4376
    %v4779 = vpack.c.b16 %v4379, %v4377
    %v4780 = vpack.c.b16 %v4382, %v4380
    %v4781 = vpack.c.b16 %v4383, %v4381
    %v4782 = vpack.c.b16 %v4386, %v4384
    %v4783 = vpack.c.b16 %v4387, %v4385
    %v4784 = vpack.c.b16 %v4390, %v4388
    %v4785 = vpack.c.b16 %v4391, %v4389
    %v4786 = vpack.c.b16 %v4394, %v4392
    %v4787 = vpack.c.b16 %v4395, %v4393
    %v4788 = vpack.c.b16 %v4398, %v4396
    %v4789 = vpack.c.b16 %v4399, %v4397
    %v4790 = vpack.c.b16 %v4402, %v4400
    %v4791 = vpack.c.b16 %v4403, %v4401
    %v4792 = vpack.c.b16 %v4406, %v4404
    %v4793 = vpack.c.b16 %v4407, %v4405
    %v4794 = vpack.c.b16 %v4410, %v4408
    %v4795 = vpack.c.b16 %v4411, %v4409
    %v4796 = vpack.c.b16 %v4414, %v4412
    %v4797 = vpack.c.b16 %v4415, %v4413
    %v4798 = vpack.c.b16 %v4418, %v4416
    %v4799 = vpack.c.b16 %v4419, %v4417
    %v4800 = vpack.c.b16 %v4422, %v4420
    %v4801 = vpack.c.b16 %v4423, %v4421
    %v4802 = vpack.c.b16 %v4426, %v4424
    %v4803 = vpack.c.b16 %v4427, %v4425
    %v4804 = vpack.c.b16 %v4430, %v4428
    %v4805 = vpack.c.b16 %v4431, %v4429
    %v4806 = vpack.c.b16 %v4434, %v4432
    %v4807 = vpack.c.b16 %v4435, %v4433
    %v4808 = vpack.c.b16 %v4438, %v4436
    %v4809 = vpack.c.b16 %v4439, %v4437
    %v4810 = vpack.c.b16 %v4442, %v4440
    %v4811 = vpack.c.b16 %v4443, %v4441
    %v4812 = vpack.c.b16 %v4446, %v4444
    %v4813 = vpack.c.b16 %v4447, %v4445
    %v4814 = vpack.c.b16 %v4450, %v4448
    %v4815 = vpack.c.b16 %v4451, %v4449
    %v4816 = vpack.c.b16 %v4454, %v4452
    %v4817 = vpack.c.b16 %v4455, %v4453
    %v4818 = vpack.c.b16 %v4458, %v4456
    %v4819 = vpack.c.b16 %v4459, %v4457
    %v4820 = vpack.c.b16 %v4462, %v4460
    %v4821 = vpack.c.b16 %v4463, %v4461
    %v4822 = vpack.c.b16 %v4466, %v4464
    %v4823 = vpack.c.b16 %v4467, %v4465
    %v4824 = vpack.c.b16 %v4470, %v4468
    %v4825 = vpack.c.b16 %v4471, %v4469
    %v4826 = vpack.c.b16 %v4474, %v4472
    %v4827 = vpack.c.b16 %v4475, %v4473
    %v4828 = vpack.c.b16 %v4478, %v4476
    %v4829 = vpack.c.b16 %v4479, %v4477
    %v4830 = vpack.c.b16 %v4482, %v4480
    %v4831 = vpack.c.b16 %v4483, %v4481
    %v4832 = vpack.c.b16 %v4486, %v4484
    %v4833 = vpack.c.b16 %v4487, %v4485
    %v4834 = vpack.c.b16 %v4490, %v4488
    %v4835 = vpack.c.b16 %v4491, %v4489
    %v4836 = vpack.c.b16 %v4494, %v4492
    %v4837 = vpack.c.b16 %v4495, %v4493
    %v4838 = vpack.c.b16 %v4498, %v4496
    %v4839 = vpack.c.b16 %v4499, %v4497
    %v4840 = vpack.c.b16 %v4502, %v4500
    %v4841 = vpack.c.b16 %v4503, %v4501
    %v4842 = vpack.c.b16 %v4506, %v4504
    %v4843 = vpack.c.b16 %v4507, %v4505
    %v4844 = vpack.c.b16 %v4510, %v4508
    %v4845 = vpack.c.b16 %v4511, %v4509
    %v4846 = vpack.c.b16 %v4514, %v4512
    %v4847 = vpack.c.b16 %v4515, %v4513
    %v4848 = vpack.c.b16 %v4518, %v4516
    %v4849 = vpack.c.b16 %v4519, %v4517
    %v4850 = vpack.c.b16 %v4522, %v4520
    %v4851 = vpack.c.b16 %v4523, %v4521
    %v4852 = vpack.c.b16 %v4526, %v4524
    %v4853 = vpack.c.b16 %v4527, %v4525
    %v4854 = vpack.c.b16 %v4530, %v4528
    %v4855 = vpack.c.b16 %v4531, %v4529
    %v5181 = vsel %vm2230, %v3223, 0
    %5183 = vmatprep.subr.bf16.mxu0 %v4533
    %5184 = vmatpush1.bf16.msra.mxu0 %v4532
    %5185 = vmatprep.subr.bf16.mxu0 %v4535
    %5186 = vmatpush1.bf16.msra.mxu0 %v4534
    %5187 = vmatprep.subr.bf16.mxu0 %v4537
    %5188 = vmatpush1.bf16.msra.mxu0 %v4536
    %5189 = vmatprep.subr.bf16.mxu0 %v4539
    %5190 = vmatpush1.bf16.msra.mxu0 %v4538
    %5191 = vmatprep.subr.bf16.mxu0 %v4541
    %5192 = vmatpush1.bf16.msra.mxu0 %v4540
    %5193 = vmatprep.subr.bf16.mxu0 %v4543
    %5194 = vmatpush1.bf16.msra.mxu0 %v4542
    %5195 = vmatprep.subr.bf16.mxu0 %v4545
    %5196 = vmatpush1.bf16.msra.mxu0 %v4544
    %5197 = vmatprep.subr.bf16.mxu0 %v4547
    %5198 = vmatpush1.bf16.msra.mxu0 %v4546
    %5199 = vmatprep.subr.bf16.mxu0 %v4549
    %5200 = vmatpush1.bf16.msra.mxu0 %v4548
    %5201 = vmatprep.subr.bf16.mxu0 %v4551
    %5202 = vmatpush1.bf16.msra.mxu0 %v4550
    %5203 = vmatprep.subr.bf16.mxu0 %v4553
    %5204 = vmatpush1.bf16.msra.mxu0 %v4552
    %5205 = vmatprep.subr.bf16.mxu0 %v4555
    %5206 = vmatpush1.bf16.msra.mxu0 %v4554
    %5207 = vmatprep.subr.bf16.mxu0 %v4557
    %5208 = vmatpush1.bf16.msra.mxu0 %v4556
    %5209 = vmatprep.subr.bf16.mxu0 %v4559
    %5210 = vmatpush1.bf16.msra.mxu0 %v4558
    %5211 = vmatprep.subr.bf16.mxu0 %v4561
    %5212 = vmatpush1.bf16.msra.mxu0 %v4560
    %5213 = vmatprep.subr.bf16.mxu0 %v4563
    %5214 = vmatpush1.bf16.msra.mxu0 %v4562
    %5215 = vmatprep.mubr.bf16.mxu0 %v3204
    %5216 = vmatmul.mubr.bf16.gmra.mrb[0].mxu0 %v3203
    %v5217 = vpop.f32.mrb[0].mxu0
    %v5218 = vadd.f32 %v3553, %v5217
    %v5219 = vpop.f32.mrb[0].mxu0
    %v5220 = vadd.f32 %v3557, %v5219
    %v5221 = vpop.f32.mrb[0].mxu0
    %v5222 = vpop.f32.mrb[0].mxu0
    %5223 = vdwg.mxu0
    %5224 = vmatprep.subr.bf16.mxu0 %v4565
    %5225 = vmatpush1.bf16.msra.mxu0 %v4564
    %5226 = vmatprep.subr.bf16.mxu0 %v4567
    %5227 = vmatpush1.bf16.msra.mxu0 %v4566
    %5228 = vmatprep.subr.bf16.mxu0 %v4569
    %5229 = vmatpush1.bf16.msra.mxu0 %v4568
    %5230 = vmatprep.subr.bf16.mxu0 %v4571
    %5231 = vmatpush1.bf16.msra.mxu0 %v4570
    %5232 = vmatprep.subr.bf16.mxu0 %v4573
    %5233 = vmatpush1.bf16.msra.mxu0 %v4572
    %5234 = vmatprep.subr.bf16.mxu0 %v4575
    %5235 = vmatpush1.bf16.msra.mxu0 %v4574
    %5236 = vmatprep.subr.bf16.mxu0 %v4577
    %5237 = vmatpush1.bf16.msra.mxu0 %v4576
    %5238 = vmatprep.subr.bf16.mxu0 %v4579
    %5239 = vmatpush1.bf16.msra.mxu0 %v4578
    %5240 = vmatprep.subr.bf16.mxu0 %v4581
    %5241 = vmatpush1.bf16.msra.mxu0 %v4580
    %5242 = vmatprep.subr.bf16.mxu0 %v4583
    %5243 = vmatpush1.bf16.msra.mxu0 %v4582
    %5244 = vmatprep.subr.bf16.mxu0 %v4585
    %5245 = vmatpush1.bf16.msra.mxu0 %v4584
    %5246 = vmatprep.subr.bf16.mxu0 %v4587
    %5247 = vmatpush1.bf16.msra.mxu0 %v4586
    %5248 = vmatprep.subr.bf16.mxu0 %v4589
    %5249 = vmatpush1.bf16.msra.mxu0 %v4588
    %5250 = vmatprep.subr.bf16.mxu0 %v4591
    %5251 = vmatpush1.bf16.msra.mxu0 %v4590
    %5252 = vmatprep.subr.bf16.mxu0 %v4593
    %5253 = vmatpush1.bf16.msra.mxu0 %v4592
    %5254 = vmatprep.subr.bf16.mxu0 %v4595
    %5255 = vmatpush1.bf16.msra.mxu0 %v4594
    %5256 = vmatprep.mubr.bf16.mxu0 %v3206
    %5257 = vmatmul.mubr.bf16.gmra.mrb[0].mxu0 %v3205
    %v5258 = vpop.f32.mrb[0].mxu0
    %v5259 = vadd.f32 %v5218, %v5258
    %v5260 = vpop.f32.mrb[0].mxu0
    %v5261 = vadd.f32 %v5220, %v5260
    %v5262 = vpop.f32.mrb[0].mxu0
    %v5263 = vpop.f32.mrb[0].mxu0
    %5264 = vdwg.mxu0
    %5265 = vmatprep.subr.bf16.mxu0 %v4597
    %5266 = vmatpush1.bf16.msra.mxu0 %v4596
    %5267 = vmatprep.subr.bf16.mxu0 %v4599
    %5268 = vmatpush1.bf16.msra.mxu0 %v4598
    %5269 = vmatprep.subr.bf16.mxu0 %v4601
    %5270 = vmatpush1.bf16.msra.mxu0 %v4600
    %5271 = vmatprep.subr.bf16.mxu0 %v4603
    %5272 = vmatpush1.bf16.msra.mxu0 %v4602
    %5273 = vmatprep.subr.bf16.mxu0 %v4605
    %5274 = vmatpush1.bf16.msra.mxu0 %v4604
    %5275 = vmatprep.subr.bf16.mxu0 %v4607
    %5276 = vmatpush1.bf16.msra.mxu0 %v4606
    %5277 = vmatprep.subr.bf16.mxu0 %v4609
    %5278 = vmatpush1.bf16.msra.mxu0 %v4608
    %5279 = vmatprep.subr.bf16.mxu0 %v4611
    %5280 = vmatpush1.bf16.msra.mxu0 %v4610
    %5281 = vmatprep.subr.bf16.mxu0 %v4613
    %5282 = vmatpush1.bf16.msra.mxu0 %v4612
    %5283 = vmatprep.subr.bf16.mxu0 %v4615
    %5284 = vmatpush1.bf16.msra.mxu0 %v4614
    %5285 = vmatprep.subr.bf16.mxu0 %v4617
    %5286 = vmatpush1.bf16.msra.mxu0 %v4616
    %5287 = vmatprep.subr.bf16.mxu0 %v4619
    %5288 = vmatpush1.bf16.msra.mxu0 %v4618
    %5289 = vmatprep.subr.bf16.mxu0 %v4621
    %5290 = vmatpush1.bf16.msra.mxu0 %v4620
    %5291 = vmatprep.subr.bf16.mxu0 %v4623
    %5292 = vmatpush1.bf16.msra.mxu0 %v4622
    %5293 = vmatprep.subr.bf16.mxu0 %v4625
    %5294 = vmatpush1.bf16.msra.mxu0 %v4624
    %5295 = vmatprep.subr.bf16.mxu0 %v4627
    %5296 = vmatpush1.bf16.msra.mxu0 %v4626
    %5297 = vmatprep.mubr.bf16.mxu0 %v3208
    %5298 = vmatmul.mubr.bf16.gmra.mrb[0].mxu0 %v3207
    %v5299 = vpop.f32.mrb[0].mxu0
    %v5300 = vadd.f32 %v5259, %v5299
    %v5301 = vpop.f32.mrb[0].mxu0
    %v5302 = vadd.f32 %v5261, %v5301
    %v5303 = vpop.f32.mrb[0].mxu0
    %v5304 = vpop.f32.mrb[0].mxu0
    %5305 = vdwg.mxu0
    %5306 = vmatprep.subr.bf16.mxu0 %v4629
    %5307 = vmatpush1.bf16.msra.mxu0 %v4628
    %5308 = vmatprep.subr.bf16.mxu0 %v4631
    %5309 = vmatpush1.bf16.msra.mxu0 %v4630
    %5310 = vmatprep.subr.bf16.mxu0 %v4633
    %5311 = vmatpush1.bf16.msra.mxu0 %v4632
    %5312 = vmatprep.subr.bf16.mxu0 %v4635
    %5313 = vmatpush1.bf16.msra.mxu0 %v4634
    %5314 = vmatprep.subr.bf16.mxu0 %v4637
    %5315 = vmatpush1.bf16.msra.mxu0 %v4636
    %5316 = vmatprep.subr.bf16.mxu0 %v4639
    %5317 = vmatpush1.bf16.msra.mxu0 %v4638
    %5318 = vmatprep.subr.bf16.mxu0 %v4641
    %5319 = vmatpush1.bf16.msra.mxu0 %v4640
    %5320 = vmatprep.subr.bf16.mxu0 %v4643
    %5321 = vmatpush1.bf16.msra.mxu0 %v4642
    %5322 = vmatprep.subr.bf16.mxu0 %v4645
    %5323 = vmatpush1.bf16.msra.mxu0 %v4644
    %5324 = vmatprep.subr.bf16.mxu0 %v4647
    %5325 = vmatpush1.bf16.msra.mxu0 %v4646
    %5326 = vmatprep.subr.bf16.mxu0 %v4649
    %5327 = vmatpush1.bf16.msra.mxu0 %v4648
    %5328 = vmatprep.subr.bf16.mxu0 %v4651
    %5329 = vmatpush1.bf16.msra.mxu0 %v4650
    %5330 = vmatprep.subr.bf16.mxu0 %v4653
    %5331 = vmatpush1.bf16.msra.mxu0 %v4652
    %5332 = vmatprep.subr.bf16.mxu0 %v4655
    %5333 = vmatpush1.bf16.msra.mxu0 %v4654
    %5334 = vmatprep.subr.bf16.mxu0 %v4657
    %5335 = vmatpush1.bf16.msra.mxu0 %v4656
    %5336 = vmatprep.subr.bf16.mxu0 %v4659
    %5337 = vmatpush1.bf16.msra.mxu0 %v4658
    %5338 = vmatprep.mubr.bf16.mxu0 %v3210
    %5339 = vmatmul.mubr.bf16.gmra.mrb[0].mxu0 %v3209
    %v5340 = vpop.f32.mrb[0].mxu0
    %v5341 = vadd.f32 %v5300, %v5340
    %v5342 = vpop.f32.mrb[0].mxu0
    %v5343 = vadd.f32 %v5302, %v5342
    %v5344 = vpop.f32.mrb[0].mxu0
    %v5345 = vpop.f32.mrb[0].mxu0
    %5346 = vdwg.mxu0
    %5347 = vmatprep.subr.bf16.mxu0 %v4661
    %5348 = vmatpush1.bf16.msra.mxu0 %v4660
    %5349 = vmatprep.subr.bf16.mxu0 %v4663
    %5350 = vmatpush1.bf16.msra.mxu0 %v4662
    %5351 = vmatprep.subr.bf16.mxu0 %v4665
    %5352 = vmatpush1.bf16.msra.mxu0 %v4664
    %5353 = vmatprep.subr.bf16.mxu0 %v4667
    %5354 = vmatpush1.bf16.msra.mxu0 %v4666
    %5355 = vmatprep.subr.bf16.mxu0 %v4669
    %5356 = vmatpush1.bf16.msra.mxu0 %v4668
    %5357 = vmatprep.subr.bf16.mxu0 %v4671
    %5358 = vmatpush1.bf16.msra.mxu0 %v4670
    %5359 = vmatprep.subr.bf16.mxu0 %v4673
    %5360 = vmatpush1.bf16.msra.mxu0 %v4672
    %5361 = vmatprep.subr.bf16.mxu0 %v4675
    %5362 = vmatpush1.bf16.msra.mxu0 %v4674
    %5363 = vmatprep.subr.bf16.mxu0 %v4677
    %5364 = vmatpush1.bf16.msra.mxu0 %v4676
    %5365 = vmatprep.subr.bf16.mxu0 %v4679
    %5366 = vmatpush1.bf16.msra.mxu0 %v4678
    %5367 = vmatprep.subr.bf16.mxu0 %v4681
    %5368 = vmatpush1.bf16.msra.mxu0 %v4680
    %5369 = vmatprep.subr.bf16.mxu0 %v4683
    %5370 = vmatpush1.bf16.msra.mxu0 %v4682
    %5371 = vmatprep.subr.bf16.mxu0 %v4685
    %5372 = vmatpush1.bf16.msra.mxu0 %v4684
    %5373 = vmatprep.subr.bf16.mxu0 %v4687
    %5374 = vmatpush1.bf16.msra.mxu0 %v4686
    %5375 = vmatprep.subr.bf16.mxu0 %v4689
    %5376 = vmatpush1.bf16.msra.mxu0 %v4688
    %5377 = vmatprep.subr.bf16.mxu0 %v4691
    %5378 = vmatpush1.bf16.msra.mxu0 %v4690
    %5379 = vmatprep.mubr.bf16.mxu0 %v3212
    %5380 = vmatmul.mubr.bf16.gmra.mrb[0].mxu0 %v3211
    %v5381 = vpop.f32.mrb[0].mxu0
    %v5382 = vadd.f32 %v5341, %v5381
    %v5383 = vpop.f32.mrb[0].mxu0
    %v5384 = vadd.f32 %v5343, %v5383
    %v5385 = vpop.f32.mrb[0].mxu0
    %v5386 = vpop.f32.mrb[0].mxu0
    %5387 = vdwg.mxu0
    %5388 = vmatprep.subr.bf16.mxu0 %v4693
    %5389 = vmatpush1.bf16.msra.mxu0 %v4692
    %5390 = vmatprep.subr.bf16.mxu0 %v4695
    %5391 = vmatpush1.bf16.msra.mxu0 %v4694
    %5392 = vmatprep.subr.bf16.mxu0 %v4697
    %5393 = vmatpush1.bf16.msra.mxu0 %v4696
    %5394 = vmatprep.subr.bf16.mxu0 %v4699
    %5395 = vmatpush1.bf16.msra.mxu0 %v4698
    %5396 = vmatprep.subr.bf16.mxu0 %v4701
    %5397 = vmatpush1.bf16.msra.mxu0 %v4700
    %5398 = vmatprep.subr.bf16.mxu0 %v4703
    %5399 = vmatpush1.bf16.msra.mxu0 %v4702
    %5400 = vmatprep.subr.bf16.mxu0 %v4705
    %5401 = vmatpush1.bf16.msra.mxu0 %v4704
    %5402 = vmatprep.subr.bf16.mxu0 %v4707
    %5403 = vmatpush1.bf16.msra.mxu0 %v4706
    %5404 = vmatprep.subr.bf16.mxu0 %v4709
    %5405 = vmatpush1.bf16.msra.mxu0 %v4708
    %5406 = vmatprep.subr.bf16.mxu0 %v4711
    %5407 = vmatpush1.bf16.msra.mxu0 %v4710
    %5408 = vmatprep.subr.bf16.mxu0 %v4713
    %5409 = vmatpush1.bf16.msra.mxu0 %v4712
    %5410 = vmatprep.subr.bf16.mxu0 %v4715
    %5411 = vmatpush1.bf16.msra.mxu0 %v4714
    %5412 = vmatprep.subr.bf16.mxu0 %v4717
    %5413 = vmatpush1.bf16.msra.mxu0 %v4716
    %5414 = vmatprep.subr.bf16.mxu0 %v4719
    %5415 = vmatpush1.bf16.msra.mxu0 %v4718
    %5416 = vmatprep.subr.bf16.mxu0 %v4721
    %5417 = vmatpush1.bf16.msra.mxu0 %v4720
    %5418 = vmatprep.subr.bf16.mxu0 %v4723
    %5419 = vmatpush1.bf16.msra.mxu0 %v4722
    %5420 = vmatprep.mubr.bf16.mxu0 %v3214
    %5421 = vmatmul.mubr.bf16.gmra.mrb[0].mxu0 %v3213
    %v5422 = vpop.f32.mrb[0].mxu0
    %v5423 = vadd.f32 %v5382, %v5422
    %v5424 = vpop.f32.mrb[0].mxu0
    %v5425 = vadd.f32 %v5384, %v5424
    %v5426 = vpop.f32.mrb[0].mxu0
    %v5427 = vpop.f32.mrb[0].mxu0
    %5428 = vdwg.mxu0
    %5429 = vmatprep.subr.bf16.mxu0 %v4725
    %5430 = vmatpush1.bf16.msra.mxu0 %v4724
    %5431 = vmatprep.subr.bf16.mxu0 %v4727
    %5432 = vmatpush1.bf16.msra.mxu0 %v4726
    %5433 = vmatprep.subr.bf16.mxu0 %v4729
    %5434 = vmatpush1.bf16.msra.mxu0 %v4728
    %5435 = vmatprep.subr.bf16.mxu0 %v4731
    %5436 = vmatpush1.bf16.msra.mxu0 %v4730
    %5437 = vmatprep.subr.bf16.mxu0 %v4733
    %5438 = vmatpush1.bf16.msra.mxu0 %v4732
    %5439 = vmatprep.subr.bf16.mxu0 %v4735
    %5440 = vmatpush1.bf16.msra.mxu0 %v4734
    %5441 = vmatprep.subr.bf16.mxu0 %v4737
    %5442 = vmatpush1.bf16.msra.mxu0 %v4736
    %5443 = vmatprep.subr.bf16.mxu0 %v4739
    %5444 = vmatpush1.bf16.msra.mxu0 %v4738
    %5445 = vmatprep.subr.bf16.mxu0 %v4741
    %5446 = vmatpush1.bf16.msra.mxu0 %v4740
    %5447 = vmatprep.subr.bf16.mxu0 %v4743
    %5448 = vmatpush1.bf16.msra.mxu0 %v4742
    %5449 = vmatprep.subr.bf16.mxu0 %v4745
    %5450 = vmatpush1.bf16.msra.mxu0 %v4744
    %5451 = vmatprep.subr.bf16.mxu0 %v4747
    %5452 = vmatpush1.bf16.msra.mxu0 %v4746
    %5453 = vmatprep.subr.bf16.mxu0 %v4749
    %5454 = vmatpush1.bf16.msra.mxu0 %v4748
    %5455 = vmatprep.subr.bf16.mxu0 %v4751
    %5456 = vmatpush1.bf16.msra.mxu0 %v4750
    %5457 = vmatprep.subr.bf16.mxu0 %v4753
    %5458 = vmatpush1.bf16.msra.mxu0 %v4752
    %5459 = vmatprep.subr.bf16.mxu0 %v4755
    %5460 = vmatpush1.bf16.msra.mxu0 %v4754
    %5461 = vmatprep.mubr.bf16.mxu0 %v3216
    %5462 = vmatmul.mubr.bf16.gmra.mrb[0].mxu0 %v3215
    %v5463 = vpop.f32.mrb[0].mxu0
    %v5464 = vadd.f32 %v5423, %v5463
    %v5465 = vpop.f32.mrb[0].mxu0
    %v5466 = vadd.f32 %v5425, %v5465
    %v5467 = vpop.f32.mrb[0].mxu0
    %v5468 = vpop.f32.mrb[0].mxu0
    %5469 = vdwg.mxu0
    %5470 = vmatprep.subr.bf16.mxu0 %v4757
    %5471 = vmatpush1.bf16.msra.mxu0 %v4756
    %5472 = vmatprep.subr.bf16.mxu0 %v4759
    %5473 = vmatpush1.bf16.msra.mxu0 %v4758
    %5474 = vmatprep.subr.bf16.mxu0 %v4761
    %5475 = vmatpush1.bf16.msra.mxu0 %v4760
    %5476 = vmatprep.subr.bf16.mxu0 %v4763
    %5477 = vmatpush1.bf16.msra.mxu0 %v4762
    %5478 = vmatprep.subr.bf16.mxu0 %v4765
    %5479 = vmatpush1.bf16.msra.mxu0 %v4764
    %5480 = vmatprep.subr.bf16.mxu0 %v4767
    %5481 = vmatpush1.bf16.msra.mxu0 %v4766
    %5482 = vmatprep.subr.bf16.mxu0 %v4769
    %5483 = vmatpush1.bf16.msra.mxu0 %v4768
    %5484 = vmatprep.subr.bf16.mxu0 %v4771
    %5485 = vmatpush1.bf16.msra.mxu0 %v4770
    %5486 = vmatprep.subr.bf16.mxu0 %v4773
    %5487 = vmatpush1.bf16.msra.mxu0 %v4772
    %5488 = vmatprep.subr.bf16.mxu0 %v4775
    %5489 = vmatpush1.bf16.msra.mxu0 %v4774
    %5490 = vmatprep.subr.bf16.mxu0 %v4777
    %5491 = vmatpush1.bf16.msra.mxu0 %v4776
    %5492 = vmatprep.subr.bf16.mxu0 %v4779
    %5493 = vmatpush1.bf16.msra.mxu0 %v4778
    %5494 = vmatprep.subr.bf16.mxu0 %v4781
    %5495 = vmatpush1.bf16.msra.mxu0 %v4780
    %5496 = vmatprep.subr.bf16.mxu0 %v4783
    %5497 = vmatpush1.bf16.msra.mxu0 %v4782
    %5498 = vmatprep.subr.bf16.mxu0 %v4785
    %5499 = vmatpush1.bf16.msra.mxu0 %v4784
    %5500 = vmatprep.subr.bf16.mxu0 %v4787
    %5501 = vmatpush1.bf16.msra.mxu0 %v4786
    %5502 = vmatprep.mubr.bf16.mxu0 %v3218
    %5503 = vmatmul.mubr.bf16.gmra.mrb[0].mxu0 %v3217
    %v5504 = vpop.f32.mrb[0].mxu0
    %v5505 = vadd.f32 %v5464, %v5504
    %v5506 = vpop.f32.mrb[0].mxu0
    %v5507 = vadd.f32 %v5466, %v5506
    %v5508 = vpop.f32.mrb[0].mxu0
    %v5509 = vpop.f32.mrb[0].mxu0
    %5510 = vdwg.mxu0
    %5511 = vmatprep.subr.bf16.mxu0 %v4789
    %5512 = vmatpush1.bf16.msra.mxu0 %v4788
    %5513 = vmatprep.subr.bf16.mxu0 %v4791
    %5514 = vmatpush1.bf16.msra.mxu0 %v4790
    %5515 = vmatprep.subr.bf16.mxu0 %v4793
    %5516 = vmatpush1.bf16.msra.mxu0 %v4792
    %5517 = vmatprep.subr.bf16.mxu0 %v4795
    %5518 = vmatpush1.bf16.msra.mxu0 %v4794
    %5519 = vmatprep.subr.bf16.mxu0 %v4797
    %5520 = vmatpush1.bf16.msra.mxu0 %v4796
    %5521 = vmatprep.subr.bf16.mxu0 %v4799
    %5522 = vmatpush1.bf16.msra.mxu0 %v4798
    %5523 = vmatprep.subr.bf16.mxu0 %v4801
    %5524 = vmatpush1.bf16.msra.mxu0 %v4800
    %5525 = vmatprep.subr.bf16.mxu0 %v4803
    %5526 = vmatpush1.bf16.msra.mxu0 %v4802
    %5527 = vmatprep.subr.bf16.mxu0 %v4805
    %5528 = vmatpush1.bf16.msra.mxu0 %v4804
    %5529 = vmatprep.subr.bf16.mxu0 %v4807
    %5530 = vmatpush1.bf16.msra.mxu0 %v4806
    %5531 = vmatprep.subr.bf16.mxu0 %v4809
    %5532 = vmatpush1.bf16.msra.mxu0 %v4808
    %5533 = vmatprep.subr.bf16.mxu0 %v4811
    %5534 = vmatpush1.bf16.msra.mxu0 %v4810
    %5535 = vmatprep.subr.bf16.mxu0 %v4813
    %5536 = vmatpush1.bf16.msra.mxu0 %v4812
    %5537 = vmatprep.subr.bf16.mxu0 %v4815
    %5538 = vmatpush1.bf16.msra.mxu0 %v4814
    %5539 = vmatprep.subr.bf16.mxu0 %v4817
    %5540 = vmatpush1.bf16.msra.mxu0 %v4816
    %5541 = vmatprep.subr.bf16.mxu0 %v4819
    %5542 = vmatpush1.bf16.msra.mxu0 %v4818
    %5543 = vmatprep.mubr.bf16.mxu0 %v3220
    %5544 = vmatmul.mubr.bf16.gmra.mrb[0].mxu0 %v3219
    %v5545 = vpop.f32.mrb[0].mxu0
    %v5546 = vadd.f32 %v5505, %v5545
    %v5547 = vpop.f32.mrb[0].mxu0
    %v5548 = vadd.f32 %v5507, %v5547
    %v5549 = vpop.f32.mrb[0].mxu0
    %v5550 = vpop.f32.mrb[0].mxu0
    %5551 = vdwg.mxu0
    %5552 = vmatprep.subr.bf16.mxu0 %v4821
    %5553 = vmatpush1.bf16.msra.mxu0 %v4820
    %5554 = vmatprep.subr.bf16.mxu0 %v4823
    %5555 = vmatpush1.bf16.msra.mxu0 %v4822
    %5556 = vmatprep.subr.bf16.mxu0 %v4825
    %5557 = vmatpush1.bf16.msra.mxu0 %v4824
    %5558 = vmatprep.subr.bf16.mxu0 %v4827
    %5559 = vmatpush1.bf16.msra.mxu0 %v4826
    %5560 = vmatprep.subr.bf16.mxu0 %v4829
    %5561 = vmatpush1.bf16.msra.mxu0 %v4828
    %5562 = vmatprep.subr.bf16.mxu0 %v4831
    %5563 = vmatpush1.bf16.msra.mxu0 %v4830
    %5564 = vmatprep.subr.bf16.mxu0 %v4833
    %5565 = vmatpush1.bf16.msra.mxu0 %v4832
    %5566 = vmatprep.subr.bf16.mxu0 %v4835
    %5567 = vmatpush1.bf16.msra.mxu0 %v4834
    %5568 = vmatprep.subr.bf16.mxu0 %v4837
    %5569 = vmatpush1.bf16.msra.mxu0 %v4836
    %5570 = vmatprep.subr.bf16.mxu0 %v4839
    %5571 = vmatpush1.bf16.msra.mxu0 %v4838
    %5572 = vmatprep.subr.bf16.mxu0 %v4841
    %5573 = vmatpush1.bf16.msra.mxu0 %v4840
    %5574 = vmatprep.subr.bf16.mxu0 %v4843
    %5575 = vmatpush1.bf16.msra.mxu0 %v4842
    %5576 = vmatprep.subr.bf16.mxu0 %v4845
    %5577 = vmatpush1.bf16.msra.mxu0 %v4844
    %5578 = vmatprep.subr.bf16.mxu0 %v4847
    %5579 = vmatpush1.bf16.msra.mxu0 %v4846
    %5580 = vmatprep.subr.bf16.mxu0 %v4849
    %5581 = vmatpush1.bf16.msra.mxu0 %v4848
    %5582 = vmatprep.subr.bf16.mxu0 %v4851
    %5583 = vmatpush1.bf16.msra.mxu0 %v4850
    %5584 = vmatprep.mubr.bf16.mxu0 %v3222
    %5585 = vmatmul.mubr.bf16.gmra.mrb[0].mxu0 %v3221
    %v5586 = vpop.f32.mrb[0].mxu0
    %v5587 = vadd.f32 %v5546, %v5586
    %v5588 = vpop.f32.mrb[0].mxu0
    %v5589 = vadd.f32 %v5548, %v5588
    %v5590 = vpop.f32.mrb[0].mxu0
    %v5591 = vpop.f32.mrb[0].mxu0
    %5592 = vdwg.mxu0
    %5593 = vmatprep.subr.bf16.mxu0 %v4853
    %5594 = vmatpush1.bf16.msra.mxu0 %v4852
    %5595 = vmatprep.subr.bf16.mxu0 %v4855
    %5596 = vmatpush1.bf16.msra.mxu0 %v4854
    %5597 = vmatprep.subr.bf16.mxu0 0
    %5598 = vmatpush1.bf16.msra.mxu0 0
    %5599 = vmatprep.subr.bf16.mxu0 0
    %5600 = vmatpush1.bf16.msra.mxu0 0
    %5601 = vmatprep.subr.bf16.mxu0 0
    %5602 = vmatpush1.bf16.msra.mxu0 0
    %5603 = vmatprep.subr.bf16.mxu0 0
    %5604 = vmatpush1.bf16.msra.mxu0 0
    %5605 = vmatprep.subr.bf16.mxu0 0
    %5606 = vmatpush1.bf16.msra.mxu0 0
    %5607 = vmatprep.subr.bf16.mxu0 0
    %5608 = vmatpush1.bf16.msra.mxu0 0
    %5609 = vmatprep.subr.bf16.mxu0 0
    %5610 = vmatpush1.bf16.msra.mxu0 0
    %5611 = vmatprep.subr.bf16.mxu0 0
    %5612 = vmatpush1.bf16.msra.mxu0 0
    %5613 = vmatprep.subr.bf16.mxu0 0
    %5614 = vmatpush1.bf16.msra.mxu0 0
    %5615 = vmatprep.subr.bf16.mxu0 0
    %5616 = vmatpush1.bf16.msra.mxu0 0
    %5617 = vmatprep.subr.bf16.mxu0 0
    %5618 = vmatpush1.bf16.msra.mxu0 0
    %5619 = vmatprep.subr.bf16.mxu0 0
    %5620 = vmatpush1.bf16.msra.mxu0 0
    %5621 = vmatprep.subr.bf16.mxu0 0
    %5622 = vmatpush1.bf16.msra.mxu0 0
    %5623 = vmatprep.subr.bf16.mxu0 0
    %5624 = vmatpush1.bf16.msra.mxu0 0
    %5625 = vmatprep.mubr.bf16.mxu0 0
    %5626 = vmatmul.mubr.bf16.gmra.mrb[0].mxu0 %v5181
    %v5627 = vpop.f32.mrb[0].mxu0
    %v5628 = vadd.f32 %v5587, %v5627
    %v5629 = vpop.f32.mrb[0].mxu0
    %v5630 = vadd.f32 %v5589, %v5629
    %v5631 = vpop.f32.mrb[0].mxu0
    %v5632 = vpop.f32.mrb[0].mxu0
    %5633 = vdwg.mxu0
    %v5634 = vmax.f32 %v5628, 0.0
    %v5635 = vmax.f32 %v5630, 0.0
    %v5636 = vpack.c.bf16 %v5634, %v5634
    %v5637 = vpack.c.bf16 %v5635, %v5635
    %v5638 = vld [vmem:[%s7] sm:$0xf]
    %v5639 = vld [vmem:[%s7 + $0x4] sm:$0xf]
    %v5640 = vld [vmem:[%s7 + $0x8] sm:$0xf]
    %v5641 = vld [vmem:[%s7 + $0xc] sm:$0xf]
    %v5642 = vld [vmem:[%s7 + $0x10] sm:$0xf]
    %v5643 = vld [vmem:[%s7 + $0x14] sm:$0xf]
    %v5644 = vld [vmem:[%s7 + $0x18] sm:$0xf]
    %v5645 = vld [vmem:[%s7 + $0x1c] sm:$0xf]
    %v5646 = vld [vmem:[%s7 + $0x20] sm:$0xf]
    %v5647 = vld [vmem:[%s7 + $0x24] sm:$0xf]
    %v5648 = vld [vmem:[%s7 + $0x28] sm:$0xf]
    %v5649 = vld [vmem:[%s7 + $0x2c] sm:$0xf]
    %v5650 = vld [vmem:[%s7 + $0x30] sm:$0xf]
    %v5651 = vld [vmem:[%s7 + $0x34] sm:$0xf]
    %v5652 = vld [vmem:[%s7 + $0x38] sm:$0xf]
    %v5653 = vld [vmem:[%s7 + $0x3c] sm:$0xf]
    %v5654 = vld [vmem:[%s7 + $0x40] sm:$0xf]
    %v5655 = vld [vmem:[%s7 + $0x44] sm:$0xf]
    %v5656 = vld [vmem:[%s7 + $0x48] sm:$0xf]
    %v5657 = vld [vmem:[%s7 + $0x4c] sm:$0xf]
    %v5658 = vld [vmem:[%s7 + $0x50] sm:$0xf]
    %v5659 = vld [vmem:[%s7 + $0x54] sm:$0xf]
    %v5660 = vld [vmem:[%s7 + $0x58] sm:$0xf]
    %v5661 = vld [vmem:[%s7 + $0x5c] sm:$0xf]
    %v5662 = vld [vmem:[%s7 + $0x60] sm:$0xf]
    %v5663 = vld [vmem:[%s7 + $0x64] sm:$0xf]
    %v5664 = vld [vmem:[%s7 + $0x68] sm:$0xf]
    %v5665 = vld [vmem:[%s7 + $0x6c] sm:$0xf]
    %v5666 = vld [vmem:[%s7 + $0x70] sm:$0xf]
    %v5667 = vld [vmem:[%s7 + $0x74] sm:$0xf]
    %v5668 = vld [vmem:[%s7 + $0x78] sm:$0xf]
    %v5669 = vld [vmem:[%s7 + $0x7c] sm:$0xf]
    %v5670 = vld [vmem:[%s8] sm:$0x1]
    %v5672 = vlaneseq
    %v5673 = vshrl.u32 %v5672, 7
    %v5674 = vsub.s32 0, %v5673
    %v5675 = vrot.slane %v5670, %v5674
    %v5709 = vunpack.c.l.b16 %v5638
    %v5710 = vunpack.c.l.b16 %v5639
    %v5711 = vunpack.c.l.b16 %v5640
    %v5712 = vunpack.c.l.b16 %v5641
    %v5713 = vunpack.c.l.b16 %v5642
    %v5714 = vunpack.c.l.b16 %v5643
    %v5715 = vunpack.c.l.b16 %v5644
    %v5716 = vunpack.c.l.b16 %v5645
    %v5717 = vunpack.c.l.b16 %v5646
    %v5718 = vunpack.c.l.b16 %v5647
    %v5719 = vunpack.c.l.b16 %v5648
    %v5720 = vunpack.c.l.b16 %v5649
    %v5721 = vunpack.c.l.b16 %v5650
    %v5722 = vunpack.c.l.b16 %v5651
    %v5723 = vunpack.c.l.b16 %v5652
    %v5724 = vunpack.c.l.b16 %v5653
    %v5725 = vunpack.c.l.b16 %v5654
    %v5726 = vunpack.c.l.b16 %v5655
    %v5727 = vunpack.c.l.b16 %v5656
    %v5728 = vunpack.c.l.b16 %v5657
    %v5729 = vunpack.c.l.b16 %v5658
    %v5730 = vunpack.c.l.b16 %v5659
    %v5731 = vunpack.c.l.b16 %v5660
    %v5732 = vunpack.c.l.b16 %v5661
    %v5733 = vunpack.c.l.b16 %v5662
    %v5734 = vunpack.c.l.b16 %v5663
    %v5735 = vunpack.c.l.b16 %v5664
    %v5736 = vunpack.c.l.b16 %v5665
    %v5737 = vunpack.c.l.b16 %v5666
    %v5738 = vunpack.c.l.b16 %v5667
    %v5739 = vunpack.c.l.b16 %v5668
    %v5740 = vunpack.c.l.b16 %v5669
    %v5741 = vpack.c.b16 %v5710, %v5709
    %v5742 = vpack.c.b16 %v5712, %v5711
    %v5743 = vpack.c.b16 %v5714, %v5713
    %v5744 = vpack.c.b16 %v5716, %v5715
    %v5745 = vpack.c.b16 %v5718, %v5717
    %v5746 = vpack.c.b16 %v5720, %v5719
    %v5747 = vpack.c.b16 %v5722, %v5721
    %v5748 = vpack.c.b16 %v5724, %v5723
    %v5749 = vpack.c.b16 %v5726, %v5725
    %v5750 = vpack.c.b16 %v5728, %v5727
    %v5751 = vpack.c.b16 %v5730, %v5729
    %v5752 = vpack.c.b16 %v5732, %v5731
    %v5753 = vpack.c.b16 %v5734, %v5733
    %v5754 = vpack.c.b16 %v5736, %v5735
    %v5755 = vpack.c.b16 %v5738, %v5737
    %v5756 = vpack.c.b16 %v5740, %v5739
    %5773 = vmatprep.subr.bf16.mxu0 0
    %5774 = vmatpush1.bf16.msra.mxu0 %v5741
    %5775 = vmatprep.subr.bf16.mxu0 0
    %5776 = vmatpush1.bf16.msra.mxu0 %v5742
    %5777 = vmatprep.subr.bf16.mxu0 0
    %5778 = vmatpush1.bf16.msra.mxu0 %v5743
    %5779 = vmatprep.subr.bf16.mxu0 0
    %5780 = vmatpush1.bf16.msra.mxu0 %v5744
    %5781 = vmatprep.subr.bf16.mxu0 0
    %5782 = vmatpush1.bf16.msra.mxu0 %v5745
    %5783 = vmatprep.subr.bf16.mxu0 0
    %5784 = vmatpush1.bf16.msra.mxu0 %v5746
    %5785 = vmatprep.subr.bf16.mxu0 0
    %5786 = vmatpush1.bf16.msra.mxu0 %v5747
    %5787 = vmatprep.subr.bf16.mxu0 0
    %5788 = vmatpush1.bf16.msra.mxu0 %v5748
    %5789 = vmatprep.subr.bf16.mxu0 0
    %5790 = vmatpush1.bf16.msra.mxu0 %v5749
    %5791 = vmatprep.subr.bf16.mxu0 0
    %5792 = vmatpush1.bf16.msra.mxu0 %v5750
    %5793 = vmatprep.subr.bf16.mxu0 0
    %5794 = vmatpush1.bf16.msra.mxu0 %v5751
    %5795 = vmatprep.subr.bf16.mxu0 0
    %5796 = vmatpush1.bf16.msra.mxu0 %v5752
    %5797 = vmatprep.subr.bf16.mxu0 0
    %5798 = vmatpush1.bf16.msra.mxu0 %v5753
    %5799 = vmatprep.subr.bf16.mxu0 0
    %5800 = vmatpush1.bf16.msra.mxu0 %v5754
    %5801 = vmatprep.subr.bf16.mxu0 0
    %5802 = vmatpush1.bf16.msra.mxu0 %v5755
    %5803 = vmatprep.subr.bf16.mxu0 0
    %5804 = vmatpush1.bf16.msra.mxu0 %v5756
    %5805 = vmatprep.mubr.bf16.mxu0 %v5637
    %5806 = vmatmul.mubr.bf16.gmra.mrb[0].mxu0 %v5636
    %v5807 = vpop.f32.mrb[0].mxu0
    %v5808 = vadd.f32 %v5675, %v5807
    %v5809 = vpop.f32.mrb[0].mxu0
    %v5810 = vpop.f32.mrb[0].mxu0
    %v5811 = vpop.f32.mrb[0].mxu0
    %5812 = vdwg.mxu0
    %vm5813 = vcmask 1041408
    %v5814 = vsel %vm5813, %v5808, -inf
    %5815 = vmax.xlane.f32.xlu0 %v5814
    %v5816 = vpop.xlane.xlu0 %5815
    %v5817 = vsub.f32 %v5808, %v5816
    %v5818 = vmul.f32 %v5817, 1.442695
    %v5819 = vpow.pop %v5818
    %v5820 = vsel %vm5813, %v5819, 0.0
    %5821 = vadd.xlane.f32.xlu0 %v5820
    %v5822 = vpop.xlane.xlu0 %5821
    %v5823 = vrcp.pop %v5822
    %v5824 = vmul.f32 %v5819, %v5823
    %5825 = vst [vmem:[#allocation4] sm:$0x3] %v5824
    // Predicated region
    $region38: #{_lambda_.1} parent=1 // pred_check
      _
    $region39: #{_lambda_.1} parent=1 // pred_check_branch
      %5827 = sbr.rel (0) target = $region41
    $region40: #{_lambda_.1} parent=1 // pred_region
      %s5829 = ssub.s32 32, 32
      %5830 = vsyncadd [#allocation5], %s5829
      %s5832 = sshll.u32 [#allocation4], 4
      %s5833 = int_to_ptr.vmem [resolvable:$true] %s5832
      %5835 = dma.vmem_to_hbm [thread:$0]  %s5833, 32, %s9, [#allocation5]
    $region41: #{_lambda_.1} parent=1 // pred_fallthru
      _
    // Predicated region
    $region42: #{_lambda_.1} parent=1 // pred_check
      _
    $region43: #{_lambda_.1} parent=1 // pred_check_branch
      %5837 = sbr.rel (0) target = $region45
    $region44: #{_lambda_.1} parent=1 // pred_region
      %5838 = dma.done [#allocation5], 32
    $region45: #{_lambda_.1} parent=1 // pred_fallthru
      _
    %5839 = vsyncpa [#allocation5], 1

</llo_original>
